<compile_context>
chip_gen: v7x
topology: tpu7x:2x2x1
jax: 0.10.0
libtpu: 0.0.40
codegen_flags: <defaults>
</compile_context>

<pallas_src>
import functools

import jax
import jax.numpy as jnp
from jax.experimental import pallas as pl
from jax.experimental.pallas import tpu as pltpu


_Z_SATURATE = 1.0e4  # sigmoid(x) == 1.0 exactly in f32 for x >= ~30


def _round_up(x, m):
    return ((x + m - 1) // m) * m


def _pad_gate_stacked(a, h, hp):
    """Pad a PyTorch gate-stacked (3h, ...) array to (3hp, ...), gates kept at
    offsets 0 / hp / 2*hp so gate slices stay 128-lane aligned."""
    if h == hp:
        return a
    pads = [(0, hp - h)] + [(0, 0)] * (a.ndim - 1)
    return jnp.concatenate(
        [jnp.pad(a[g * h:(g + 1) * h], pads) for g in range(3)], axis=0)


def gru_chunk_kernel(gi_ref, whh_ref, bhhn_ref, h_ref, *, chunk):
    """Run `chunk` GRU steps. Grid = (batch_block, time_chunk); time is serial.

    gi_ref:   (Tc, Bc, 3Hp)  precomputed x@Wih^T + b_ih (+ b_hh[r,z]); the
                             z-gate slab of padded steps is pre-saturated so
                             padded steps are exact identity (no mask needed).
    whh_ref:  (Hp, 3Hp)      hidden-to-hidden weights, gate-stacked, transposed.
    bhhn_ref: (1, Hp)        hidden bias of the n gate (stays inside r * gh_n).
    h_ref:    (Bc, Hp)       hidden state (resident output block across chunks).
    """
    c = pl.program_id(1)  # time-chunk index (innermost, sequential)

    @pl.when(c == 0)
    def _():
        h_ref[...] = jnp.zeros_like(h_ref)

    whh = whh_ref[...]                    # (Hp, 3Hp) -- loop invariant
    hp = h_ref.shape[1]
    bc = h_ref.shape[0]
    half = bc // 2
    # Hoisted out of the time loop (JAX does not CSE broadcast_in_dim).
    bhh_n = jnp.broadcast_to(bhhn_ref[...], (half, hp))

    def cell(gi_t, h):
        # One fused gate-stacked MXU matmul per sub-tile per step; gate
        # elementwise math stays f32 regardless of compute dtype.
        gh = jnp.dot(h.astype(whh.dtype), whh,
                     preferred_element_type=jnp.float32)         # (half, 3Hp)
        r = jax.nn.sigmoid(gi_t[:, :hp] + gh[:, :hp])
        z = jax.nn.sigmoid(gi_t[:, hp:2 * hp] + gh[:, hp:2 * hp])
        n = jnp.tanh(gi_t[:, 2 * hp:] + r * (gh[:, 2 * hp:] + bhh_n))
        return (1.0 - z) * n + z * h                             # PyTorch GRU

    def step(t, carry):
        h_a, h_b = carry
        gi_t = gi_ref[t]                                         # (Bc, 3Hp)
        # Two independent batch sub-tiles: the scheduler overlaps one tile's
        # MXU result drain with the other tile's EUP/VPU gate math.
        return cell(gi_t[:half], h_a), cell(gi_t[half:], h_b)

    h0 = h_ref[...]
    h_a, h_b = jax.lax.fori_loop(0, chunk, step, (h0[:half], h0[half:]),
                                 unroll=True)
    h_ref[...] = jnp.concatenate([h_a, h_b], axis=0)


def char_model_forward(tokens, emb_table, w_ih, w_hh, b_ih, b_hh, *,
                       time_chunk=32, compute_dtype=jnp.float32):
    """Forward pass equivalent to CharModel.forward(x).

    tokens:    (B, T) int32 character ids
    emb_table: (vocab, E) f32
    w_ih: (3H, E), w_hh: (3H, H), b_ih: (3H,), b_hh: (3H,)  -- PyTorch GRU layout
    returns: (1, B, H) f32, the final GRU hidden state ("out" in the module).

    compute_dtype=jnp.bfloat16 is recommended on v6e/v7x at realistic H (halves
    gi HBM traffic and whh VMEM, full-density MXU); f32 here for exact parity.
    """
    B, T = tokens.shape
    H = w_hh.shape[1]
    E = emb_table.shape[1]

    # ---- hardware-shaped padding -------------------------------------------
    Hp = _round_up(H, 128)          # 128-aligned gate slices, lane-dense output
    Bp0 = _round_up(B, 16)
    Bc = min(Bp0, 256)              # MXU-filling batch tile (multiple of 16);
                                    # on v7x pick Bc <= B/2 for >=2 blocks so
                                    # both TensorCores get a "parallel" block.
    Bp = _round_up(B, Bc)

    w_ih_p = _pad_gate_stacked(w_ih, H, Hp)                        # (3Hp, E)
    w_hh_p = _pad_gate_stacked(w_hh, H, Hp)                        # (3Hp, H)
    w_hh_p = jnp.pad(w_hh_p, ((0, 0), (0, Hp - H)))                # (3Hp, Hp)
    b_ih_p = _pad_gate_stacked(b_ih, H, Hp)                        # (3Hp,)
    b_hh_p = _pad_gate_stacked(b_hh, H, Hp)                        # (3Hp,)

    # Fold b_ih (all gates) and b_hh for r/z into gi; b_hh[n] stays separate
    # because of the r * gh_n term.
    bias_in = b_ih_p + jnp.concatenate(
        [b_hh_p[:2 * Hp], jnp.zeros((Hp,), b_hh_p.dtype)])
    whh = jnp.transpose(w_hh_p).astype(compute_dtype)              # (Hp, 3Hp)
    bhh_n = b_hh_p[2 * Hp:].reshape(1, Hp).astype(jnp.float32)     # (1, Hp)

    # ---- hoisted input projection: one 2-D GEMM, then time-major layout -----
    x = jnp.take(emb_table, tokens, axis=0)                        # (B, T, E)
    gi = x.reshape(B * T, E) @ w_ih_p.T + bias_in                  # (B*T, 3Hp)
    gi = gi.reshape(B, T, 3 * Hp).transpose(1, 0, 2)               # (T, B, 3Hp)

    Tc = int(min(time_chunk, T))
    n_chunks = -(-T // Tc)
    T_pad = n_chunks * Tc
    gi = jnp.pad(gi, ((0, T_pad - T), (0, Bp - B), (0, 0)))
    if T_pad > T:
        # Saturate the z gate of padded steps: sigmoid(1e4) == 1.0 exactly in
        # f32, so h_new = z*h = h — identity steps with no per-step mask.
        gi = gi.at[T:, :, Hp:2 * Hp].set(_Z_SATURATE)
    gi = gi.astype(compute_dtype)

    # VMEM budget: raise the scoped limit only if the estimate exceeds the
    # 32 MiB default (v5e default is 16 MiB; size Tc/Bc/dtype accordingly).
    isz = jnp.dtype(compute_dtype).itemsize
    vmem_need = (2 * Tc * Bc * 3 * Hp * isz        # streamed gi, double-buffered
                 + Hp * 3 * Hp * isz + 4 * Hp      # single-buffered invariants
                 + 2 * Bc * Hp * 4                 # resident hidden state
                 + (2 << 20))                      # slack
    cp_kwargs = dict(dimension_semantics=("parallel", "arbitrary"))
    if vmem_need > 32 * 1024 * 1024:
        cp_kwargs["vmem_limit_bytes"] = int(vmem_need)

    kernel = functools.partial(gru_chunk_kernel, chunk=Tc)

    h_final = pl.pallas_call(
        kernel,
        out_shape=jax.ShapeDtypeStruct((Bp, Hp), jnp.float32),
        grid_spec=pltpu.PrefetchScalarGridSpec(
            num_scalar_prefetch=0,
            grid=(Bp // Bc, n_chunks),
            in_specs=[
                # Per-chunk precomputed input-side gates (streamed, pipelined).
                pl.BlockSpec((Tc, Bc, 3 * Hp), lambda b, c: (c, b, 0)),
                # Loop-invariant operands: constant index_map + single buffer
                # (no wasted second VMEM buffer at realistic H).
                pl.BlockSpec((Hp, 3 * Hp), lambda b, c: (0, 0),
                             pipeline_mode=pl.Buffered(1)),
                pl.BlockSpec((1, Hp), lambda b, c: (0, 0),
                             pipeline_mode=pl.Buffered(1)),
            ],
            # Lane-dense (Bc, Hp) resident output block; constant along the
            # time axis so h carries across chunks.
            out_specs=pl.BlockSpec((Bc, Hp), lambda b, c: (b, 0)),
        ),
        compiler_params=pltpu.CompilerParams(**cp_kwargs),
    )(gi, whh, bhh_n)

    return h_final[:B, :H][None]   # (1, B, H), matching nn.GRU's hidden output


def reference_forward(tokens, emb_table, w_ih, w_hh, b_ih, b_hh):
    """Pure-JAX reference of the PyTorch GRU semantics (sanity check)."""
    B, T = tokens.shape
    H = w_hh.shape[1]
    x = jnp.take(emb_table, tokens, axis=0)   # (B, T, E)
    h = jnp.zeros((B, H), jnp.float32)
    for t in range(T):
        x_t = x[:, t, :]
        gi = x_t @ w_ih.T + b_ih
        gh = h @ w_hh.T + b_hh
        i_r, i_z, i_n = gi[:, :H], gi[:, H:2 * H], gi[:, 2 * H:]
        h_r, h_z, h_n = gh[:, :H], gh[:, H:2 * H], gh[:, 2 * H:]
        r = jax.nn.sigmoid(i_r + h_r)
        z = jax.nn.sigmoid(i_z + h_z)
        n = jnp.tanh(i_n + r * h_n)
        h = (1.0 - z) * n + z * h
    return h[None]


if __name__ == "__main__":
    vocab_size = 20
    emb_dim = 16
    hidden_dim = 32
    batch = 2
    seq = 8

    key = jax.random.PRNGKey(0)
    k_tok, k_emb, k_wih, k_whh, k_bih, k_bhh = jax.random.split(key, 6)

    tokens = jax.random.randint(k_tok, (batch, seq), 0, vocab_size, dtype=jnp.int32)
    emb_table = jax.random.normal(k_emb, (vocab_size, emb_dim), jnp.float32) * 0.1
    w_ih = jax.random.normal(k_wih, (3 * hidden_dim, emb_dim), jnp.float32) * 0.1
    w_hh = jax.random.normal(k_whh, (3 * hidden_dim, hidden_dim), jnp.float32) * 0.1
    b_ih = jax.random.normal(k_bih, (3 * hidden_dim,), jnp.float32) * 0.1
    b_hh = jax.random.normal(k_bhh, (3 * hidden_dim,), jnp.float32) * 0.1

    ref = reference_forward(tokens, emb_table, w_ih, w_hh, b_ih, b_hh)

    # Default config: single time chunk, no time padding.
    out = char_model_forward(tokens, emb_table, w_ih, w_hh, b_ih, b_hh)
    out = jax.block_until_ready(out)
    assert out.shape == (1, batch, hidden_dim), out.shape
    err = float(jnp.max(jnp.abs(out - ref)))
    assert jnp.allclose(out, ref, atol=5e-5, rtol=5e-5), err

    # Multi-chunk config with time padding: exercises the resident-h carry
    # across chunks and the saturated-z identity for padded steps.
    out2 = char_model_forward(tokens, emb_table, w_ih, w_hh, b_ih, b_hh,
                              time_chunk=5)
    out2 = jax.block_until_ready(out2)
    err2 = float(jnp.max(jnp.abs(out2 - ref)))
    assert jnp.allclose(out2, ref, atol=5e-5, rtol=5e-5), err2

    print("KERNEL_OK")
</pallas_src>

<mosaic_0001>
module attributes {stable_mosaic.version = 11 : i64} {
  func.func @gru_chunk_kernel(%arg0: i32, %arg1: i32, %arg2: memref<8x16x384xf32, #tpu.memory_space<vmem>>, %arg3: memref<128x384xf32, #tpu.memory_space<vmem>>, %arg4: memref<1x128xf32, #tpu.memory_space<vmem>>, %arg5: memref<16x128xf32, #tpu.memory_space<vmem>>) attributes {dimension_semantics = [#tpu.dimension_semantics<parallel>, #tpu.dimension_semantics<arbitrary>], iteration_bounds = array<i64: 1, 1>, scalar_prefetch = 0 : i64, scratch_operands = 0 : i64, tpu.core_type = #tpu.core_type<tc>, window_params = [{transform_indices = @transform_0, window_bounds = array<i64: 8, 16, 384>}, {pipeline_mode = #tpu.pipeline_mode<synchronous>, transform_indices = @transform_1, window_bounds = array<i64: 128, 384>}, {pipeline_mode = #tpu.pipeline_mode<synchronous>, transform_indices = @transform_2, window_bounds = array<i64: 1, 128>}, {transform_indices = @transform_3, window_bounds = array<i64: 16, 128>}]} {
    %c0_i32 = arith.constant 0 : i32
    %0 = arith.cmpi eq, %arg1, %c0_i32 : i32
    %1 = arith.extui %0 : i1 to i32
    %c0_i32_0 = arith.constant 0 : i32
    %2 = arith.cmpi ne, %1, %c0_i32_0 : i32
    scf.if %2 {
      %cst_88 = arith.constant 0.000000e+00 : f32
      %500 = vector.broadcast %cst_88 : f32 to vector<16x128xf32>
      %c0_89 = arith.constant 0 : index
      %c0_90 = arith.constant 0 : index
      %501 = vector.load %arg5[%c0_89, %c0_90] : memref<16x128xf32, #tpu.memory_space<vmem>>, vector<16x128xf32>
      tpu.vector_store %arg5[%c0_89, %c0_90], %500 {strides = array<i32>} : memref<16x128xf32, #tpu.memory_space<vmem>>, vector<16x128xf32>,
    } else {
    }
    %c0 = arith.constant 0 : index
    %c0_1 = arith.constant 0 : index
    %3 = vector.load %arg3[%c0, %c0_1] : memref<128x384xf32, #tpu.memory_space<vmem>>, vector<128x384xf32>
    %c0_2 = arith.constant 0 : index
    %c0_3 = arith.constant 0 : index
    %4 = vector.load %arg4[%c0_2, %c0_3] : memref<1x128xf32, #tpu.memory_space<vmem>>, vector<1x128xf32>
    %5 = vector.shape_cast %4 : vector<1x128xf32> to vector<1x128xf32>
    %6 = vector.broadcast %5 : vector<1x128xf32> to vector<8x128xf32>
    %c0_4 = arith.constant 0 : index
    %c0_5 = arith.constant 0 : index
    %7 = vector.load %arg5[%c0_4, %c0_5] : memref<16x128xf32, #tpu.memory_space<vmem>>, vector<16x128xf32>
    %8 = vector.extract_strided_slice %7 {offsets = [0, 0], sizes = [8, 128], strides = [1, 1]} : vector<16x128xf32> to vector<8x128xf32>
    %9 = vector.extract_strided_slice %7 {offsets = [8, 0], sizes = [8, 128], strides = [1, 1]} : vector<16x128xf32> to vector<8x128xf32>
    %c0_i32_6 = arith.constant 0 : i32
    %10 = arith.index_cast %c0_i32_6 : i32 to index
    %c0_7 = arith.constant 0 : index
    %c0_8 = arith.constant 0 : index
    %11 = vector.load %arg2[%10, %c0_7, %c0_8] : memref<8x16x384xf32, #tpu.memory_space<vmem>>, vector<1x16x384xf32>
    %12 = vector.shape_cast %11 : vector<1x16x384xf32> to vector<16x384xf32>
    %13 = vector.extract_strided_slice %12 {offsets = [0, 0], sizes = [8, 384], strides = [1, 1]} : vector<16x384xf32> to vector<8x384xf32>
    %cst = arith.constant dense<0.000000e+00> : vector<8x384xf32>
    %14 = tpu.matmul %8, %3, %cst {dimension_numbers = #tpu.dot_dimension_numbers<[1], [0], [0], [1], [0, 0, 1, 1], [], []>} : vector<8x128xf32>, vector<128x384xf32>, vector<8x384xf32> -> vector<8x384xf32>
    %15 = vector.extract_strided_slice %13 {offsets = [0, 0], sizes = [8, 128], strides = [1, 1]} : vector<8x384xf32> to vector<8x128xf32>
    %16 = vector.extract_strided_slice %14 {offsets = [0, 0], sizes = [8, 128], strides = [1, 1]} : vector<8x384xf32> to vector<8x128xf32>
    %17 = arith.addf %15, %16 : vector<8x128xf32>
    %18 = arith.negf %17 : vector<8x128xf32>
    %19 = math.exp %18 : vector<8x128xf32>
    %cst_9 = arith.constant 1.000000e+00 : f32
    %20 = vector.broadcast %cst_9 : f32 to vector<8x128xf32>
    %21 = arith.addf %20, %19 : vector<8x128xf32>
    %22 = arith.divf %20, %21 : vector<8x128xf32>
    %23 = vector.extract_strided_slice %13 {offsets = [0, 128], sizes = [8, 128], strides = [1, 1]} : vector<8x384xf32> to vector<8x128xf32>
    %24 = vector.extract_strided_slice %14 {offsets = [0, 128], sizes = [8, 128], strides = [1, 1]} : vector<8x384xf32> to vector<8x128xf32>
    %25 = arith.addf %23, %24 : vector<8x128xf32>
    %26 = arith.negf %25 : vector<8x128xf32>
    %27 = math.exp %26 : vector<8x128xf32>
    %cst_10 = arith.constant 1.000000e+00 : f32
    %28 = vector.broadcast %cst_10 : f32 to vector<8x128xf32>
    %29 = arith.addf %28, %27 : vector<8x128xf32>
    %30 = arith.divf %28, %29 : vector<8x128xf32>
    %31 = vector.extract_strided_slice %13 {offsets = [0, 256], sizes = [8, 128], strides = [1, 1]} : vector<8x384xf32> to vector<8x128xf32>
    %32 = vector.extract_strided_slice %14 {offsets = [0, 256], sizes = [8, 128], strides = [1, 1]} : vector<8x384xf32> to vector<8x128xf32>
    %33 = arith.addf %32, %6 : vector<8x128xf32>
    %34 = arith.mulf %22, %33 : vector<8x128xf32>
    %35 = arith.addf %31, %34 : vector<8x128xf32>
    %36 = math.tanh %35 : vector<8x128xf32>
    %cst_11 = arith.constant 1.000000e+00 : f32
    %37 = vector.broadcast %cst_11 : f32 to vector<8x128xf32>
    %38 = arith.subf %37, %30 : vector<8x128xf32>
    %39 = arith.mulf %38, %36 : vector<8x128xf32>
    %40 = arith.mulf %30, %8 : vector<8x128xf32>
    %41 = arith.addf %39, %40 : vector<8x128xf32>
    %42 = vector.extract_strided_slice %12 {offsets = [8, 0], sizes = [8, 384], strides = [1, 1]} : vector<16x384xf32> to vector<8x384xf32>
    %cst_12 = arith.constant dense<0.000000e+00> : vector<8x384xf32>
    %43 = tpu.matmul %9, %3, %cst_12 {dimension_numbers = #tpu.dot_dimension_numbers<[1], [0], [0], [1], [0, 0, 1, 1], [], []>} : vector<8x128xf32>, vector<128x384xf32>, vector<8x384xf32> -> vector<8x384xf32>
    %44 = vector.extract_strided_slice %42 {offsets = [0, 0], sizes = [8, 128], strides = [1, 1]} : vector<8x384xf32> to vector<8x128xf32>
    %45 = vector.extract_strided_slice %43 {offsets = [0, 0], sizes = [8, 128], strides = [1, 1]} : vector<8x384xf32> to vector<8x128xf32>
    %46 = arith.addf %44, %45 : vector<8x128xf32>
    %47 = arith.negf %46 : vector<8x128xf32>
    %48 = math.exp %47 : vector<8x128xf32>
    %cst_13 = arith.constant 1.000000e+00 : f32
    %49 = vector.broadcast %cst_13 : f32 to vector<8x128xf32>
    %50 = arith.addf %49, %48 : vector<8x128xf32>
    %51 = arith.divf %49, %50 : vector<8x128xf32>
    %52 = vector.extract_strided_slice %42 {offsets = [0, 128], sizes = [8, 128], strides = [1, 1]} : vector<8x384xf32> to vector<8x128xf32>
    %53 = vector.extract_strided_slice %43 {offsets = [0, 128], sizes = [8, 128], strides = [1, 1]} : vector<8x384xf32> to vector<8x128xf32>
    %54 = arith.addf %52, %53 : vector<8x128xf32>
    %55 = arith.negf %54 : vector<8x128xf32>
    %56 = math.exp %55 : vector<8x128xf32>
    %cst_14 = arith.constant 1.000000e+00 : f32
    %57 = vector.broadcast %cst_14 : f32 to vector<8x128xf32>
    %58 = arith.addf %57, %56 : vector<8x128xf32>
    %59 = arith.divf %57, %58 : vector<8x128xf32>
    %60 = vector.extract_strided_slice %42 {offsets = [0, 256], sizes = [8, 128], strides = [1, 1]} : vector<8x384xf32> to vector<8x128xf32>
    %61 = vector.extract_strided_slice %43 {offsets = [0, 256], sizes = [8, 128], strides = [1, 1]} : vector<8x384xf32> to vector<8x128xf32>
    %62 = arith.addf %61, %6 : vector<8x128xf32>
    %63 = arith.mulf %51, %62 : vector<8x128xf32>
    %64 = arith.addf %60, %63 : vector<8x128xf32>
    %65 = math.tanh %64 : vector<8x128xf32>
    %cst_15 = arith.constant 1.000000e+00 : f32
    %66 = vector.broadcast %cst_15 : f32 to vector<8x128xf32>
    %67 = arith.subf %66, %59 : vector<8x128xf32>
    %68 = arith.mulf %67, %65 : vector<8x128xf32>
    %69 = arith.mulf %59, %9 : vector<8x128xf32>
    %70 = arith.addf %68, %69 : vector<8x128xf32>
    %c1_i32 = arith.constant 1 : i32
    %71 = arith.index_cast %c1_i32 : i32 to index
    %c0_16 = arith.constant 0 : index
    %c0_17 = arith.constant 0 : index
    %72 = vector.load %arg2[%71, %c0_16, %c0_17] : memref<8x16x384xf32, #tpu.memory_space<vmem>>, vector<1x16x384xf32>
    %73 = vector.shape_cast %72 : vector<1x16x384xf32> to vector<16x384xf32>
    %74 = vector.extract_strided_slice %73 {offsets = [0, 0], sizes = [8, 384], strides = [1, 1]} : vector<16x384xf32> to vector<8x384xf32>
    %cst_18 = arith.constant dense<0.000000e+00> : vector<8x384xf32>
    %75 = tpu.matmul %41, %3, %cst_18 {dimension_numbers = #tpu.dot_dimension_numbers<[1], [0], [0], [1], [0, 0, 1, 1], [], []>} : vector<8x128xf32>, vector<128x384xf32>, vector<8x384xf32> -> vector<8x384xf32>
    %76 = vector.extract_strided_slice %74 {offsets = [0, 0], sizes = [8, 128], strides = [1, 1]} : vector<8x384xf32> to vector<8x128xf32>
    %77 = vector.extract_strided_slice %75 {offsets = [0, 0], sizes = [8, 128], strides = [1, 1]} : vector<8x384xf32> to vector<8x128xf32>
    %78 = arith.addf %76, %77 : vector<8x128xf32>
    %79 = arith.negf %78 : vector<8x128xf32>
    %80 = math.exp %79 : vector<8x128xf32>
    %cst_19 = arith.constant 1.000000e+00 : f32
    %81 = vector.broadcast %cst_19 : f32 to vector<8x128xf32>
    %82 = arith.addf %81, %80 : vector<8x128xf32>
    %83 = arith.divf %81, %82 : vector<8x128xf32>
    %84 = vector.extract_strided_slice %74 {offsets = [0, 128], sizes = [8, 128], strides = [1, 1]} : vector<8x384xf32> to vector<8x128xf32>
    %85 = vector.extract_strided_slice %75 {offsets = [0, 128], sizes = [8, 128], strides = [1, 1]} : vector<8x384xf32> to vector<8x128xf32>
    %86 = arith.addf %84, %85 : vector<8x128xf32>
    %87 = arith.negf %86 : vector<8x128xf32>
    %88 = math.exp %87 : vector<8x128xf32>
    %cst_20 = arith.constant 1.000000e+00 : f32
    %89 = vector.broadcast %cst_20 : f32 to vector<8x128xf32>
    %90 = arith.addf %89, %88 : vector<8x128xf32>
    %91 = arith.divf %89, %90 : vector<8x128xf32>
    %92 = vector.extract_strided_slice %74 {offsets = [0, 256], sizes = [8, 128], strides = [1, 1]} : vector<8x384xf32> to vector<8x128xf32>
    %93 = vector.extract_strided_slice %75 {offsets = [0, 256], sizes = [8, 128], strides = [1, 1]} : vector<8x384xf32> to vector<8x128xf32>
    %94 = arith.addf %93, %6 : vector<8x128xf32>
    %95 = arith.mulf %83, %94 : vector<8x128xf32>
    %96 = arith.addf %92, %95 : vector<8x128xf32>
    %97 = math.tanh %96 : vector<8x128xf32>
    %cst_21 = arith.constant 1.000000e+00 : f32
    %98 = vector.broadcast %cst_21 : f32 to vector<8x128xf32>
    %99 = arith.subf %98, %91 : vector<8x128xf32>
    %100 = arith.mulf %99, %97 : vector<8x128xf32>
    %101 = arith.mulf %91, %41 : vector<8x128xf32>
    %102 = arith.addf %100, %101 : vector<8x128xf32>
    %103 = vector.extract_strided_slice %73 {offsets = [8, 0], sizes = [8, 384], strides = [1, 1]} : vector<16x384xf32> to vector<8x384xf32>
    %cst_22 = arith.constant dense<0.000000e+00> : vector<8x384xf32>
    %104 = tpu.matmul %70, %3, %cst_22 {dimension_numbers = #tpu.dot_dimension_numbers<[1], [0], [0], [1], [0, 0, 1, 1], [], []>} : vector<8x128xf32>, vector<128x384xf32>, vector<8x384xf32> -> vector<8x384xf32>
    %105 = vector.extract_strided_slice %103 {offsets = [0, 0], sizes = [8, 128], strides = [1, 1]} : vector<8x384xf32> to vector<8x128xf32>
    %106 = vector.extract_strided_slice %104 {offsets = [0, 0], sizes = [8, 128], strides = [1, 1]} : vector<8x384xf32> to vector<8x128xf32>
    %107 = arith.addf %105, %106 : vector<8x128xf32>
    %108 = arith.negf %107 : vector<8x128xf32>
    %109 = math.exp %108 : vector<8x128xf32>
    %cst_23 = arith.constant 1.000000e+00 : f32
    %110 = vector.broadcast %cst_23 : f32 to vector<8x128xf32>
    %111 = arith.addf %110, %109 : vector<8x128xf32>
    %112 = arith.divf %110, %111 : vector<8x128xf32>
    %113 = vector.extract_strided_slice %103 {offsets = [0, 128], sizes = [8, 128], strides = [1, 1]} : vector<8x384xf32> to vector<8x128xf32>
    %114 = vector.extract_strided_slice %104 {offsets = [0, 128], sizes = [8, 128], strides = [1, 1]} : vector<8x384xf32> to vector<8x128xf32>
    %115 = arith.addf %113, %114 : vector<8x128xf32>
    %116 = arith.negf %115 : vector<8x128xf32>
    %117 = math.exp %116 : vector<8x128xf32>
    %cst_24 = arith.constant 1.000000e+00 : f32
    %118 = vector.broadcast %cst_24 : f32 to vector<8x128xf32>
    %119 = arith.addf %118, %117 : vector<8x128xf32>
    %120 = arith.divf %118, %119 : vector<8x128xf32>
    %121 = vector.extract_strided_slice %103 {offsets = [0, 256], sizes = [8, 128], strides = [1, 1]} : vector<8x384xf32> to vector<8x128xf32>
    %122 = vector.extract_strided_slice %104 {offsets = [0, 256], sizes = [8, 128], strides = [1, 1]} : vector<8x384xf32> to vector<8x128xf32>
    %123 = arith.addf %122, %6 : vector<8x128xf32>
    %124 = arith.mulf %112, %123 : vector<8x128xf32>
    %125 = arith.addf %121, %124 : vector<8x128xf32>
    %126 = math.tanh %125 : vector<8x128xf32>
    %cst_25 = arith.constant 1.000000e+00 : f32
    %127 = vector.broadcast %cst_25 : f32 to vector<8x128xf32>
    %128 = arith.subf %127, %120 : vector<8x128xf32>
    %129 = arith.mulf %128, %126 : vector<8x128xf32>
    %130 = arith.mulf %120, %70 : vector<8x128xf32>
    %131 = arith.addf %129, %130 : vector<8x128xf32>
    %c2_i32 = arith.constant 2 : i32
    %132 = arith.index_cast %c2_i32 : i32 to index
    %c0_26 = arith.constant 0 : index
    %c0_27 = arith.constant 0 : index
    %133 = vector.load %arg2[%132, %c0_26, %c0_27] : memref<8x16x384xf32, #tpu.memory_space<vmem>>, vector<1x16x384xf32>
    %134 = vector.shape_cast %133 : vector<1x16x384xf32> to vector<16x384xf32>
    %135 = vector.extract_strided_slice %134 {offsets = [0, 0], sizes = [8, 384], strides = [1, 1]} : vector<16x384xf32> to vector<8x384xf32>
    %cst_28 = arith.constant dense<0.000000e+00> : vector<8x384xf32>
    %136 = tpu.matmul %102, %3, %cst_28 {dimension_numbers = #tpu.dot_dimension_numbers<[1], [0], [0], [1], [0, 0, 1, 1], [], []>} : vector<8x128xf32>, vector<128x384xf32>, vector<8x384xf32> -> vector<8x384xf32>
    %137 = vector.extract_strided_slice %135 {offsets = [0, 0], sizes = [8, 128], strides = [1, 1]} : vector<8x384xf32> to vector<8x128xf32>
    %138 = vector.extract_strided_slice %136 {offsets = [0, 0], sizes = [8, 128], strides = [1, 1]} : vector<8x384xf32> to vector<8x128xf32>
    %139 = arith.addf %137, %138 : vector<8x128xf32>
    %140 = arith.negf %139 : vector<8x128xf32>
    %141 = math.exp %140 : vector<8x128xf32>
    %cst_29 = arith.constant 1.000000e+00 : f32
    %142 = vector.broadcast %cst_29 : f32 to vector<8x128xf32>
    %143 = arith.addf %142, %141 : vector<8x128xf32>
    %144 = arith.divf %142, %143 : vector<8x128xf32>
    %145 = vector.extract_strided_slice %135 {offsets = [0, 128], sizes = [8, 128], strides = [1, 1]} : vector<8x384xf32> to vector<8x128xf32>
    %146 = vector.extract_strided_slice %136 {offsets = [0, 128], sizes = [8, 128], strides = [1, 1]} : vector<8x384xf32> to vector<8x128xf32>
    %147 = arith.addf %145, %146 : vector<8x128xf32>
    %148 = arith.negf %147 : vector<8x128xf32>
    %149 = math.exp %148 : vector<8x128xf32>
    %cst_30 = arith.constant 1.000000e+00 : f32
    %150 = vector.broadcast %cst_30 : f32 to vector<8x128xf32>
    %151 = arith.addf %150, %149 : vector<8x128xf32>
    %152 = arith.divf %150, %151 : vector<8x128xf32>
    %153 = vector.extract_strided_slice %135 {offsets = [0, 256], sizes = [8, 128], strides = [1, 1]} : vector<8x384xf32> to vector<8x128xf32>
    %154 = vector.extract_strided_slice %136 {offsets = [0, 256], sizes = [8, 128], strides = [1, 1]} : vector<8x384xf32> to vector<8x128xf32>
    %155 = arith.addf %154, %6 : vector<8x128xf32>
    %156 = arith.mulf %144, %155 : vector<8x128xf32>
    %157 = arith.addf %153, %156 : vector<8x128xf32>
    %158 = math.tanh %157 : vector<8x128xf32>
    %cst_31 = arith.constant 1.000000e+00 : f32
    %159 = vector.broadcast %cst_31 : f32 to vector<8x128xf32>
    %160 = arith.subf %159, %152 : vector<8x128xf32>
    %161 = arith.mulf %160, %158 : vector<8x128xf32>
    %162 = arith.mulf %152, %102 : vector<8x128xf32>
    %163 = arith.addf %161, %162 : vector<8x128xf32>
    %164 = vector.extract_strided_slice %134 {offsets = [8, 0], sizes = [8, 384], strides = [1, 1]} : vector<16x384xf32> to vector<8x384xf32>
    %cst_32 = arith.constant dense<0.000000e+00> : vector<8x384xf32>
    %165 = tpu.matmul %131, %3, %cst_32 {dimension_numbers = #tpu.dot_dimension_numbers<[1], [0], [0], [1], [0, 0, 1, 1], [], []>} : vector<8x128xf32>, vector<128x384xf32>, vector<8x384xf32> -> vector<8x384xf32>
    %166 = vector.extract_strided_slice %164 {offsets = [0, 0], sizes = [8, 128], strides = [1, 1]} : vector<8x384xf32> to vector<8x128xf32>
    %167 = vector.extract_strided_slice %165 {offsets = [0, 0], sizes = [8, 128], strides = [1, 1]} : vector<8x384xf32> to vector<8x128xf32>
    %168 = arith.addf %166, %167 : vector<8x128xf32>
    %169 = arith.negf %168 : vector<8x128xf32>
    %170 = math.exp %169 : vector<8x128xf32>
    %cst_33 = arith.constant 1.000000e+00 : f32
    %171 = vector.broadcast %cst_33 : f32 to vector<8x128xf32>
    %172 = arith.addf %171, %170 : vector<8x128xf32>
    %173 = arith.divf %171, %172 : vector<8x128xf32>
    %174 = vector.extract_strided_slice %164 {offsets = [0, 128], sizes = [8, 128], strides = [1, 1]} : vector<8x384xf32> to vector<8x128xf32>
    %175 = vector.extract_strided_slice %165 {offsets = [0, 128], sizes = [8, 128], strides = [1, 1]} : vector<8x384xf32> to vector<8x128xf32>
    %176 = arith.addf %174, %175 : vector<8x128xf32>
    %177 = arith.negf %176 : vector<8x128xf32>
    %178 = math.exp %177 : vector<8x128xf32>
    %cst_34 = arith.constant 1.000000e+00 : f32
    %179 = vector.broadcast %cst_34 : f32 to vector<8x128xf32>
    %180 = arith.addf %179, %178 : vector<8x128xf32>
    %181 = arith.divf %179, %180 : vector<8x128xf32>
    %182 = vector.extract_strided_slice %164 {offsets = [0, 256], sizes = [8, 128], strides = [1, 1]} : vector<8x384xf32> to vector<8x128xf32>
    %183 = vector.extract_strided_slice %165 {offsets = [0, 256], sizes = [8, 128], strides = [1, 1]} : vector<8x384xf32> to vector<8x128xf32>
    %184 = arith.addf %183, %6 : vector<8x128xf32>
    %185 = arith.mulf %173, %184 : vector<8x128xf32>
    %186 = arith.addf %182, %185 : vector<8x128xf32>
    %187 = math.tanh %186 : vector<8x128xf32>
    %cst_35 = arith.constant 1.000000e+00 : f32
    %188 = vector.broadcast %cst_35 : f32 to vector<8x128xf32>
    %189 = arith.subf %188, %181 : vector<8x128xf32>
    %190 = arith.mulf %189, %187 : vector<8x128xf32>
    %191 = arith.mulf %181, %131 : vector<8x128xf32>
    %192 = arith.addf %190, %191 : vector<8x128xf32>
    %c3_i32 = arith.constant 3 : i32
    %193 = arith.index_cast %c3_i32 : i32 to index
    %c0_36 = arith.constant 0 : index
    %c0_37 = arith.constant 0 : index
    %194 = vector.load %arg2[%193, %c0_36, %c0_37] : memref<8x16x384xf32, #tpu.memory_space<vmem>>, vector<1x16x384xf32>
    %195 = vector.shape_cast %194 : vector<1x16x384xf32> to vector<16x384xf32>
    %196 = vector.extract_strided_slice %195 {offsets = [0, 0], sizes = [8, 384], strides = [1, 1]} : vector<16x384xf32> to vector<8x384xf32>
    %cst_38 = arith.constant dense<0.000000e+00> : vector<8x384xf32>
    %197 = tpu.matmul %163, %3, %cst_38 {dimension_numbers = #tpu.dot_dimension_numbers<[1], [0], [0], [1], [0, 0, 1, 1], [], []>} : vector<8x128xf32>, vector<128x384xf32>, vector<8x384xf32> -> vector<8x384xf32>
    %198 = vector.extract_strided_slice %196 {offsets = [0, 0], sizes = [8, 128], strides = [1, 1]} : vector<8x384xf32> to vector<8x128xf32>
    %199 = vector.extract_strided_slice %197 {offsets = [0, 0], sizes = [8, 128], strides = [1, 1]} : vector<8x384xf32> to vector<8x128xf32>
    %200 = arith.addf %198, %199 : vector<8x128xf32>
    %201 = arith.negf %200 : vector<8x128xf32>
    %202 = math.exp %201 : vector<8x128xf32>
    %cst_39 = arith.constant 1.000000e+00 : f32
    %203 = vector.broadcast %cst_39 : f32 to vector<8x128xf32>
    %204 = arith.addf %203, %202 : vector<8x128xf32>
    %205 = arith.divf %203, %204 : vector<8x128xf32>
    %206 = vector.extract_strided_slice %196 {offsets = [0, 128], sizes = [8, 128], strides = [1, 1]} : vector<8x384xf32> to vector<8x128xf32>
    %207 = vector.extract_strided_slice %197 {offsets = [0, 128], sizes = [8, 128], strides = [1, 1]} : vector<8x384xf32> to vector<8x128xf32>
    %208 = arith.addf %206, %207 : vector<8x128xf32>
    %209 = arith.negf %208 : vector<8x128xf32>
    %210 = math.exp %209 : vector<8x128xf32>
    %cst_40 = arith.constant 1.000000e+00 : f32
    %211 = vector.broadcast %cst_40 : f32 to vector<8x128xf32>
    %212 = arith.addf %211, %210 : vector<8x128xf32>
    %213 = arith.divf %211, %212 : vector<8x128xf32>
    %214 = vector.extract_strided_slice %196 {offsets = [0, 256], sizes = [8, 128], strides = [1, 1]} : vector<8x384xf32> to vector<8x128xf32>
    %215 = vector.extract_strided_slice %197 {offsets = [0, 256], sizes = [8, 128], strides = [1, 1]} : vector<8x384xf32> to vector<8x128xf32>
    %216 = arith.addf %215, %6 : vector<8x128xf32>
    %217 = arith.mulf %205, %216 : vector<8x128xf32>
    %218 = arith.addf %214, %217 : vector<8x128xf32>
    %219 = math.tanh %218 : vector<8x128xf32>
    %cst_41 = arith.constant 1.000000e+00 : f32
    %220 = vector.broadcast %cst_41 : f32 to vector<8x128xf32>
    %221 = arith.subf %220, %213 : vector<8x128xf32>
    %222 = arith.mulf %221, %219 : vector<8x128xf32>
    %223 = arith.mulf %213, %163 : vector<8x128xf32>
    %224 = arith.addf %222, %223 : vector<8x128xf32>
    %225 = vector.extract_strided_slice %195 {offsets = [8, 0], sizes = [8, 384], strides = [1, 1]} : vector<16x384xf32> to vector<8x384xf32>
    %cst_42 = arith.constant dense<0.000000e+00> : vector<8x384xf32>
    %226 = tpu.matmul %192, %3, %cst_42 {dimension_numbers = #tpu.dot_dimension_numbers<[1], [0], [0], [1], [0, 0, 1, 1], [], []>} : vector<8x128xf32>, vector<128x384xf32>, vector<8x384xf32> -> vector<8x384xf32>
    %227 = vector.extract_strided_slice %225 {offsets = [0, 0], sizes = [8, 128], strides = [1, 1]} : vector<8x384xf32> to vector<8x128xf32>
    %228 = vector.extract_strided_slice %226 {offsets = [0, 0], sizes = [8, 128], strides = [1, 1]} : vector<8x384xf32> to vector<8x128xf32>
    %229 = arith.addf %227, %228 : vector<8x128xf32>
    %230 = arith.negf %229 : vector<8x128xf32>
    %231 = math.exp %230 : vector<8x128xf32>
    %cst_43 = arith.constant 1.000000e+00 : f32
    %232 = vector.broadcast %cst_43 : f32 to vector<8x128xf32>
    %233 = arith.addf %232, %231 : vector<8x128xf32>
    %234 = arith.divf %232, %233 : vector<8x128xf32>
    %235 = vector.extract_strided_slice %225 {offsets = [0, 128], sizes = [8, 128], strides = [1, 1]} : vector<8x384xf32> to vector<8x128xf32>
    %236 = vector.extract_strided_slice %226 {offsets = [0, 128], sizes = [8, 128], strides = [1, 1]} : vector<8x384xf32> to vector<8x128xf32>
    %237 = arith.addf %235, %236 : vector<8x128xf32>
    %238 = arith.negf %237 : vector<8x128xf32>
    %239 = math.exp %238 : vector<8x128xf32>
    %cst_44 = arith.constant 1.000000e+00 : f32
    %240 = vector.broadcast %cst_44 : f32 to vector<8x128xf32>
    %241 = arith.addf %240, %239 : vector<8x128xf32>
    %242 = arith.divf %240, %241 : vector<8x128xf32>
    %243 = vector.extract_strided_slice %225 {offsets = [0, 256], sizes = [8, 128], strides = [1, 1]} : vector<8x384xf32> to vector<8x128xf32>
    %244 = vector.extract_strided_slice %226 {offsets = [0, 256], sizes = [8, 128], strides = [1, 1]} : vector<8x384xf32> to vector<8x128xf32>
    %245 = arith.addf %244, %6 : vector<8x128xf32>
    %246 = arith.mulf %234, %245 : vector<8x128xf32>
    %247 = arith.addf %243, %246 : vector<8x128xf32>
    %248 = math.tanh %247 : vector<8x128xf32>
    %cst_45 = arith.constant 1.000000e+00 : f32
    %249 = vector.broadcast %cst_45 : f32 to vector<8x128xf32>
    %250 = arith.subf %249, %242 : vector<8x128xf32>
    %251 = arith.mulf %250, %248 : vector<8x128xf32>
    %252 = arith.mulf %242, %192 : vector<8x128xf32>
    %253 = arith.addf %251, %252 : vector<8x128xf32>
    %c4_i32 = arith.constant 4 : i32
    %254 = arith.index_cast %c4_i32 : i32 to index
    %c0_46 = arith.constant 0 : index
    %c0_47 = arith.constant 0 : index
    %255 = vector.load %arg2[%254, %c0_46, %c0_47] : memref<8x16x384xf32, #tpu.memory_space<vmem>>, vector<1x16x384xf32>
    %256 = vector.shape_cast %255 : vector<1x16x384xf32> to vector<16x384xf32>
    %257 = vector.extract_strided_slice %256 {offsets = [0, 0], sizes = [8, 384], strides = [1, 1]} : vector<16x384xf32> to vector<8x384xf32>
    %cst_48 = arith.constant dense<0.000000e+00> : vector<8x384xf32>
    %258 = tpu.matmul %224, %3, %cst_48 {dimension_numbers = #tpu.dot_dimension_numbers<[1], [0], [0], [1], [0, 0, 1, 1], [], []>} : vector<8x128xf32>, vector<128x384xf32>, vector<8x384xf32> -> vector<8x384xf32>
    %259 = vector.extract_strided_slice %257 {offsets = [0, 0], sizes = [8, 128], strides = [1, 1]} : vector<8x384xf32> to vector<8x128xf32>
    %260 = vector.extract_strided_slice %258 {offsets = [0, 0], sizes = [8, 128], strides = [1, 1]} : vector<8x384xf32> to vector<8x128xf32>
    %261 = arith.addf %259, %260 : vector<8x128xf32>
    %262 = arith.negf %261 : vector<8x128xf32>
    %263 = math.exp %262 : vector<8x128xf32>
    %cst_49 = arith.constant 1.000000e+00 : f32
    %264 = vector.broadcast %cst_49 : f32 to vector<8x128xf32>
    %265 = arith.addf %264, %263 : vector<8x128xf32>
    %266 = arith.divf %264, %265 : vector<8x128xf32>
    %267 = vector.extract_strided_slice %257 {offsets = [0, 128], sizes = [8, 128], strides = [1, 1]} : vector<8x384xf32> to vector<8x128xf32>
    %268 = vector.extract_strided_slice %258 {offsets = [0, 128], sizes = [8, 128], strides = [1, 1]} : vector<8x384xf32> to vector<8x128xf32>
    %269 = arith.addf %267, %268 : vector<8x128xf32>
    %270 = arith.negf %269 : vector<8x128xf32>
    %271 = math.exp %270 : vector<8x128xf32>
    %cst_50 = arith.constant 1.000000e+00 : f32
    %272 = vector.broadcast %cst_50 : f32 to vector<8x128xf32>
    %273 = arith.addf %272, %271 : vector<8x128xf32>
    %274 = arith.divf %272, %273 : vector<8x128xf32>
    %275 = vector.extract_strided_slice %257 {offsets = [0, 256], sizes = [8, 128], strides = [1, 1]} : vector<8x384xf32> to vector<8x128xf32>
    %276 = vector.extract_strided_slice %258 {offsets = [0, 256], sizes = [8, 128], strides = [1, 1]} : vector<8x384xf32> to vector<8x128xf32>
    %277 = arith.addf %276, %6 : vector<8x128xf32>
    %278 = arith.mulf %266, %277 : vector<8x128xf32>
    %279 = arith.addf %275, %278 : vector<8x128xf32>
    %280 = math.tanh %279 : vector<8x128xf32>
    %cst_51 = arith.constant 1.000000e+00 : f32
    %281 = vector.broadcast %cst_51 : f32 to vector<8x128xf32>
    %282 = arith.subf %281, %274 : vector<8x128xf32>
    %283 = arith.mulf %282, %280 : vector<8x128xf32>
    %284 = arith.mulf %274, %224 : vector<8x128xf32>
    %285 = arith.addf %283, %284 : vector<8x128xf32>
    %286 = vector.extract_strided_slice %256 {offsets = [8, 0], sizes = [8, 384], strides = [1, 1]} : vector<16x384xf32> to vector<8x384xf32>
    %cst_52 = arith.constant dense<0.000000e+00> : vector<8x384xf32>
    %287 = tpu.matmul %253, %3, %cst_52 {dimension_numbers = #tpu.dot_dimension_numbers<[1], [0], [0], [1], [0, 0, 1, 1], [], []>} : vector<8x128xf32>, vector<128x384xf32>, vector<8x384xf32> -> vector<8x384xf32>
    %288 = vector.extract_strided_slice %286 {offsets = [0, 0], sizes = [8, 128], strides = [1, 1]} : vector<8x384xf32> to vector<8x128xf32>
    %289 = vector.extract_strided_slice %287 {offsets = [0, 0], sizes = [8, 128], strides = [1, 1]} : vector<8x384xf32> to vector<8x128xf32>
    %290 = arith.addf %288, %289 : vector<8x128xf32>
    %291 = arith.negf %290 : vector<8x128xf32>
    %292 = math.exp %291 : vector<8x128xf32>
    %cst_53 = arith.constant 1.000000e+00 : f32
    %293 = vector.broadcast %cst_53 : f32 to vector<8x128xf32>
    %294 = arith.addf %293, %292 : vector<8x128xf32>
    %295 = arith.divf %293, %294 : vector<8x128xf32>
    %296 = vector.extract_strided_slice %286 {offsets = [0, 128], sizes = [8, 128], strides = [1, 1]} : vector<8x384xf32> to vector<8x128xf32>
    %297 = vector.extract_strided_slice %287 {offsets = [0, 128], sizes = [8, 128], strides = [1, 1]} : vector<8x384xf32> to vector<8x128xf32>
    %298 = arith.addf %296, %297 : vector<8x128xf32>
    %299 = arith.negf %298 : vector<8x128xf32>
    %300 = math.exp %299 : vector<8x128xf32>
    %cst_54 = arith.constant 1.000000e+00 : f32
    %301 = vector.broadcast %cst_54 : f32 to vector<8x128xf32>
    %302 = arith.addf %301, %300 : vector<8x128xf32>
    %303 = arith.divf %301, %302 : vector<8x128xf32>
    %304 = vector.extract_strided_slice %286 {offsets = [0, 256], sizes = [8, 128], strides = [1, 1]} : vector<8x384xf32> to vector<8x128xf32>
    %305 = vector.extract_strided_slice %287 {offsets = [0, 256], sizes = [8, 128], strides = [1, 1]} : vector<8x384xf32> to vector<8x128xf32>
    %306 = arith.addf %305, %6 : vector<8x128xf32>
    %307 = arith.mulf %295, %306 : vector<8x128xf32>
    %308 = arith.addf %304, %307 : vector<8x128xf32>
    %309 = math.tanh %308 : vector<8x128xf32>
    %cst_55 = arith.constant 1.000000e+00 : f32
    %310 = vector.broadcast %cst_55 : f32 to vector<8x128xf32>
    %311 = arith.subf %310, %303 : vector<8x128xf32>
    %312 = arith.mulf %311, %309 : vector<8x128xf32>
    %313 = arith.mulf %303, %253 : vector<8x128xf32>
    %314 = arith.addf %312, %313 : vector<8x128xf32>
    %c5_i32 = arith.constant 5 : i32
    %315 = arith.index_cast %c5_i32 : i32 to index
    %c0_56 = arith.constant 0 : index
    %c0_57 = arith.constant 0 : index
    %316 = vector.load %arg2[%315, %c0_56, %c0_57] : memref<8x16x384xf32, #tpu.memory_space<vmem>>, vector<1x16x384xf32>
    %317 = vector.shape_cast %316 : vector<1x16x384xf32> to vector<16x384xf32>
    %318 = vector.extract_strided_slice %317 {offsets = [0, 0], sizes = [8, 384], strides = [1, 1]} : vector<16x384xf32> to vector<8x384xf32>
    %cst_58 = arith.constant dense<0.000000e+00> : vector<8x384xf32>
    %319 = tpu.matmul %285, %3, %cst_58 {dimension_numbers = #tpu.dot_dimension_numbers<[1], [0], [0], [1], [0, 0, 1, 1], [], []>} : vector<8x128xf32>, vector<128x384xf32>, vector<8x384xf32> -> vector<8x384xf32>
    %320 = vector.extract_strided_slice %318 {offsets = [0, 0], sizes = [8, 128], strides = [1, 1]} : vector<8x384xf32> to vector<8x128xf32>
    %321 = vector.extract_strided_slice %319 {offsets = [0, 0], sizes = [8, 128], strides = [1, 1]} : vector<8x384xf32> to vector<8x128xf32>
    %322 = arith.addf %320, %321 : vector<8x128xf32>
    %323 = arith.negf %322 : vector<8x128xf32>
    %324 = math.exp %323 : vector<8x128xf32>
    %cst_59 = arith.constant 1.000000e+00 : f32
    %325 = vector.broadcast %cst_59 : f32 to vector<8x128xf32>
    %326 = arith.addf %325, %324 : vector<8x128xf32>
    %327 = arith.divf %325, %326 : vector<8x128xf32>
    %328 = vector.extract_strided_slice %318 {offsets = [0, 128], sizes = [8, 128], strides = [1, 1]} : vector<8x384xf32> to vector<8x128xf32>
    %329 = vector.extract_strided_slice %319 {offsets = [0, 128], sizes = [8, 128], strides = [1, 1]} : vector<8x384xf32> to vector<8x128xf32>
    %330 = arith.addf %328, %329 : vector<8x128xf32>
    %331 = arith.negf %330 : vector<8x128xf32>
    %332 = math.exp %331 : vector<8x128xf32>
    %cst_60 = arith.constant 1.000000e+00 : f32
    %333 = vector.broadcast %cst_60 : f32 to vector<8x128xf32>
    %334 = arith.addf %333, %332 : vector<8x128xf32>
    %335 = arith.divf %333, %334 : vector<8x128xf32>
    %336 = vector.extract_strided_slice %318 {offsets = [0, 256], sizes = [8, 128], strides = [1, 1]} : vector<8x384xf32> to vector<8x128xf32>
    %337 = vector.extract_strided_slice %319 {offsets = [0, 256], sizes = [8, 128], strides = [1, 1]} : vector<8x384xf32> to vector<8x128xf32>
    %338 = arith.addf %337, %6 : vector<8x128xf32>
    %339 = arith.mulf %327, %338 : vector<8x128xf32>
    %340 = arith.addf %336, %339 : vector<8x128xf32>
    %341 = math.tanh %340 : vector<8x128xf32>
    %cst_61 = arith.constant 1.000000e+00 : f32
    %342 = vector.broadcast %cst_61 : f32 to vector<8x128xf32>
    %343 = arith.subf %342, %335 : vector<8x128xf32>
    %344 = arith.mulf %343, %341 : vector<8x128xf32>
    %345 = arith.mulf %335, %285 : vector<8x128xf32>
    %346 = arith.addf %344, %345 : vector<8x128xf32>
    %347 = vector.extract_strided_slice %317 {offsets = [8, 0], sizes = [8, 384], strides = [1, 1]} : vector<16x384xf32> to vector<8x384xf32>
    %cst_62 = arith.constant dense<0.000000e+00> : vector<8x384xf32>
    %348 = tpu.matmul %314, %3, %cst_62 {dimension_numbers = #tpu.dot_dimension_numbers<[1], [0], [0], [1], [0, 0, 1, 1], [], []>} : vector<8x128xf32>, vector<128x384xf32>, vector<8x384xf32> -> vector<8x384xf32>
    %349 = vector.extract_strided_slice %347 {offsets = [0, 0], sizes = [8, 128], strides = [1, 1]} : vector<8x384xf32> to vector<8x128xf32>
    %350 = vector.extract_strided_slice %348 {offsets = [0, 0], sizes = [8, 128], strides = [1, 1]} : vector<8x384xf32> to vector<8x128xf32>
    %351 = arith.addf %349, %350 : vector<8x128xf32>
    %352 = arith.negf %351 : vector<8x128xf32>
    %353 = math.exp %352 : vector<8x128xf32>
    %cst_63 = arith.constant 1.000000e+00 : f32
    %354 = vector.broadcast %cst_63 : f32 to vector<8x128xf32>
    %355 = arith.addf %354, %353 : vector<8x128xf32>
    %356 = arith.divf %354, %355 : vector<8x128xf32>
    %357 = vector.extract_strided_slice %347 {offsets = [0, 128], sizes = [8, 128], strides = [1, 1]} : vector<8x384xf32> to vector<8x128xf32>
    %358 = vector.extract_strided_slice %348 {offsets = [0, 128], sizes = [8, 128], strides = [1, 1]} : vector<8x384xf32> to vector<8x128xf32>
    %359 = arith.addf %357, %358 : vector<8x128xf32>
    %360 = arith.negf %359 : vector<8x128xf32>
    %361 = math.exp %360 : vector<8x128xf32>
    %cst_64 = arith.constant 1.000000e+00 : f32
    %362 = vector.broadcast %cst_64 : f32 to vector<8x128xf32>
    %363 = arith.addf %362, %361 : vector<8x128xf32>
    %364 = arith.divf %362, %363 : vector<8x128xf32>
    %365 = vector.extract_strided_slice %347 {offsets = [0, 256], sizes = [8, 128], strides = [1, 1]} : vector<8x384xf32> to vector<8x128xf32>
    %366 = vector.extract_strided_slice %348 {offsets = [0, 256], sizes = [8, 128], strides = [1, 1]} : vector<8x384xf32> to vector<8x128xf32>
    %367 = arith.addf %366, %6 : vector<8x128xf32>
    %368 = arith.mulf %356, %367 : vector<8x128xf32>
    %369 = arith.addf %365, %368 : vector<8x128xf32>
    %370 = math.tanh %369 : vector<8x128xf32>
    %cst_65 = arith.constant 1.000000e+00 : f32
    %371 = vector.broadcast %cst_65 : f32 to vector<8x128xf32>
    %372 = arith.subf %371, %364 : vector<8x128xf32>
    %373 = arith.mulf %372, %370 : vector<8x128xf32>
    %374 = arith.mulf %364, %314 : vector<8x128xf32>
    %375 = arith.addf %373, %374 : vector<8x128xf32>
    %c6_i32 = arith.constant 6 : i32
    %376 = arith.index_cast %c6_i32 : i32 to index
    %c0_66 = arith.constant 0 : index
    %c0_67 = arith.constant 0 : index
    %377 = vector.load %arg2[%376, %c0_66, %c0_67] : memref<8x16x384xf32, #tpu.memory_space<vmem>>, vector<1x16x384xf32>
    %378 = vector.shape_cast %377 : vector<1x16x384xf32> to vector<16x384xf32>
    %379 = vector.extract_strided_slice %378 {offsets = [0, 0], sizes = [8, 384], strides = [1, 1]} : vector<16x384xf32> to vector<8x384xf32>
    %cst_68 = arith.constant dense<0.000000e+00> : vector<8x384xf32>
    %380 = tpu.matmul %346, %3, %cst_68 {dimension_numbers = #tpu.dot_dimension_numbers<[1], [0], [0], [1], [0, 0, 1, 1], [], []>} : vector<8x128xf32>, vector<128x384xf32>, vector<8x384xf32> -> vector<8x384xf32>
    %381 = vector.extract_strided_slice %379 {offsets = [0, 0], sizes = [8, 128], strides = [1, 1]} : vector<8x384xf32> to vector<8x128xf32>
    %382 = vector.extract_strided_slice %380 {offsets = [0, 0], sizes = [8, 128], strides = [1, 1]} : vector<8x384xf32> to vector<8x128xf32>
    %383 = arith.addf %381, %382 : vector<8x128xf32>
    %384 = arith.negf %383 : vector<8x128xf32>
    %385 = math.exp %384 : vector<8x128xf32>
    %cst_69 = arith.constant 1.000000e+00 : f32
    %386 = vector.broadcast %cst_69 : f32 to vector<8x128xf32>
    %387 = arith.addf %386, %385 : vector<8x128xf32>
    %388 = arith.divf %386, %387 : vector<8x128xf32>
    %389 = vector.extract_strided_slice %379 {offsets = [0, 128], sizes = [8, 128], strides = [1, 1]} : vector<8x384xf32> to vector<8x128xf32>
    %390 = vector.extract_strided_slice %380 {offsets = [0, 128], sizes = [8, 128], strides = [1, 1]} : vector<8x384xf32> to vector<8x128xf32>
    %391 = arith.addf %389, %390 : vector<8x128xf32>
    %392 = arith.negf %391 : vector<8x128xf32>
    %393 = math.exp %392 : vector<8x128xf32>
    %cst_70 = arith.constant 1.000000e+00 : f32
    %394 = vector.broadcast %cst_70 : f32 to vector<8x128xf32>
    %395 = arith.addf %394, %393 : vector<8x128xf32>
    %396 = arith.divf %394, %395 : vector<8x128xf32>
    %397 = vector.extract_strided_slice %379 {offsets = [0, 256], sizes = [8, 128], strides = [1, 1]} : vector<8x384xf32> to vector<8x128xf32>
    %398 = vector.extract_strided_slice %380 {offsets = [0, 256], sizes = [8, 128], strides = [1, 1]} : vector<8x384xf32> to vector<8x128xf32>
    %399 = arith.addf %398, %6 : vector<8x128xf32>
    %400 = arith.mulf %388, %399 : vector<8x128xf32>
    %401 = arith.addf %397, %400 : vector<8x128xf32>
    %402 = math.tanh %401 : vector<8x128xf32>
    %cst_71 = arith.constant 1.000000e+00 : f32
    %403 = vector.broadcast %cst_71 : f32 to vector<8x128xf32>
    %404 = arith.subf %403, %396 : vector<8x128xf32>
    %405 = arith.mulf %404, %402 : vector<8x128xf32>
    %406 = arith.mulf %396, %346 : vector<8x128xf32>
    %407 = arith.addf %405, %406 : vector<8x128xf32>
    %408 = vector.extract_strided_slice %378 {offsets = [8, 0], sizes = [8, 384], strides = [1, 1]} : vector<16x384xf32> to vector<8x384xf32>
    %cst_72 = arith.constant dense<0.000000e+00> : vector<8x384xf32>
    %409 = tpu.matmul %375, %3, %cst_72 {dimension_numbers = #tpu.dot_dimension_numbers<[1], [0], [0], [1], [0, 0, 1, 1], [], []>} : vector<8x128xf32>, vector<128x384xf32>, vector<8x384xf32> -> vector<8x384xf32>
    %410 = vector.extract_strided_slice %408 {offsets = [0, 0], sizes = [8, 128], strides = [1, 1]} : vector<8x384xf32> to vector<8x128xf32>
    %411 = vector.extract_strided_slice %409 {offsets = [0, 0], sizes = [8, 128], strides = [1, 1]} : vector<8x384xf32> to vector<8x128xf32>
    %412 = arith.addf %410, %411 : vector<8x128xf32>
    %413 = arith.negf %412 : vector<8x128xf32>
    %414 = math.exp %413 : vector<8x128xf32>
    %cst_73 = arith.constant 1.000000e+00 : f32
    %415 = vector.broadcast %cst_73 : f32 to vector<8x128xf32>
    %416 = arith.addf %415, %414 : vector<8x128xf32>
    %417 = arith.divf %415, %416 : vector<8x128xf32>
    %418 = vector.extract_strided_slice %408 {offsets = [0, 128], sizes = [8, 128], strides = [1, 1]} : vector<8x384xf32> to vector<8x128xf32>
    %419 = vector.extract_strided_slice %409 {offsets = [0, 128], sizes = [8, 128], strides = [1, 1]} : vector<8x384xf32> to vector<8x128xf32>
    %420 = arith.addf %418, %419 : vector<8x128xf32>
    %421 = arith.negf %420 : vector<8x128xf32>
    %422 = math.exp %421 : vector<8x128xf32>
    %cst_74 = arith.constant 1.000000e+00 : f32
    %423 = vector.broadcast %cst_74 : f32 to vector<8x128xf32>
    %424 = arith.addf %423, %422 : vector<8x128xf32>
    %425 = arith.divf %423, %424 : vector<8x128xf32>
    %426 = vector.extract_strided_slice %408 {offsets = [0, 256], sizes = [8, 128], strides = [1, 1]} : vector<8x384xf32> to vector<8x128xf32>
    %427 = vector.extract_strided_slice %409 {offsets = [0, 256], sizes = [8, 128], strides = [1, 1]} : vector<8x384xf32> to vector<8x128xf32>
    %428 = arith.addf %427, %6 : vector<8x128xf32>
    %429 = arith.mulf %417, %428 : vector<8x128xf32>
    %430 = arith.addf %426, %429 : vector<8x128xf32>
    %431 = math.tanh %430 : vector<8x128xf32>
    %cst_75 = arith.constant 1.000000e+00 : f32
    %432 = vector.broadcast %cst_75 : f32 to vector<8x128xf32>
    %433 = arith.subf %432, %425 : vector<8x128xf32>
    %434 = arith.mulf %433, %431 : vector<8x128xf32>
    %435 = arith.mulf %425, %375 : vector<8x128xf32>
    %436 = arith.addf %434, %435 : vector<8x128xf32>
    %c7_i32 = arith.constant 7 : i32
    %437 = arith.index_cast %c7_i32 : i32 to index
    %c0_76 = arith.constant 0 : index
    %c0_77 = arith.constant 0 : index
    %438 = vector.load %arg2[%437, %c0_76, %c0_77] : memref<8x16x384xf32, #tpu.memory_space<vmem>>, vector<1x16x384xf32>
    %439 = vector.shape_cast %438 : vector<1x16x384xf32> to vector<16x384xf32>
    %440 = vector.extract_strided_slice %439 {offsets = [0, 0], sizes = [8, 384], strides = [1, 1]} : vector<16x384xf32> to vector<8x384xf32>
    %cst_78 = arith.constant dense<0.000000e+00> : vector<8x384xf32>
    %441 = tpu.matmul %407, %3, %cst_78 {dimension_numbers = #tpu.dot_dimension_numbers<[1], [0], [0], [1], [0, 0, 1, 1], [], []>} : vector<8x128xf32>, vector<128x384xf32>, vector<8x384xf32> -> vector<8x384xf32>
    %442 = vector.extract_strided_slice %440 {offsets = [0, 0], sizes = [8, 128], strides = [1, 1]} : vector<8x384xf32> to vector<8x128xf32>
    %443 = vector.extract_strided_slice %441 {offsets = [0, 0], sizes = [8, 128], strides = [1, 1]} : vector<8x384xf32> to vector<8x128xf32>
    %444 = arith.addf %442, %443 : vector<8x128xf32>
    %445 = arith.negf %444 : vector<8x128xf32>
    %446 = math.exp %445 : vector<8x128xf32>
    %cst_79 = arith.constant 1.000000e+00 : f32
    %447 = vector.broadcast %cst_79 : f32 to vector<8x128xf32>
    %448 = arith.addf %447, %446 : vector<8x128xf32>
    %449 = arith.divf %447, %448 : vector<8x128xf32>
    %450 = vector.extract_strided_slice %440 {offsets = [0, 128], sizes = [8, 128], strides = [1, 1]} : vector<8x384xf32> to vector<8x128xf32>
    %451 = vector.extract_strided_slice %441 {offsets = [0, 128], sizes = [8, 128], strides = [1, 1]} : vector<8x384xf32> to vector<8x128xf32>
    %452 = arith.addf %450, %451 : vector<8x128xf32>
    %453 = arith.negf %452 : vector<8x128xf32>
    %454 = math.exp %453 : vector<8x128xf32>
    %cst_80 = arith.constant 1.000000e+00 : f32
    %455 = vector.broadcast %cst_80 : f32 to vector<8x128xf32>
    %456 = arith.addf %455, %454 : vector<8x128xf32>
    %457 = arith.divf %455, %456 : vector<8x128xf32>
    %458 = vector.extract_strided_slice %440 {offsets = [0, 256], sizes = [8, 128], strides = [1, 1]} : vector<8x384xf32> to vector<8x128xf32>
    %459 = vector.extract_strided_slice %441 {offsets = [0, 256], sizes = [8, 128], strides = [1, 1]} : vector<8x384xf32> to vector<8x128xf32>
    %460 = arith.addf %459, %6 : vector<8x128xf32>
    %461 = arith.mulf %449, %460 : vector<8x128xf32>
    %462 = arith.addf %458, %461 : vector<8x128xf32>
    %463 = math.tanh %462 : vector<8x128xf32>
    %cst_81 = arith.constant 1.000000e+00 : f32
    %464 = vector.broadcast %cst_81 : f32 to vector<8x128xf32>
    %465 = arith.subf %464, %457 : vector<8x128xf32>
    %466 = arith.mulf %465, %463 : vector<8x128xf32>
    %467 = arith.mulf %457, %407 : vector<8x128xf32>
    %468 = arith.addf %466, %467 : vector<8x128xf32>
    %469 = vector.extract_strided_slice %439 {offsets = [8, 0], sizes = [8, 384], strides = [1, 1]} : vector<16x384xf32> to vector<8x384xf32>
    %cst_82 = arith.constant dense<0.000000e+00> : vector<8x384xf32>
    %470 = tpu.matmul %436, %3, %cst_82 {dimension_numbers = #tpu.dot_dimension_numbers<[1], [0], [0], [1], [0, 0, 1, 1], [], []>} : vector<8x128xf32>, vector<128x384xf32>, vector<8x384xf32> -> vector<8x384xf32>
    %471 = vector.extract_strided_slice %469 {offsets = [0, 0], sizes = [8, 128], strides = [1, 1]} : vector<8x384xf32> to vector<8x128xf32>
    %472 = vector.extract_strided_slice %470 {offsets = [0, 0], sizes = [8, 128], strides = [1, 1]} : vector<8x384xf32> to vector<8x128xf32>
    %473 = arith.addf %471, %472 : vector<8x128xf32>
    %474 = arith.negf %473 : vector<8x128xf32>
    %475 = math.exp %474 : vector<8x128xf32>
    %cst_83 = arith.constant 1.000000e+00 : f32
    %476 = vector.broadcast %cst_83 : f32 to vector<8x128xf32>
    %477 = arith.addf %476, %475 : vector<8x128xf32>
    %478 = arith.divf %476, %477 : vector<8x128xf32>
    %479 = vector.extract_strided_slice %469 {offsets = [0, 128], sizes = [8, 128], strides = [1, 1]} : vector<8x384xf32> to vector<8x128xf32>
    %480 = vector.extract_strided_slice %470 {offsets = [0, 128], sizes = [8, 128], strides = [1, 1]} : vector<8x384xf32> to vector<8x128xf32>
    %481 = arith.addf %479, %480 : vector<8x128xf32>
    %482 = arith.negf %481 : vector<8x128xf32>
    %483 = math.exp %482 : vector<8x128xf32>
    %cst_84 = arith.constant 1.000000e+00 : f32
    %484 = vector.broadcast %cst_84 : f32 to vector<8x128xf32>
    %485 = arith.addf %484, %483 : vector<8x128xf32>
    %486 = arith.divf %484, %485 : vector<8x128xf32>
    %487 = vector.extract_strided_slice %469 {offsets = [0, 256], sizes = [8, 128], strides = [1, 1]} : vector<8x384xf32> to vector<8x128xf32>
    %488 = vector.extract_strided_slice %470 {offsets = [0, 256], sizes = [8, 128], strides = [1, 1]} : vector<8x384xf32> to vector<8x128xf32>
    %489 = arith.addf %488, %6 : vector<8x128xf32>
    %490 = arith.mulf %478, %489 : vector<8x128xf32>
    %491 = arith.addf %487, %490 : vector<8x128xf32>
    %492 = math.tanh %491 : vector<8x128xf32>
    %cst_85 = arith.constant 1.000000e+00 : f32
    %493 = vector.broadcast %cst_85 : f32 to vector<8x128xf32>
    %494 = arith.subf %493, %486 : vector<8x128xf32>
    %495 = arith.mulf %494, %492 : vector<8x128xf32>
    %496 = arith.mulf %486, %436 : vector<8x128xf32>
    %497 = arith.addf %495, %496 : vector<8x128xf32>
    %c8_i32 = arith.constant 8 : i32
    %498 = tpu.concatenate %468, %497 in 0 : vector<8x128xf32>, vector<8x128xf32> -> vector<16x128xf32>
    %c0_86 = arith.constant 0 : index
    %c0_87 = arith.constant 0 : index
    %499 = vector.load %arg5[%c0_86, %c0_87] : memref<16x128xf32, #tpu.memory_space<vmem>>, vector<16x128xf32>
    tpu.vector_store %arg5[%c0_86, %c0_87], %498 {strides = array<i32>} : memref<16x128xf32, #tpu.memory_space<vmem>>, vector<16x128xf32>,
    return
  }
  func.func @transform_0(%arg0: i32, %arg1: i32) -> (i32, i32, i32) {
    %c0_i32 = arith.constant 0 : i32
    %c0_i32_0 = arith.constant 0 : i32
    return %arg1, %arg0, %c0_i32 : i32, i32, i32
  }
  func.func @transform_1(%arg0: i32, %arg1: i32) -> (i32, i32) {
    %c0_i32 = arith.constant 0 : i32
    %c0_i32_0 = arith.constant 0 : i32
    %c0_i32_1 = arith.constant 0 : i32
    return %c0_i32, %c0_i32_0 : i32, i32
  }
  func.func @transform_2(%arg0: i32, %arg1: i32) -> (i32, i32) {
    %c0_i32 = arith.constant 0 : i32
    %c0_i32_0 = arith.constant 0 : i32
    %c0_i32_1 = arith.constant 0 : i32
    return %c0_i32, %c0_i32_0 : i32, i32
  }
  func.func @transform_3(%arg0: i32, %arg1: i32) -> (i32, i32) {
    %c0_i32 = arith.constant 0 : i32
    %c0_i32_0 = arith.constant 0 : i32
    return %arg0, %c0_i32 : i32, i32
  }
}

</mosaic_0001>

<llo_original>
// kernel: tpu_custom_call.1
$region0: #{tpu_custom_call.1}
  #allocation0 [shape = 'u32[]', space=smem, size = 0x4, offset = 0x4, fixed_abs, tag = 'smem constant byte address 0x4 - core index']
  #allocation1 [shape = 'u32[144,128]{1,0:T(1,128)}', space=vmem, size = 0x12000, scoped, tag = 'internal scratch']
  %s0 = inlined_call_operand.hbm [shape: f32[8,16,384], index: 0, kind: input, shape index: {}]
  %s1 = inlined_call_operand.hbm [shape: f32[128,384], index: 1, kind: input, shape index: {}]
  %s2 = inlined_call_operand.vmem [shape: f32[1,128], index: 2, kind: input, shape index: {}]
  %s3 = inlined_call_operand.hbm [shape: f32[16,128], index: 3, kind: output, shape index: {}]
  %s4 = sld [smem:[#allocation0]]
  $region34: #{tpu_custom_call.1} parent=0
    _
  %s6 = ssub.s32 1, %s4
  %s7 = scalar_select 0, %s6, %s4
  $region1: #{tpu_custom_call.1} parent=0
    #allocation2 [shape = 'u8[196608]{0}', space=vmem, size = 0x30000, scoped, tag = 'input window, operand 0, single buffered']
    #allocation3 [shape = 's32[1]{0}', space=sflag, size = 0x4, scoped, tag = 'scoped memory for tpu_custom_call.1']
    #allocation4 [shape = 's32[1]{0}', space=sflag, size = 0x4, scoped, tag = 'scoped memory for tpu_custom_call.1']
    #allocation5 [shape = 'u8[196608]{0}', space=vmem, size = 0x30000, scoped, tag = 'input window, operand 1, single buffered']
    #allocation6 [shape = 's32[1]{0}', space=sflag, size = 0x4, scoped, tag = 'scoped memory for tpu_custom_call.1']
    #allocation7 [shape = 'u8[8192]{0}', space=vmem, size = 0x2000, scoped, tag = 'output window, operand 0, single buffered']
    %8 = vsyncpa [#allocation3], 0
    %9 = vsyncpa [#allocation6], 0
    %10 = vsyncpa [#allocation4], 0
    // Predicated region
    $region2: #{tpu_custom_call.1} parent=1 // pred_check
      _
    $region3: #{tpu_custom_call.1} parent=1 // pred_check_branch
      %12 = sbr.rel (0) target = $region5
    $region4: #{tpu_custom_call.1} parent=1 // pred_region
      %s14 = ssub.s32 6144, 6144
      %15 = vsyncadd [#allocation3], %s14
      %s16 = sshll.u32 [#allocation2], 4
      %s17 = int_to_ptr.vmem [resolvable:$true] %s16
      %22 = dma.hbm_to_vmem [thread:$0]  %s0, 6144, %s17, [#allocation3], 384, 384, 24
    $region5: #{tpu_custom_call.1} parent=1 // pred_fallthru
      _
    // Predicated region
    $region6: #{tpu_custom_call.1} parent=1 // pred_check
      _
    $region7: #{tpu_custom_call.1} parent=1 // pred_check_branch
      %24 = sbr.rel (0) target = $region9
    $region8: #{tpu_custom_call.1} parent=1 // pred_region
      %s26 = ssub.s32 6144, 6144
      %27 = vsyncadd [#allocation6], %s26
      %s28 = sshll.u32 [#allocation5], 4
      %s29 = int_to_ptr.vmem [resolvable:$true] %s28
      %34 = dma.hbm_to_vmem [thread:$0]  %s1, 6144, %s29, [#allocation6], 384, 384, 24
    $region9: #{tpu_custom_call.1} parent=1 // pred_fallthru
      _
    // Predicated region
    $region10: #{tpu_custom_call.1} parent=1 // pred_check
      _
    $region11: #{tpu_custom_call.1} parent=1 // pred_check_branch
      %36 = sbr.rel (0) target = $region13
    $region12: #{tpu_custom_call.1} parent=1 // pred_region
      _
    $region13: #{tpu_custom_call.1} parent=1 // pred_fallthru
      _
    // Predicated region
    $region14: #{tpu_custom_call.1} parent=1 // pred_check
      _
    $region15: #{tpu_custom_call.1} parent=1 // pred_check_branch
      %38 = sbr.rel (0) target = $region17
    $region16: #{tpu_custom_call.1} parent=1 // pred_region
      %39 = dma.done [#allocation3], 6144
    $region17: #{tpu_custom_call.1} parent=1 // pred_fallthru
      _
    // Predicated region
    $region18: #{tpu_custom_call.1} parent=1 // pred_check
      _
    $region19: #{tpu_custom_call.1} parent=1 // pred_check_branch
      %41 = sbr.rel (0) target = $region21
    $region20: #{tpu_custom_call.1} parent=1 // pred_region
      %42 = dma.done [#allocation6], 6144
    $region21: #{tpu_custom_call.1} parent=1 // pred_fallthru
      _
    %p43 = scmp.eq.s32.totalorder 0, 0
    // Predicated region
    $region22: #{tpu_custom_call.1} parent=1 // pred_check
      %p44 = pneg %p43
    $region23: #{tpu_custom_call.1} parent=1 // pred_check_branch
      %46 = sbr.rel (%p44) target = $region25
    $region24: #{tpu_custom_call.1} parent=1 // pred_region
      %47 = vst [vmem:[#allocation7] sm:$0xff] 0.0
      %48 = vst [vmem:[#allocation7 + $0x8] sm:$0xff] 0.0
    $region25: #{tpu_custom_call.1} parent=1 // pred_fallthru
      _
    %v49 = vld [vmem:[#allocation5] sm:$0xff]
    %v50 = vld [vmem:[#allocation5 + $0x8] sm:$0xff]
    %v51 = vld [vmem:[#allocation5 + $0x10] sm:$0xff]
    %v52 = vld [vmem:[#allocation5 + $0x18] sm:$0xff]
    %v53 = vld [vmem:[#allocation5 + $0x20] sm:$0xff]
    %v54 = vld [vmem:[#allocation5 + $0x28] sm:$0xff]
    %v55 = vld [vmem:[#allocation5 + $0x30] sm:$0xff]
    %v56 = vld [vmem:[#allocation5 + $0x38] sm:$0xff]
    %v57 = vld [vmem:[#allocation5 + $0x40] sm:$0xff]
    %v58 = vld [vmem:[#allocation5 + $0x48] sm:$0xff]
    %v59 = vld [vmem:[#allocation5 + $0x50] sm:$0xff]
    %v60 = vld [vmem:[#allocation5 + $0x58] sm:$0xff]
    %v61 = vld [vmem:[#allocation5 + $0x60] sm:$0xff]
    %v62 = vld [vmem:[#allocation5 + $0x68] sm:$0xff]
    %v63 = vld [vmem:[#allocation5 + $0x70] sm:$0xff]
    %v64 = vld [vmem:[#allocation5 + $0x78] sm:$0xff]
    %v65 = vld [vmem:[#allocation5 + $0x80] sm:$0xff]
    %v66 = vld [vmem:[#allocation5 + $0x88] sm:$0xff]
    %v67 = vld [vmem:[#allocation5 + $0x90] sm:$0xff]
    %v68 = vld [vmem:[#allocation5 + $0x98] sm:$0xff]
    %v69 = vld [vmem:[#allocation5 + $0xa0] sm:$0xff]
    %v70 = vld [vmem:[#allocation5 + $0xa8] sm:$0xff]
    %v71 = vld [vmem:[#allocation5 + $0xb0] sm:$0xff]
    %v72 = vld [vmem:[#allocation5 + $0xb8] sm:$0xff]
    %v73 = vld [vmem:[#allocation5 + $0xc0] sm:$0xff]
    %v74 = vld [vmem:[#allocation5 + $0xc8] sm:$0xff]
    %v75 = vld [vmem:[#allocation5 + $0xd0] sm:$0xff]
    %v76 = vld [vmem:[#allocation5 + $0xd8] sm:$0xff]
    %v77 = vld [vmem:[#allocation5 + $0xe0] sm:$0xff]
    %v78 = vld [vmem:[#allocation5 + $0xe8] sm:$0xff]
    %v79 = vld [vmem:[#allocation5 + $0xf0] sm:$0xff]
    %v80 = vld [vmem:[#allocation5 + $0xf8] sm:$0xff]
    %v81 = vld [vmem:[#allocation5 + $0x100] sm:$0xff]
    %v82 = vld [vmem:[#allocation5 + $0x108] sm:$0xff]
    %v83 = vld [vmem:[#allocation5 + $0x110] sm:$0xff]
    %v84 = vld [vmem:[#allocation5 + $0x118] sm:$0xff]
    %v85 = vld [vmem:[#allocation5 + $0x120] sm:$0xff]
    %v86 = vld [vmem:[#allocation5 + $0x128] sm:$0xff]
    %v87 = vld [vmem:[#allocation5 + $0x130] sm:$0xff]
    %v88 = vld [vmem:[#allocation5 + $0x138] sm:$0xff]
    %v89 = vld [vmem:[#allocation5 + $0x140] sm:$0xff]
    %v90 = vld [vmem:[#allocation5 + $0x148] sm:$0xff]
    %v91 = vld [vmem:[#allocation5 + $0x150] sm:$0xff]
    %v92 = vld [vmem:[#allocation5 + $0x158] sm:$0xff]
    %v93 = vld [vmem:[#allocation5 + $0x160] sm:$0xff]
    %v94 = vld [vmem:[#allocation5 + $0x168] sm:$0xff]
    %v95 = vld [vmem:[#allocation5 + $0x170] sm:$0xff]
    %v96 = vld [vmem:[#allocation5 + $0x178] sm:$0xff]
    %v97 = vld [vmem:[%s2] sm:$0x1]
    %v99 = vlaneseq
    %v100 = vshrl.u32 %v99, 7
    %v101 = vsub.s32 0, %v100
    %v102 = vrot.slane %v97, %v101
    %v104 = vld [vmem:[#allocation7] sm:$0xff]
    %v105 = vld [vmem:[#allocation7 + $0x8] sm:$0xff]
    %v106 = vld [vmem:[#allocation2] sm:$0xff]
    %v107 = vld [vmem:[#allocation2 + $0x8] sm:$0xff]
    %v108 = vld [vmem:[#allocation2 + $0x10] sm:$0xff]
    %v109 = vld [vmem:[#allocation2 + $0x18] sm:$0xff]
    %v110 = vld [vmem:[#allocation2 + $0x20] sm:$0xff]
    %v111 = vld [vmem:[#allocation2 + $0x28] sm:$0xff]
    %112 = vmatprep.subr.mxu0 %v50
    %113 = vmatpush1.msra.mxu0 %v49
    %114 = vmatprep.subr.mxu0 %v53
    %115 = vmatpush1.msra.mxu0 %v52
    %116 = vmatprep.subr.mxu0 %v56
    %117 = vmatpush1.msra.mxu0 %v55
    %118 = vmatprep.subr.mxu0 %v59
    %119 = vmatpush1.msra.mxu0 %v58
    %120 = vmatprep.subr.mxu0 %v62
    %121 = vmatpush1.msra.mxu0 %v61
    %122 = vmatprep.subr.mxu0 %v65
    %123 = vmatpush1.msra.mxu0 %v64
    %124 = vmatprep.subr.mxu0 %v68
    %125 = vmatpush1.msra.mxu0 %v67
    %126 = vmatprep.subr.mxu0 %v71
    %127 = vmatpush1.msra.mxu0 %v70
    %128 = vmatprep.subr.mxu0 %v74
    %129 = vmatpush1.msra.mxu0 %v73
    %130 = vmatprep.subr.mxu0 %v77
    %131 = vmatpush1.msra.mxu0 %v76
    %132 = vmatprep.subr.mxu0 %v80
    %133 = vmatpush1.msra.mxu0 %v79
    %134 = vmatprep.subr.mxu0 %v83
    %135 = vmatpush1.msra.mxu0 %v82
    %136 = vmatprep.subr.mxu0 %v86
    %137 = vmatpush1.msra.mxu0 %v85
    %138 = vmatprep.subr.mxu0 %v89
    %139 = vmatpush1.msra.mxu0 %v88
    %140 = vmatprep.subr.mxu0 %v92
    %141 = vmatpush1.msra.mxu0 %v91
    %142 = vmatprep.subr.mxu0 %v95
    %143 = vmatpush1.msra.mxu0 %v94
    %144 = vmatprep.subr.mxu0 0.0
    %145 = vmatpush1.msra.mxu0 0.0
    %146 = vmatprep.subr.mxu0 0.0
    %147 = vmatpush1.msra.mxu0 0.0
    %148 = vmatprep.subr.mxu0 0.0
    %149 = vmatpush1.msra.mxu0 0.0
    %150 = vmatprep.subr.mxu0 0.0
    %151 = vmatpush1.msra.mxu0 0.0
    %152 = vmatprep.subr.mxu0 0.0
    %153 = vmatpush1.msra.mxu0 0.0
    %154 = vmatprep.subr.mxu0 0.0
    %155 = vmatpush1.msra.mxu0 0.0
    %156 = vmatprep.subr.mxu0 0.0
    %157 = vmatpush1.msra.mxu0 0.0
    %158 = vmatprep.subr.mxu0 0.0
    %159 = vmatpush1.msra.mxu0 0.0
    %160 = vmatprep.subr.mxu0 0.0
    %161 = vmatpush1.msra.mxu0 0.0
    %162 = vmatprep.subr.mxu0 0.0
    %163 = vmatpush1.msra.mxu0 0.0
    %164 = vmatprep.subr.mxu0 0.0
    %165 = vmatpush1.msra.mxu0 0.0
    %166 = vmatprep.subr.mxu0 0.0
    %167 = vmatpush1.msra.mxu0 0.0
    %168 = vmatprep.subr.mxu0 0.0
    %169 = vmatpush1.msra.mxu0 0.0
    %170 = vmatprep.subr.mxu0 0.0
    %171 = vmatpush1.msra.mxu0 0.0
    %172 = vmatprep.subr.mxu0 0.0
    %173 = vmatpush1.msra.mxu0 0.0
    %174 = vmatprep.subr.mxu0 0.0
    %175 = vmatpush1.msra.mxu0 0.0
    %176 = vmatprep.mubr.f32.mxu0 0.0
    %177 = vmatmul.mubr.f32.gmra.mrb[0].mxu0 %v104
    %v178 = vpop.f32.mrb[0].mxu0
    %v179 = vadd.f32 0.0, %v178
    %v180 = vpop.f32.mrb[0].mxu0
    %v181 = vadd.f32 0.0, %v180
    %182 = vdwg.mxu0
    %183 = vmatprep.subr.mxu0 0.0
    %184 = vmatpush1.msra.mxu0 %v51
    %185 = vmatprep.subr.mxu0 0.0
    %186 = vmatpush1.msra.mxu0 %v54
    %187 = vmatprep.subr.mxu0 0.0
    %188 = vmatpush1.msra.mxu0 %v57
    %189 = vmatprep.subr.mxu0 0.0
    %190 = vmatpush1.msra.mxu0 %v60
    %191 = vmatprep.subr.mxu0 0.0
    %192 = vmatpush1.msra.mxu0 %v63
    %193 = vmatprep.subr.mxu0 0.0
    %194 = vmatpush1.msra.mxu0 %v66
    %195 = vmatprep.subr.mxu0 0.0
    %196 = vmatpush1.msra.mxu0 %v69
    %197 = vmatprep.subr.mxu0 0.0
    %198 = vmatpush1.msra.mxu0 %v72
    %199 = vmatprep.subr.mxu0 0.0
    %200 = vmatpush1.msra.mxu0 %v75
    %201 = vmatprep.subr.mxu0 0.0
    %202 = vmatpush1.msra.mxu0 %v78
    %203 = vmatprep.subr.mxu0 0.0
    %204 = vmatpush1.msra.mxu0 %v81
    %205 = vmatprep.subr.mxu0 0.0
    %206 = vmatpush1.msra.mxu0 %v84
    %207 = vmatprep.subr.mxu0 0.0
    %208 = vmatpush1.msra.mxu0 %v87
    %209 = vmatprep.subr.mxu0 0.0
    %210 = vmatpush1.msra.mxu0 %v90
    %211 = vmatprep.subr.mxu0 0.0
    %212 = vmatpush1.msra.mxu0 %v93
    %213 = vmatprep.subr.mxu0 0.0
    %214 = vmatpush1.msra.mxu0 %v96
    %215 = vmatprep.subr.mxu0 0.0
    %216 = vmatpush1.msra.mxu0 0.0
    %217 = vmatprep.subr.mxu0 0.0
    %218 = vmatpush1.msra.mxu0 0.0
    %219 = vmatprep.subr.mxu0 0.0
    %220 = vmatpush1.msra.mxu0 0.0
    %221 = vmatprep.subr.mxu0 0.0
    %222 = vmatpush1.msra.mxu0 0.0
    %223 = vmatprep.subr.mxu0 0.0
    %224 = vmatpush1.msra.mxu0 0.0
    %225 = vmatprep.subr.mxu0 0.0
    %226 = vmatpush1.msra.mxu0 0.0
    %227 = vmatprep.subr.mxu0 0.0
    %228 = vmatpush1.msra.mxu0 0.0
    %229 = vmatprep.subr.mxu0 0.0
    %230 = vmatpush1.msra.mxu0 0.0
    %231 = vmatprep.subr.mxu0 0.0
    %232 = vmatpush1.msra.mxu0 0.0
    %233 = vmatprep.subr.mxu0 0.0
    %234 = vmatpush1.msra.mxu0 0.0
    %235 = vmatprep.subr.mxu0 0.0
    %236 = vmatpush1.msra.mxu0 0.0
    %237 = vmatprep.subr.mxu0 0.0
    %238 = vmatpush1.msra.mxu0 0.0
    %239 = vmatprep.subr.mxu0 0.0
    %240 = vmatpush1.msra.mxu0 0.0
    %241 = vmatprep.subr.mxu0 0.0
    %242 = vmatpush1.msra.mxu0 0.0
    %243 = vmatprep.subr.mxu0 0.0
    %244 = vmatpush1.msra.mxu0 0.0
    %245 = vmatprep.subr.mxu0 0.0
    %246 = vmatpush1.msra.mxu0 0.0
    %247 = vmatprep.mubr.f32.mxu0 0.0
    %248 = vmatmul.mubr.f32.gmra.mrb[0].mxu0 %v104
    %v249 = vpop.f32.mrb[0].mxu0
    %v250 = vadd.f32 0.0, %v249
    %v251 = vpop.f32.mrb[0].mxu0
    %252 = vdwg.mxu0
    %v253 = vadd.f32 %v106, %v179
    %v254 = vxor.u32 %v253, 2147483648
    %v255 = vmul.f32 %v254, 1.442695
    %v256 = vpow.pop %v255
    %v257 = vadd.f32 %v256, 1.0
    %v258 = vrcp.pop %v257
    %v259 = vmul.f32 1.0, %v258
    %v260 = vadd.f32 %v107, %v181
    %v261 = vxor.u32 %v260, 2147483648
    %v262 = vmul.f32 %v261, 1.442695
    %v263 = vpow.pop %v262
    %v264 = vadd.f32 %v263, 1.0
    %v265 = vrcp.pop %v264
    %v266 = vmul.f32 1.0, %v265
    %v267 = vadd.f32 %v250, %v102
    %v268 = vmul.f32 %v259, %v267
    %v269 = vadd.f32 %v108, %v268
    %v270 = vtanh.pop %v269
    %v271 = vsub.f32 1.0, %v266
    %v272 = vmul.f32 %v271, %v270
    %v273 = vmul.f32 %v266, %v104
    %v274 = vadd.f32 %v272, %v273
    %275 = vmatprep.subr.mxu0 %v50
    %276 = vmatpush1.msra.mxu0 %v49
    %277 = vmatprep.subr.mxu0 %v53
    %278 = vmatpush1.msra.mxu0 %v52
    %279 = vmatprep.subr.mxu0 %v56
    %280 = vmatpush1.msra.mxu0 %v55
    %281 = vmatprep.subr.mxu0 %v59
    %282 = vmatpush1.msra.mxu0 %v58
    %283 = vmatprep.subr.mxu0 %v62
    %284 = vmatpush1.msra.mxu0 %v61
    %285 = vmatprep.subr.mxu0 %v65
    %286 = vmatpush1.msra.mxu0 %v64
    %287 = vmatprep.subr.mxu0 %v68
    %288 = vmatpush1.msra.mxu0 %v67
    %289 = vmatprep.subr.mxu0 %v71
    %290 = vmatpush1.msra.mxu0 %v70
    %291 = vmatprep.subr.mxu0 %v74
    %292 = vmatpush1.msra.mxu0 %v73
    %293 = vmatprep.subr.mxu0 %v77
    %294 = vmatpush1.msra.mxu0 %v76
    %295 = vmatprep.subr.mxu0 %v80
    %296 = vmatpush1.msra.mxu0 %v79
    %297 = vmatprep.subr.mxu0 %v83
    %298 = vmatpush1.msra.mxu0 %v82
    %299 = vmatprep.subr.mxu0 %v86
    %300 = vmatpush1.msra.mxu0 %v85
    %301 = vmatprep.subr.mxu0 %v89
    %302 = vmatpush1.msra.mxu0 %v88
    %303 = vmatprep.subr.mxu0 %v92
    %304 = vmatpush1.msra.mxu0 %v91
    %305 = vmatprep.subr.mxu0 %v95
    %306 = vmatpush1.msra.mxu0 %v94
    %307 = vmatprep.subr.mxu0 0.0
    %308 = vmatpush1.msra.mxu0 0.0
    %309 = vmatprep.subr.mxu0 0.0
    %310 = vmatpush1.msra.mxu0 0.0
    %311 = vmatprep.subr.mxu0 0.0
    %312 = vmatpush1.msra.mxu0 0.0
    %313 = vmatprep.subr.mxu0 0.0
    %314 = vmatpush1.msra.mxu0 0.0
    %315 = vmatprep.subr.mxu0 0.0
    %316 = vmatpush1.msra.mxu0 0.0
    %317 = vmatprep.subr.mxu0 0.0
    %318 = vmatpush1.msra.mxu0 0.0
    %319 = vmatprep.subr.mxu0 0.0
    %320 = vmatpush1.msra.mxu0 0.0
    %321 = vmatprep.subr.mxu0 0.0
    %322 = vmatpush1.msra.mxu0 0.0
    %323 = vmatprep.subr.mxu0 0.0
    %324 = vmatpush1.msra.mxu0 0.0
    %325 = vmatprep.subr.mxu0 0.0
    %326 = vmatpush1.msra.mxu0 0.0
    %327 = vmatprep.subr.mxu0 0.0
    %328 = vmatpush1.msra.mxu0 0.0
    %329 = vmatprep.subr.mxu0 0.0
    %330 = vmatpush1.msra.mxu0 0.0
    %331 = vmatprep.subr.mxu0 0.0
    %332 = vmatpush1.msra.mxu0 0.0
    %333 = vmatprep.subr.mxu0 0.0
    %334 = vmatpush1.msra.mxu0 0.0
    %335 = vmatprep.subr.mxu0 0.0
    %336 = vmatpush1.msra.mxu0 0.0
    %337 = vmatprep.subr.mxu0 0.0
    %338 = vmatpush1.msra.mxu0 0.0
    %339 = vmatprep.mubr.f32.mxu0 0.0
    %340 = vmatmul.mubr.f32.gmra.mrb[0].mxu0 %v105
    %v341 = vpop.f32.mrb[0].mxu0
    %v342 = vadd.f32 0.0, %v341
    %v343 = vpop.f32.mrb[0].mxu0
    %v344 = vadd.f32 0.0, %v343
    %345 = vdwg.mxu0
    %346 = vmatprep.subr.mxu0 0.0
    %347 = vmatpush1.msra.mxu0 %v51
    %348 = vmatprep.subr.mxu0 0.0
    %349 = vmatpush1.msra.mxu0 %v54
    %350 = vmatprep.subr.mxu0 0.0
    %351 = vmatpush1.msra.mxu0 %v57
    %352 = vmatprep.subr.mxu0 0.0
    %353 = vmatpush1.msra.mxu0 %v60
    %354 = vmatprep.subr.mxu0 0.0
    %355 = vmatpush1.msra.mxu0 %v63
    %356 = vmatprep.subr.mxu0 0.0
    %357 = vmatpush1.msra.mxu0 %v66
    %358 = vmatprep.subr.mxu0 0.0
    %359 = vmatpush1.msra.mxu0 %v69
    %360 = vmatprep.subr.mxu0 0.0
    %361 = vmatpush1.msra.mxu0 %v72
    %362 = vmatprep.subr.mxu0 0.0
    %363 = vmatpush1.msra.mxu0 %v75
    %364 = vmatprep.subr.mxu0 0.0
    %365 = vmatpush1.msra.mxu0 %v78
    %366 = vmatprep.subr.mxu0 0.0
    %367 = vmatpush1.msra.mxu0 %v81
    %368 = vmatprep.subr.mxu0 0.0
    %369 = vmatpush1.msra.mxu0 %v84
    %370 = vmatprep.subr.mxu0 0.0
    %371 = vmatpush1.msra.mxu0 %v87
    %372 = vmatprep.subr.mxu0 0.0
    %373 = vmatpush1.msra.mxu0 %v90
    %374 = vmatprep.subr.mxu0 0.0
    %375 = vmatpush1.msra.mxu0 %v93
    %376 = vmatprep.subr.mxu0 0.0
    %377 = vmatpush1.msra.mxu0 %v96
    %378 = vmatprep.subr.mxu0 0.0
    %379 = vmatpush1.msra.mxu0 0.0
    %380 = vmatprep.subr.mxu0 0.0
    %381 = vmatpush1.msra.mxu0 0.0
    %382 = vmatprep.subr.mxu0 0.0
    %383 = vmatpush1.msra.mxu0 0.0
    %384 = vmatprep.subr.mxu0 0.0
    %385 = vmatpush1.msra.mxu0 0.0
    %386 = vmatprep.subr.mxu0 0.0
    %387 = vmatpush1.msra.mxu0 0.0
    %388 = vmatprep.subr.mxu0 0.0
    %389 = vmatpush1.msra.mxu0 0.0
    %390 = vmatprep.subr.mxu0 0.0
    %391 = vmatpush1.msra.mxu0 0.0
    %392 = vmatprep.subr.mxu0 0.0
    %393 = vmatpush1.msra.mxu0 0.0
    %394 = vmatprep.subr.mxu0 0.0
    %395 = vmatpush1.msra.mxu0 0.0
    %396 = vmatprep.subr.mxu0 0.0
    %397 = vmatpush1.msra.mxu0 0.0
    %398 = vmatprep.subr.mxu0 0.0
    %399 = vmatpush1.msra.mxu0 0.0
    %400 = vmatprep.subr.mxu0 0.0
    %401 = vmatpush1.msra.mxu0 0.0
    %402 = vmatprep.subr.mxu0 0.0
    %403 = vmatpush1.msra.mxu0 0.0
    %404 = vmatprep.subr.mxu0 0.0
    %405 = vmatpush1.msra.mxu0 0.0
    %406 = vmatprep.subr.mxu0 0.0
    %407 = vmatpush1.msra.mxu0 0.0
    %408 = vmatprep.subr.mxu0 0.0
    %409 = vmatpush1.msra.mxu0 0.0
    %410 = vmatprep.mubr.f32.mxu0 0.0
    %411 = vmatmul.mubr.f32.gmra.mrb[0].mxu0 %v105
    %v412 = vpop.f32.mrb[0].mxu0
    %v413 = vadd.f32 0.0, %v412
    %v414 = vpop.f32.mrb[0].mxu0
    %415 = vdwg.mxu0
    %v416 = vadd.f32 %v109, %v342
    %v417 = vxor.u32 %v416, 2147483648
    %v418 = vmul.f32 %v417, 1.442695
    %v419 = vpow.pop %v418
    %v420 = vadd.f32 %v419, 1.0
    %v421 = vrcp.pop %v420
    %v422 = vmul.f32 1.0, %v421
    %v423 = vadd.f32 %v110, %v344
    %v424 = vxor.u32 %v423, 2147483648
    %v425 = vmul.f32 %v424, 1.442695
    %v426 = vpow.pop %v425
    %v427 = vadd.f32 %v426, 1.0
    %v428 = vrcp.pop %v427
    %v429 = vmul.f32 1.0, %v428
    %v430 = vadd.f32 %v413, %v102
    %v431 = vmul.f32 %v422, %v430
    %v432 = vadd.f32 %v111, %v431
    %v433 = vtanh.pop %v432
    %v434 = vsub.f32 1.0, %v429
    %v435 = vmul.f32 %v434, %v433
    %v436 = vmul.f32 %v429, %v105
    %v437 = vadd.f32 %v435, %v436
    %s438 = scalar_lea.vmem [#allocation2], 48
    %v439 = vld [vmem:[%s438] sm:$0xff]
    %v440 = vld [vmem:[%s438 + $0x8] sm:$0xff]
    %v441 = vld [vmem:[%s438 + $0x10] sm:$0xff]
    %v442 = vld [vmem:[%s438 + $0x18] sm:$0xff]
    %v443 = vld [vmem:[%s438 + $0x20] sm:$0xff]
    %v444 = vld [vmem:[%s438 + $0x28] sm:$0xff]
    %445 = vmatprep.subr.mxu0 %v50
    %446 = vmatpush1.msra.mxu0 %v49
    %447 = vmatprep.subr.mxu0 %v53
    %448 = vmatpush1.msra.mxu0 %v52
    %449 = vmatprep.subr.mxu0 %v56
    %450 = vmatpush1.msra.mxu0 %v55
    %451 = vmatprep.subr.mxu0 %v59
    %452 = vmatpush1.msra.mxu0 %v58
    %453 = vmatprep.subr.mxu0 %v62
    %454 = vmatpush1.msra.mxu0 %v61
    %455 = vmatprep.subr.mxu0 %v65
    %456 = vmatpush1.msra.mxu0 %v64
    %457 = vmatprep.subr.mxu0 %v68
    %458 = vmatpush1.msra.mxu0 %v67
    %459 = vmatprep.subr.mxu0 %v71
    %460 = vmatpush1.msra.mxu0 %v70
    %461 = vmatprep.subr.mxu0 %v74
    %462 = vmatpush1.msra.mxu0 %v73
    %463 = vmatprep.subr.mxu0 %v77
    %464 = vmatpush1.msra.mxu0 %v76
    %465 = vmatprep.subr.mxu0 %v80
    %466 = vmatpush1.msra.mxu0 %v79
    %467 = vmatprep.subr.mxu0 %v83
    %468 = vmatpush1.msra.mxu0 %v82
    %469 = vmatprep.subr.mxu0 %v86
    %470 = vmatpush1.msra.mxu0 %v85
    %471 = vmatprep.subr.mxu0 %v89
    %472 = vmatpush1.msra.mxu0 %v88
    %473 = vmatprep.subr.mxu0 %v92
    %474 = vmatpush1.msra.mxu0 %v91
    %475 = vmatprep.subr.mxu0 %v95
    %476 = vmatpush1.msra.mxu0 %v94
    %477 = vmatprep.subr.mxu0 0.0
    %478 = vmatpush1.msra.mxu0 0.0
    %479 = vmatprep.subr.mxu0 0.0
    %480 = vmatpush1.msra.mxu0 0.0
    %481 = vmatprep.subr.mxu0 0.0
    %482 = vmatpush1.msra.mxu0 0.0
    %483 = vmatprep.subr.mxu0 0.0
    %484 = vmatpush1.msra.mxu0 0.0
    %485 = vmatprep.subr.mxu0 0.0
    %486 = vmatpush1.msra.mxu0 0.0
    %487 = vmatprep.subr.mxu0 0.0
    %488 = vmatpush1.msra.mxu0 0.0
    %489 = vmatprep.subr.mxu0 0.0
    %490 = vmatpush1.msra.mxu0 0.0
    %491 = vmatprep.subr.mxu0 0.0
    %492 = vmatpush1.msra.mxu0 0.0
    %493 = vmatprep.subr.mxu0 0.0
    %494 = vmatpush1.msra.mxu0 0.0
    %495 = vmatprep.subr.mxu0 0.0
    %496 = vmatpush1.msra.mxu0 0.0
    %497 = vmatprep.subr.mxu0 0.0
    %498 = vmatpush1.msra.mxu0 0.0
    %499 = vmatprep.subr.mxu0 0.0
    %500 = vmatpush1.msra.mxu0 0.0
    %501 = vmatprep.subr.mxu0 0.0
    %502 = vmatpush1.msra.mxu0 0.0
    %503 = vmatprep.subr.mxu0 0.0
    %504 = vmatpush1.msra.mxu0 0.0
    %505 = vmatprep.subr.mxu0 0.0
    %506 = vmatpush1.msra.mxu0 0.0
    %507 = vmatprep.subr.mxu0 0.0
    %508 = vmatpush1.msra.mxu0 0.0
    %509 = vmatprep.mubr.f32.mxu0 0.0
    %510 = vmatmul.mubr.f32.gmra.mrb[0].mxu0 %v274
    %v511 = vpop.f32.mrb[0].mxu0
    %v512 = vadd.f32 0.0, %v511
    %v513 = vpop.f32.mrb[0].mxu0
    %v514 = vadd.f32 0.0, %v513
    %515 = vdwg.mxu0
    %516 = vmatprep.subr.mxu0 0.0
    %517 = vmatpush1.msra.mxu0 %v51
    %518 = vmatprep.subr.mxu0 0.0
    %519 = vmatpush1.msra.mxu0 %v54
    %520 = vmatprep.subr.mxu0 0.0
    %521 = vmatpush1.msra.mxu0 %v57
    %522 = vmatprep.subr.mxu0 0.0
    %523 = vmatpush1.msra.mxu0 %v60
    %524 = vmatprep.subr.mxu0 0.0
    %525 = vmatpush1.msra.mxu0 %v63
    %526 = vmatprep.subr.mxu0 0.0
    %527 = vmatpush1.msra.mxu0 %v66
    %528 = vmatprep.subr.mxu0 0.0
    %529 = vmatpush1.msra.mxu0 %v69
    %530 = vmatprep.subr.mxu0 0.0
    %531 = vmatpush1.msra.mxu0 %v72
    %532 = vmatprep.subr.mxu0 0.0
    %533 = vmatpush1.msra.mxu0 %v75
    %534 = vmatprep.subr.mxu0 0.0
    %535 = vmatpush1.msra.mxu0 %v78
    %536 = vmatprep.subr.mxu0 0.0
    %537 = vmatpush1.msra.mxu0 %v81
    %538 = vmatprep.subr.mxu0 0.0
    %539 = vmatpush1.msra.mxu0 %v84
    %540 = vmatprep.subr.mxu0 0.0
    %541 = vmatpush1.msra.mxu0 %v87
    %542 = vmatprep.subr.mxu0 0.0
    %543 = vmatpush1.msra.mxu0 %v90
    %544 = vmatprep.subr.mxu0 0.0
    %545 = vmatpush1.msra.mxu0 %v93
    %546 = vmatprep.subr.mxu0 0.0
    %547 = vmatpush1.msra.mxu0 %v96
    %548 = vmatprep.subr.mxu0 0.0
    %549 = vmatpush1.msra.mxu0 0.0
    %550 = vmatprep.subr.mxu0 0.0
    %551 = vmatpush1.msra.mxu0 0.0
    %552 = vmatprep.subr.mxu0 0.0
    %553 = vmatpush1.msra.mxu0 0.0
    %554 = vmatprep.subr.mxu0 0.0
    %555 = vmatpush1.msra.mxu0 0.0
    %556 = vmatprep.subr.mxu0 0.0
    %557 = vmatpush1.msra.mxu0 0.0
    %558 = vmatprep.subr.mxu0 0.0
    %559 = vmatpush1.msra.mxu0 0.0
    %560 = vmatprep.subr.mxu0 0.0
    %561 = vmatpush1.msra.mxu0 0.0
    %562 = vmatprep.subr.mxu0 0.0
    %563 = vmatpush1.msra.mxu0 0.0
    %564 = vmatprep.subr.mxu0 0.0
    %565 = vmatpush1.msra.mxu0 0.0
    %566 = vmatprep.subr.mxu0 0.0
    %567 = vmatpush1.msra.mxu0 0.0
    %568 = vmatprep.subr.mxu0 0.0
    %569 = vmatpush1.msra.mxu0 0.0
    %570 = vmatprep.subr.mxu0 0.0
    %571 = vmatpush1.msra.mxu0 0.0
    %572 = vmatprep.subr.mxu0 0.0
    %573 = vmatpush1.msra.mxu0 0.0
    %574 = vmatprep.subr.mxu0 0.0
    %575 = vmatpush1.msra.mxu0 0.0
    %576 = vmatprep.subr.mxu0 0.0
    %577 = vmatpush1.msra.mxu0 0.0
    %578 = vmatprep.subr.mxu0 0.0
    %579 = vmatpush1.msra.mxu0 0.0
    %580 = vmatprep.mubr.f32.mxu0 0.0
    %581 = vmatmul.mubr.f32.gmra.mrb[0].mxu0 %v274
    %v582 = vpop.f32.mrb[0].mxu0
    %v583 = vadd.f32 0.0, %v582
    %v584 = vpop.f32.mrb[0].mxu0
    %585 = vdwg.mxu0
    %v586 = vadd.f32 %v439, %v512
    %v587 = vxor.u32 %v586, 2147483648
    %v588 = vmul.f32 %v587, 1.442695
    %v589 = vpow.pop %v588
    %v590 = vadd.f32 %v589, 1.0
    %v591 = vrcp.pop %v590
    %v592 = vmul.f32 1.0, %v591
    %v593 = vadd.f32 %v440, %v514
    %v594 = vxor.u32 %v593, 2147483648
    %v595 = vmul.f32 %v594, 1.442695
    %v596 = vpow.pop %v595
    %v597 = vadd.f32 %v596, 1.0
    %v598 = vrcp.pop %v597
    %v599 = vmul.f32 1.0, %v598
    %v600 = vadd.f32 %v583, %v102
    %v601 = vmul.f32 %v592, %v600
    %v602 = vadd.f32 %v441, %v601
    %v603 = vtanh.pop %v602
    %v604 = vsub.f32 1.0, %v599
    %v605 = vmul.f32 %v604, %v603
    %v606 = vmul.f32 %v599, %v274
    %v607 = vadd.f32 %v605, %v606
    %608 = vmatprep.subr.mxu0 %v50
    %609 = vmatpush1.msra.mxu0 %v49
    %610 = vmatprep.subr.mxu0 %v53
    %611 = vmatpush1.msra.mxu0 %v52
    %612 = vmatprep.subr.mxu0 %v56
    %613 = vmatpush1.msra.mxu0 %v55
    %614 = vmatprep.subr.mxu0 %v59
    %615 = vmatpush1.msra.mxu0 %v58
    %616 = vmatprep.subr.mxu0 %v62
    %617 = vmatpush1.msra.mxu0 %v61
    %618 = vmatprep.subr.mxu0 %v65
    %619 = vmatpush1.msra.mxu0 %v64
    %620 = vmatprep.subr.mxu0 %v68
    %621 = vmatpush1.msra.mxu0 %v67
    %622 = vmatprep.subr.mxu0 %v71
    %623 = vmatpush1.msra.mxu0 %v70
    %624 = vmatprep.subr.mxu0 %v74
    %625 = vmatpush1.msra.mxu0 %v73
    %626 = vmatprep.subr.mxu0 %v77
    %627 = vmatpush1.msra.mxu0 %v76
    %628 = vmatprep.subr.mxu0 %v80
    %629 = vmatpush1.msra.mxu0 %v79
    %630 = vmatprep.subr.mxu0 %v83
    %631 = vmatpush1.msra.mxu0 %v82
    %632 = vmatprep.subr.mxu0 %v86
    %633 = vmatpush1.msra.mxu0 %v85
    %634 = vmatprep.subr.mxu0 %v89
    %635 = vmatpush1.msra.mxu0 %v88
    %636 = vmatprep.subr.mxu0 %v92
    %637 = vmatpush1.msra.mxu0 %v91
    %638 = vmatprep.subr.mxu0 %v95
    %639 = vmatpush1.msra.mxu0 %v94
    %640 = vmatprep.subr.mxu0 0.0
    %641 = vmatpush1.msra.mxu0 0.0
    %642 = vmatprep.subr.mxu0 0.0
    %643 = vmatpush1.msra.mxu0 0.0
    %644 = vmatprep.subr.mxu0 0.0
    %645 = vmatpush1.msra.mxu0 0.0
    %646 = vmatprep.subr.mxu0 0.0
    %647 = vmatpush1.msra.mxu0 0.0
    %648 = vmatprep.subr.mxu0 0.0
    %649 = vmatpush1.msra.mxu0 0.0
    %650 = vmatprep.subr.mxu0 0.0
    %651 = vmatpush1.msra.mxu0 0.0
    %652 = vmatprep.subr.mxu0 0.0
    %653 = vmatpush1.msra.mxu0 0.0
    %654 = vmatprep.subr.mxu0 0.0
    %655 = vmatpush1.msra.mxu0 0.0
    %656 = vmatprep.subr.mxu0 0.0
    %657 = vmatpush1.msra.mxu0 0.0
    %658 = vmatprep.subr.mxu0 0.0
    %659 = vmatpush1.msra.mxu0 0.0
    %660 = vmatprep.subr.mxu0 0.0
    %661 = vmatpush1.msra.mxu0 0.0
    %662 = vmatprep.subr.mxu0 0.0
    %663 = vmatpush1.msra.mxu0 0.0
    %664 = vmatprep.subr.mxu0 0.0
    %665 = vmatpush1.msra.mxu0 0.0
    %666 = vmatprep.subr.mxu0 0.0
    %667 = vmatpush1.msra.mxu0 0.0
    %668 = vmatprep.subr.mxu0 0.0
    %669 = vmatpush1.msra.mxu0 0.0
    %670 = vmatprep.subr.mxu0 0.0
    %671 = vmatpush1.msra.mxu0 0.0
    %672 = vmatprep.mubr.f32.mxu0 0.0
    %673 = vmatmul.mubr.f32.gmra.mrb[0].mxu0 %v437
    %v674 = vpop.f32.mrb[0].mxu0
    %v675 = vadd.f32 0.0, %v674
    %v676 = vpop.f32.mrb[0].mxu0
    %v677 = vadd.f32 0.0, %v676
    %678 = vdwg.mxu0
    %679 = vmatprep.subr.mxu0 0.0
    %680 = vmatpush1.msra.mxu0 %v51
    %681 = vmatprep.subr.mxu0 0.0
    %682 = vmatpush1.msra.mxu0 %v54
    %683 = vmatprep.subr.mxu0 0.0
    %684 = vmatpush1.msra.mxu0 %v57
    %685 = vmatprep.subr.mxu0 0.0
    %686 = vmatpush1.msra.mxu0 %v60
    %687 = vmatprep.subr.mxu0 0.0
    %688 = vmatpush1.msra.mxu0 %v63
    %689 = vmatprep.subr.mxu0 0.0
    %690 = vmatpush1.msra.mxu0 %v66
    %691 = vmatprep.subr.mxu0 0.0
    %692 = vmatpush1.msra.mxu0 %v69
    %693 = vmatprep.subr.mxu0 0.0
    %694 = vmatpush1.msra.mxu0 %v72
    %695 = vmatprep.subr.mxu0 0.0
    %696 = vmatpush1.msra.mxu0 %v75
    %697 = vmatprep.subr.mxu0 0.0
    %698 = vmatpush1.msra.mxu0 %v78
    %699 = vmatprep.subr.mxu0 0.0
    %700 = vmatpush1.msra.mxu0 %v81
    %701 = vmatprep.subr.mxu0 0.0
    %702 = vmatpush1.msra.mxu0 %v84
    %703 = vmatprep.subr.mxu0 0.0
    %704 = vmatpush1.msra.mxu0 %v87
    %705 = vmatprep.subr.mxu0 0.0
    %706 = vmatpush1.msra.mxu0 %v90
    %707 = vmatprep.subr.mxu0 0.0
    %708 = vmatpush1.msra.mxu0 %v93
    %709 = vmatprep.subr.mxu0 0.0
    %710 = vmatpush1.msra.mxu0 %v96
    %711 = vmatprep.subr.mxu0 0.0
    %712 = vmatpush1.msra.mxu0 0.0
    %713 = vmatprep.subr.mxu0 0.0
    %714 = vmatpush1.msra.mxu0 0.0
    %715 = vmatprep.subr.mxu0 0.0
    %716 = vmatpush1.msra.mxu0 0.0
    %717 = vmatprep.subr.mxu0 0.0
    %718 = vmatpush1.msra.mxu0 0.0
    %719 = vmatprep.subr.mxu0 0.0
    %720 = vmatpush1.msra.mxu0 0.0
    %721 = vmatprep.subr.mxu0 0.0
    %722 = vmatpush1.msra.mxu0 0.0
    %723 = vmatprep.subr.mxu0 0.0
    %724 = vmatpush1.msra.mxu0 0.0
    %725 = vmatprep.subr.mxu0 0.0
    %726 = vmatpush1.msra.mxu0 0.0
    %727 = vmatprep.subr.mxu0 0.0
    %728 = vmatpush1.msra.mxu0 0.0
    %729 = vmatprep.subr.mxu0 0.0
    %730 = vmatpush1.msra.mxu0 0.0
    %731 = vmatprep.subr.mxu0 0.0
    %732 = vmatpush1.msra.mxu0 0.0
    %733 = vmatprep.subr.mxu0 0.0
    %734 = vmatpush1.msra.mxu0 0.0
    %735 = vmatprep.subr.mxu0 0.0
    %736 = vmatpush1.msra.mxu0 0.0
    %737 = vmatprep.subr.mxu0 0.0
    %738 = vmatpush1.msra.mxu0 0.0
    %739 = vmatprep.subr.mxu0 0.0
    %740 = vmatpush1.msra.mxu0 0.0
    %741 = vmatprep.subr.mxu0 0.0
    %742 = vmatpush1.msra.mxu0 0.0
    %743 = vmatprep.mubr.f32.mxu0 0.0
    %744 = vmatmul.mubr.f32.gmra.mrb[0].mxu0 %v437
    %v745 = vpop.f32.mrb[0].mxu0
    %v746 = vadd.f32 0.0, %v745
    %v747 = vpop.f32.mrb[0].mxu0
    %748 = vdwg.mxu0
    %v749 = vadd.f32 %v442, %v675
    %v750 = vxor.u32 %v749, 2147483648
    %v751 = vmul.f32 %v750, 1.442695
    %v752 = vpow.pop %v751
    %v753 = vadd.f32 %v752, 1.0
    %v754 = vrcp.pop %v753
    %v755 = vmul.f32 1.0, %v754
    %v756 = vadd.f32 %v443, %v677
    %v757 = vxor.u32 %v756, 2147483648
    %v758 = vmul.f32 %v757, 1.442695
    %v759 = vpow.pop %v758
    %v760 = vadd.f32 %v759, 1.0
    %v761 = vrcp.pop %v760
    %v762 = vmul.f32 1.0, %v761
    %v763 = vadd.f32 %v746, %v102
    %v764 = vmul.f32 %v755, %v763
    %v765 = vadd.f32 %v444, %v764
    %v766 = vtanh.pop %v765
    %v767 = vsub.f32 1.0, %v762
    %v768 = vmul.f32 %v767, %v766
    %v769 = vmul.f32 %v762, %v437
    %v770 = vadd.f32 %v768, %v769
    %s771 = scalar_lea.vmem [#allocation2], 96
    %v772 = vld [vmem:[%s771] sm:$0xff]
    %v773 = vld [vmem:[%s771 + $0x8] sm:$0xff]
    %v774 = vld [vmem:[%s771 + $0x10] sm:$0xff]
    %v775 = vld [vmem:[%s771 + $0x18] sm:$0xff]
    %v776 = vld [vmem:[%s771 + $0x20] sm:$0xff]
    %v777 = vld [vmem:[%s771 + $0x28] sm:$0xff]
    %778 = vmatprep.subr.mxu0 %v50
    %779 = vmatpush1.msra.mxu0 %v49
    %780 = vmatprep.subr.mxu0 %v53
    %781 = vmatpush1.msra.mxu0 %v52
    %782 = vmatprep.subr.mxu0 %v56
    %783 = vmatpush1.msra.mxu0 %v55
    %784 = vmatprep.subr.mxu0 %v59
    %785 = vmatpush1.msra.mxu0 %v58
    %786 = vmatprep.subr.mxu0 %v62
    %787 = vmatpush1.msra.mxu0 %v61
    %788 = vmatprep.subr.mxu0 %v65
    %789 = vmatpush1.msra.mxu0 %v64
    %790 = vmatprep.subr.mxu0 %v68
    %791 = vmatpush1.msra.mxu0 %v67
    %792 = vmatprep.subr.mxu0 %v71
    %793 = vmatpush1.msra.mxu0 %v70
    %794 = vmatprep.subr.mxu0 %v74
    %795 = vmatpush1.msra.mxu0 %v73
    %796 = vmatprep.subr.mxu0 %v77
    %797 = vmatpush1.msra.mxu0 %v76
    %798 = vmatprep.subr.mxu0 %v80
    %799 = vmatpush1.msra.mxu0 %v79
    %800 = vmatprep.subr.mxu0 %v83
    %801 = vmatpush1.msra.mxu0 %v82
    %802 = vmatprep.subr.mxu0 %v86
    %803 = vmatpush1.msra.mxu0 %v85
    %804 = vmatprep.subr.mxu0 %v89
    %805 = vmatpush1.msra.mxu0 %v88
    %806 = vmatprep.subr.mxu0 %v92
    %807 = vmatpush1.msra.mxu0 %v91
    %808 = vmatprep.subr.mxu0 %v95
    %809 = vmatpush1.msra.mxu0 %v94
    %810 = vmatprep.subr.mxu0 0.0
    %811 = vmatpush1.msra.mxu0 0.0
    %812 = vmatprep.subr.mxu0 0.0
    %813 = vmatpush1.msra.mxu0 0.0
    %814 = vmatprep.subr.mxu0 0.0
    %815 = vmatpush1.msra.mxu0 0.0
    %816 = vmatprep.subr.mxu0 0.0
    %817 = vmatpush1.msra.mxu0 0.0
    %818 = vmatprep.subr.mxu0 0.0
    %819 = vmatpush1.msra.mxu0 0.0
    %820 = vmatprep.subr.mxu0 0.0
    %821 = vmatpush1.msra.mxu0 0.0
    %822 = vmatprep.subr.mxu0 0.0
    %823 = vmatpush1.msra.mxu0 0.0
    %824 = vmatprep.subr.mxu0 0.0
    %825 = vmatpush1.msra.mxu0 0.0
    %826 = vmatprep.subr.mxu0 0.0
    %827 = vmatpush1.msra.mxu0 0.0
    %828 = vmatprep.subr.mxu0 0.0
    %829 = vmatpush1.msra.mxu0 0.0
    %830 = vmatprep.subr.mxu0 0.0
    %831 = vmatpush1.msra.mxu0 0.0
    %832 = vmatprep.subr.mxu0 0.0
    %833 = vmatpush1.msra.mxu0 0.0
    %834 = vmatprep.subr.mxu0 0.0
    %835 = vmatpush1.msra.mxu0 0.0
    %836 = vmatprep.subr.mxu0 0.0
    %837 = vmatpush1.msra.mxu0 0.0
    %838 = vmatprep.subr.mxu0 0.0
    %839 = vmatpush1.msra.mxu0 0.0
    %840 = vmatprep.subr.mxu0 0.0
    %841 = vmatpush1.msra.mxu0 0.0
    %842 = vmatprep.mubr.f32.mxu0 0.0
    %843 = vmatmul.mubr.f32.gmra.mrb[0].mxu0 %v607
    %v844 = vpop.f32.mrb[0].mxu0
    %v845 = vadd.f32 0.0, %v844
    %v846 = vpop.f32.mrb[0].mxu0
    %v847 = vadd.f32 0.0, %v846
    %848 = vdwg.mxu0
    %849 = vmatprep.subr.mxu0 0.0
    %850 = vmatpush1.msra.mxu0 %v51
    %851 = vmatprep.subr.mxu0 0.0
    %852 = vmatpush1.msra.mxu0 %v54
    %853 = vmatprep.subr.mxu0 0.0
    %854 = vmatpush1.msra.mxu0 %v57
    %855 = vmatprep.subr.mxu0 0.0
    %856 = vmatpush1.msra.mxu0 %v60
    %857 = vmatprep.subr.mxu0 0.0
    %858 = vmatpush1.msra.mxu0 %v63
    %859 = vmatprep.subr.mxu0 0.0
    %860 = vmatpush1.msra.mxu0 %v66
    %861 = vmatprep.subr.mxu0 0.0
    %862 = vmatpush1.msra.mxu0 %v69
    %863 = vmatprep.subr.mxu0 0.0
    %864 = vmatpush1.msra.mxu0 %v72
    %865 = vmatprep.subr.mxu0 0.0
    %866 = vmatpush1.msra.mxu0 %v75
    %867 = vmatprep.subr.mxu0 0.0
    %868 = vmatpush1.msra.mxu0 %v78
    %869 = vmatprep.subr.mxu0 0.0
    %870 = vmatpush1.msra.mxu0 %v81
    %871 = vmatprep.subr.mxu0 0.0
    %872 = vmatpush1.msra.mxu0 %v84
    %873 = vmatprep.subr.mxu0 0.0
    %874 = vmatpush1.msra.mxu0 %v87
    %875 = vmatprep.subr.mxu0 0.0
    %876 = vmatpush1.msra.mxu0 %v90
    %877 = vmatprep.subr.mxu0 0.0
    %878 = vmatpush1.msra.mxu0 %v93
    %879 = vmatprep.subr.mxu0 0.0
    %880 = vmatpush1.msra.mxu0 %v96
    %881 = vmatprep.subr.mxu0 0.0
    %882 = vmatpush1.msra.mxu0 0.0
    %883 = vmatprep.subr.mxu0 0.0
    %884 = vmatpush1.msra.mxu0 0.0
    %885 = vmatprep.subr.mxu0 0.0
    %886 = vmatpush1.msra.mxu0 0.0
    %887 = vmatprep.subr.mxu0 0.0
    %888 = vmatpush1.msra.mxu0 0.0
    %889 = vmatprep.subr.mxu0 0.0
    %890 = vmatpush1.msra.mxu0 0.0
    %891 = vmatprep.subr.mxu0 0.0
    %892 = vmatpush1.msra.mxu0 0.0
    %893 = vmatprep.subr.mxu0 0.0
    %894 = vmatpush1.msra.mxu0 0.0
    %895 = vmatprep.subr.mxu0 0.0
    %896 = vmatpush1.msra.mxu0 0.0
    %897 = vmatprep.subr.mxu0 0.0
    %898 = vmatpush1.msra.mxu0 0.0
    %899 = vmatprep.subr.mxu0 0.0
    %900 = vmatpush1.msra.mxu0 0.0
    %901 = vmatprep.subr.mxu0 0.0
    %902 = vmatpush1.msra.mxu0 0.0
    %903 = vmatprep.subr.mxu0 0.0
    %904 = vmatpush1.msra.mxu0 0.0
    %905 = vmatprep.subr.mxu0 0.0
    %906 = vmatpush1.msra.mxu0 0.0
    %907 = vmatprep.subr.mxu0 0.0
    %908 = vmatpush1.msra.mxu0 0.0
    %909 = vmatprep.subr.mxu0 0.0
    %910 = vmatpush1.msra.mxu0 0.0
    %911 = vmatprep.subr.mxu0 0.0
    %912 = vmatpush1.msra.mxu0 0.0
    %913 = vmatprep.mubr.f32.mxu0 0.0
    %914 = vmatmul.mubr.f32.gmra.mrb[0].mxu0 %v607
    %v915 = vpop.f32.mrb[0].mxu0
    %v916 = vadd.f32 0.0, %v915
    %v917 = vpop.f32.mrb[0].mxu0
    %918 = vdwg.mxu0
    %v919 = vadd.f32 %v772, %v845
    %v920 = vxor.u32 %v919, 2147483648
    %v921 = vmul.f32 %v920, 1.442695
    %v922 = vpow.pop %v921
    %v923 = vadd.f32 %v922, 1.0
    %v924 = vrcp.pop %v923
    %v925 = vmul.f32 1.0, %v924
    %v926 = vadd.f32 %v773, %v847
    %v927 = vxor.u32 %v926, 2147483648
    %v928 = vmul.f32 %v927, 1.442695
    %v929 = vpow.pop %v928
    %v930 = vadd.f32 %v929, 1.0
    %v931 = vrcp.pop %v930
    %v932 = vmul.f32 1.0, %v931
    %v933 = vadd.f32 %v916, %v102
    %v934 = vmul.f32 %v925, %v933
    %v935 = vadd.f32 %v774, %v934
    %v936 = vtanh.pop %v935
    %v937 = vsub.f32 1.0, %v932
    %v938 = vmul.f32 %v937, %v936
    %v939 = vmul.f32 %v932, %v607
    %v940 = vadd.f32 %v938, %v939
    %941 = vmatprep.subr.mxu0 %v50
    %942 = vmatpush1.msra.mxu0 %v49
    %943 = vmatprep.subr.mxu0 %v53
    %944 = vmatpush1.msra.mxu0 %v52
    %945 = vmatprep.subr.mxu0 %v56
    %946 = vmatpush1.msra.mxu0 %v55
    %947 = vmatprep.subr.mxu0 %v59
    %948 = vmatpush1.msra.mxu0 %v58
    %949 = vmatprep.subr.mxu0 %v62
    %950 = vmatpush1.msra.mxu0 %v61
    %951 = vmatprep.subr.mxu0 %v65
    %952 = vmatpush1.msra.mxu0 %v64
    %953 = vmatprep.subr.mxu0 %v68
    %954 = vmatpush1.msra.mxu0 %v67
    %955 = vmatprep.subr.mxu0 %v71
    %956 = vmatpush1.msra.mxu0 %v70
    %957 = vmatprep.subr.mxu0 %v74
    %958 = vmatpush1.msra.mxu0 %v73
    %959 = vmatprep.subr.mxu0 %v77
    %960 = vmatpush1.msra.mxu0 %v76
    %961 = vmatprep.subr.mxu0 %v80
    %962 = vmatpush1.msra.mxu0 %v79
    %963 = vmatprep.subr.mxu0 %v83
    %964 = vmatpush1.msra.mxu0 %v82
    %965 = vmatprep.subr.mxu0 %v86
    %966 = vmatpush1.msra.mxu0 %v85
    %967 = vmatprep.subr.mxu0 %v89
    %968 = vmatpush1.msra.mxu0 %v88
    %969 = vmatprep.subr.mxu0 %v92
    %970 = vmatpush1.msra.mxu0 %v91
    %971 = vmatprep.subr.mxu0 %v95
    %972 = vmatpush1.msra.mxu0 %v94
    %973 = vmatprep.subr.mxu0 0.0
    %974 = vmatpush1.msra.mxu0 0.0
    %975 = vmatprep.subr.mxu0 0.0
    %976 = vmatpush1.msra.mxu0 0.0
    %977 = vmatprep.subr.mxu0 0.0
    %978 = vmatpush1.msra.mxu0 0.0
    %979 = vmatprep.subr.mxu0 0.0
    %980 = vmatpush1.msra.mxu0 0.0
    %981 = vmatprep.subr.mxu0 0.0
    %982 = vmatpush1.msra.mxu0 0.0
    %983 = vmatprep.subr.mxu0 0.0
    %984 = vmatpush1.msra.mxu0 0.0
    %985 = vmatprep.subr.mxu0 0.0
    %986 = vmatpush1.msra.mxu0 0.0
    %987 = vmatprep.subr.mxu0 0.0
    %988 = vmatpush1.msra.mxu0 0.0
    %989 = vmatprep.subr.mxu0 0.0
    %990 = vmatpush1.msra.mxu0 0.0
    %991 = vmatprep.subr.mxu0 0.0
    %992 = vmatpush1.msra.mxu0 0.0
    %993 = vmatprep.subr.mxu0 0.0
    %994 = vmatpush1.msra.mxu0 0.0
    %995 = vmatprep.subr.mxu0 0.0
    %996 = vmatpush1.msra.mxu0 0.0
    %997 = vmatprep.subr.mxu0 0.0
    %998 = vmatpush1.msra.mxu0 0.0
    %999 = vmatprep.subr.mxu0 0.0
    %1000 = vmatpush1.msra.mxu0 0.0
    %1001 = vmatprep.subr.mxu0 0.0
    %1002 = vmatpush1.msra.mxu0 0.0
    %1003 = vmatprep.subr.mxu0 0.0
    %1004 = vmatpush1.msra.mxu0 0.0
    %1005 = vmatprep.mubr.f32.mxu0 0.0
    %1006 = vmatmul.mubr.f32.gmra.mrb[0].mxu0 %v770
    %v1007 = vpop.f32.mrb[0].mxu0
    %v1008 = vadd.f32 0.0, %v1007
    %v1009 = vpop.f32.mrb[0].mxu0
    %v1010 = vadd.f32 0.0, %v1009
    %1011 = vdwg.mxu0
    %1012 = vmatprep.subr.mxu0 0.0
    %1013 = vmatpush1.msra.mxu0 %v51
    %1014 = vmatprep.subr.mxu0 0.0
    %1015 = vmatpush1.msra.mxu0 %v54
    %1016 = vmatprep.subr.mxu0 0.0
    %1017 = vmatpush1.msra.mxu0 %v57
    %1018 = vmatprep.subr.mxu0 0.0
    %1019 = vmatpush1.msra.mxu0 %v60
    %1020 = vmatprep.subr.mxu0 0.0
    %1021 = vmatpush1.msra.mxu0 %v63
    %1022 = vmatprep.subr.mxu0 0.0
    %1023 = vmatpush1.msra.mxu0 %v66
    %1024 = vmatprep.subr.mxu0 0.0
    %1025 = vmatpush1.msra.mxu0 %v69
    %1026 = vmatprep.subr.mxu0 0.0
    %1027 = vmatpush1.msra.mxu0 %v72
    %1028 = vmatprep.subr.mxu0 0.0
    %1029 = vmatpush1.msra.mxu0 %v75
    %1030 = vmatprep.subr.mxu0 0.0
    %1031 = vmatpush1.msra.mxu0 %v78
    %1032 = vmatprep.subr.mxu0 0.0
    %1033 = vmatpush1.msra.mxu0 %v81
    %1034 = vmatprep.subr.mxu0 0.0
    %1035 = vmatpush1.msra.mxu0 %v84
    %1036 = vmatprep.subr.mxu0 0.0
    %1037 = vmatpush1.msra.mxu0 %v87
    %1038 = vmatprep.subr.mxu0 0.0
    %1039 = vmatpush1.msra.mxu0 %v90
    %1040 = vmatprep.subr.mxu0 0.0
    %1041 = vmatpush1.msra.mxu0 %v93
    %1042 = vmatprep.subr.mxu0 0.0
    %1043 = vmatpush1.msra.mxu0 %v96
    %1044 = vmatprep.subr.mxu0 0.0
    %1045 = vmatpush1.msra.mxu0 0.0
    %1046 = vmatprep.subr.mxu0 0.0
    %1047 = vmatpush1.msra.mxu0 0.0
    %1048 = vmatprep.subr.mxu0 0.0
    %1049 = vmatpush1.msra.mxu0 0.0
    %1050 = vmatprep.subr.mxu0 0.0
    %1051 = vmatpush1.msra.mxu0 0.0
    %1052 = vmatprep.subr.mxu0 0.0
    %1053 = vmatpush1.msra.mxu0 0.0
    %1054 = vmatprep.subr.mxu0 0.0
    %1055 = vmatpush1.msra.mxu0 0.0
    %1056 = vmatprep.subr.mxu0 0.0
    %1057 = vmatpush1.msra.mxu0 0.0
    %1058 = vmatprep.subr.mxu0 0.0
    %1059 = vmatpush1.msra.mxu0 0.0
    %1060 = vmatprep.subr.mxu0 0.0
    %1061 = vmatpush1.msra.mxu0 0.0
    %1062 = vmatprep.subr.mxu0 0.0
    %1063 = vmatpush1.msra.mxu0 0.0
    %1064 = vmatprep.subr.mxu0 0.0
    %1065 = vmatpush1.msra.mxu0 0.0
    %1066 = vmatprep.subr.mxu0 0.0
    %1067 = vmatpush1.msra.mxu0 0.0
    %1068 = vmatprep.subr.mxu0 0.0
    %1069 = vmatpush1.msra.mxu0 0.0
    %1070 = vmatprep.subr.mxu0 0.0
    %1071 = vmatpush1.msra.mxu0 0.0
    %1072 = vmatprep.subr.mxu0 0.0
    %1073 = vmatpush1.msra.mxu0 0.0
    %1074 = vmatprep.subr.mxu0 0.0
    %1075 = vmatpush1.msra.mxu0 0.0
    %1076 = vmatprep.mubr.f32.mxu0 0.0
    %1077 = vmatmul.mubr.f32.gmra.mrb[0].mxu0 %v770
    %v1078 = vpop.f32.mrb[0].mxu0
    %v1079 = vadd.f32 0.0, %v1078
    %v1080 = vpop.f32.mrb[0].mxu0
    %1081 = vdwg.mxu0
    %v1082 = vadd.f32 %v775, %v1008
    %v1083 = vxor.u32 %v1082, 2147483648
    %v1084 = vmul.f32 %v1083, 1.442695
    %v1085 = vpow.pop %v1084
    %v1086 = vadd.f32 %v1085, 1.0
    %v1087 = vrcp.pop %v1086
    %v1088 = vmul.f32 1.0, %v1087
    %v1089 = vadd.f32 %v776, %v1010
    %v1090 = vxor.u32 %v1089, 2147483648
    %v1091 = vmul.f32 %v1090, 1.442695
    %v1092 = vpow.pop %v1091
    %v1093 = vadd.f32 %v1092, 1.0
    %v1094 = vrcp.pop %v1093
    %v1095 = vmul.f32 1.0, %v1094
    %v1096 = vadd.f32 %v1079, %v102
    %v1097 = vmul.f32 %v1088, %v1096
    %v1098 = vadd.f32 %v777, %v1097
    %v1099 = vtanh.pop %v1098
    %v1100 = vsub.f32 1.0, %v1095
    %v1101 = vmul.f32 %v1100, %v1099
    %v1102 = vmul.f32 %v1095, %v770
    %v1103 = vadd.f32 %v1101, %v1102
    %s1104 = scalar_lea.vmem [#allocation2], 144
    %v1105 = vld [vmem:[%s1104] sm:$0xff]
    %v1106 = vld [vmem:[%s1104 + $0x8] sm:$0xff]
    %v1107 = vld [vmem:[%s1104 + $0x10] sm:$0xff]
    %v1108 = vld [vmem:[%s1104 + $0x18] sm:$0xff]
    %v1109 = vld [vmem:[%s1104 + $0x20] sm:$0xff]
    %v1110 = vld [vmem:[%s1104 + $0x28] sm:$0xff]
    %1111 = vmatprep.subr.mxu0 %v50
    %1112 = vmatpush1.msra.mxu0 %v49
    %1113 = vmatprep.subr.mxu0 %v53
    %1114 = vmatpush1.msra.mxu0 %v52
    %1115 = vmatprep.subr.mxu0 %v56
    %1116 = vmatpush1.msra.mxu0 %v55
    %1117 = vmatprep.subr.mxu0 %v59
    %1118 = vmatpush1.msra.mxu0 %v58
    %1119 = vmatprep.subr.mxu0 %v62
    %1120 = vmatpush1.msra.mxu0 %v61
    %1121 = vmatprep.subr.mxu0 %v65
    %1122 = vmatpush1.msra.mxu0 %v64
    %1123 = vmatprep.subr.mxu0 %v68
    %1124 = vmatpush1.msra.mxu0 %v67
    %1125 = vmatprep.subr.mxu0 %v71
    %1126 = vmatpush1.msra.mxu0 %v70
    %1127 = vmatprep.subr.mxu0 %v74
    %1128 = vmatpush1.msra.mxu0 %v73
    %1129 = vmatprep.subr.mxu0 %v77
    %1130 = vmatpush1.msra.mxu0 %v76
    %1131 = vmatprep.subr.mxu0 %v80
    %1132 = vmatpush1.msra.mxu0 %v79
    %1133 = vmatprep.subr.mxu0 %v83
    %1134 = vmatpush1.msra.mxu0 %v82
    %1135 = vmatprep.subr.mxu0 %v86
    %1136 = vmatpush1.msra.mxu0 %v85
    %1137 = vmatprep.subr.mxu0 %v89
    %1138 = vmatpush1.msra.mxu0 %v88
    %1139 = vmatprep.subr.mxu0 %v92
    %1140 = vmatpush1.msra.mxu0 %v91
    %1141 = vmatprep.subr.mxu0 %v95
    %1142 = vmatpush1.msra.mxu0 %v94
    %1143 = vmatprep.subr.mxu0 0.0
    %1144 = vmatpush1.msra.mxu0 0.0
    %1145 = vmatprep.subr.mxu0 0.0
    %1146 = vmatpush1.msra.mxu0 0.0
    %1147 = vmatprep.subr.mxu0 0.0
    %1148 = vmatpush1.msra.mxu0 0.0
    %1149 = vmatprep.subr.mxu0 0.0
    %1150 = vmatpush1.msra.mxu0 0.0
    %1151 = vmatprep.subr.mxu0 0.0
    %1152 = vmatpush1.msra.mxu0 0.0
    %1153 = vmatprep.subr.mxu0 0.0
    %1154 = vmatpush1.msra.mxu0 0.0
    %1155 = vmatprep.subr.mxu0 0.0
    %1156 = vmatpush1.msra.mxu0 0.0
    %1157 = vmatprep.subr.mxu0 0.0
    %1158 = vmatpush1.msra.mxu0 0.0
    %1159 = vmatprep.subr.mxu0 0.0
    %1160 = vmatpush1.msra.mxu0 0.0
    %1161 = vmatprep.subr.mxu0 0.0
    %1162 = vmatpush1.msra.mxu0 0.0
    %1163 = vmatprep.subr.mxu0 0.0
    %1164 = vmatpush1.msra.mxu0 0.0
    %1165 = vmatprep.subr.mxu0 0.0
    %1166 = vmatpush1.msra.mxu0 0.0
    %1167 = vmatprep.subr.mxu0 0.0
    %1168 = vmatpush1.msra.mxu0 0.0
    %1169 = vmatprep.subr.mxu0 0.0
    %1170 = vmatpush1.msra.mxu0 0.0
    %1171 = vmatprep.subr.mxu0 0.0
    %1172 = vmatpush1.msra.mxu0 0.0
    %1173 = vmatprep.subr.mxu0 0.0
    %1174 = vmatpush1.msra.mxu0 0.0
    %1175 = vmatprep.mubr.f32.mxu0 0.0
    %1176 = vmatmul.mubr.f32.gmra.mrb[0].mxu0 %v940
    %v1177 = vpop.f32.mrb[0].mxu0
    %v1178 = vadd.f32 0.0, %v1177
    %v1179 = vpop.f32.mrb[0].mxu0
    %v1180 = vadd.f32 0.0, %v1179
    %1181 = vdwg.mxu0
    %1182 = vmatprep.subr.mxu0 0.0
    %1183 = vmatpush1.msra.mxu0 %v51
    %1184 = vmatprep.subr.mxu0 0.0
    %1185 = vmatpush1.msra.mxu0 %v54
    %1186 = vmatprep.subr.mxu0 0.0
    %1187 = vmatpush1.msra.mxu0 %v57
    %1188 = vmatprep.subr.mxu0 0.0
    %1189 = vmatpush1.msra.mxu0 %v60
    %1190 = vmatprep.subr.mxu0 0.0
    %1191 = vmatpush1.msra.mxu0 %v63
    %1192 = vmatprep.subr.mxu0 0.0
    %1193 = vmatpush1.msra.mxu0 %v66
    %1194 = vmatprep.subr.mxu0 0.0
    %1195 = vmatpush1.msra.mxu0 %v69
    %1196 = vmatprep.subr.mxu0 0.0
    %1197 = vmatpush1.msra.mxu0 %v72
    %1198 = vmatprep.subr.mxu0 0.0
    %1199 = vmatpush1.msra.mxu0 %v75
    %1200 = vmatprep.subr.mxu0 0.0
    %1201 = vmatpush1.msra.mxu0 %v78
    %1202 = vmatprep.subr.mxu0 0.0
    %1203 = vmatpush1.msra.mxu0 %v81
    %1204 = vmatprep.subr.mxu0 0.0
    %1205 = vmatpush1.msra.mxu0 %v84
    %1206 = vmatprep.subr.mxu0 0.0
    %1207 = vmatpush1.msra.mxu0 %v87
    %1208 = vmatprep.subr.mxu0 0.0
    %1209 = vmatpush1.msra.mxu0 %v90
    %1210 = vmatprep.subr.mxu0 0.0
    %1211 = vmatpush1.msra.mxu0 %v93
    %1212 = vmatprep.subr.mxu0 0.0
    %1213 = vmatpush1.msra.mxu0 %v96
    %1214 = vmatprep.subr.mxu0 0.0
    %1215 = vmatpush1.msra.mxu0 0.0
    %1216 = vmatprep.subr.mxu0 0.0
    %1217 = vmatpush1.msra.mxu0 0.0
    %1218 = vmatprep.subr.mxu0 0.0
    %1219 = vmatpush1.msra.mxu0 0.0
    %1220 = vmatprep.subr.mxu0 0.0
    %1221 = vmatpush1.msra.mxu0 0.0
    %1222 = vmatprep.subr.mxu0 0.0
    %1223 = vmatpush1.msra.mxu0 0.0
    %1224 = vmatprep.subr.mxu0 0.0
    %1225 = vmatpush1.msra.mxu0 0.0
    %1226 = vmatprep.subr.mxu0 0.0
    %1227 = vmatpush1.msra.mxu0 0.0
    %1228 = vmatprep.subr.mxu0 0.0
    %1229 = vmatpush1.msra.mxu0 0.0
    %1230 = vmatprep.subr.mxu0 0.0
    %1231 = vmatpush1.msra.mxu0 0.0
    %1232 = vmatprep.subr.mxu0 0.0
    %1233 = vmatpush1.msra.mxu0 0.0
    %1234 = vmatprep.subr.mxu0 0.0
    %1235 = vmatpush1.msra.mxu0 0.0
    %1236 = vmatprep.subr.mxu0 0.0
    %1237 = vmatpush1.msra.mxu0 0.0
    %1238 = vmatprep.subr.mxu0 0.0
    %1239 = vmatpush1.msra.mxu0 0.0
    %1240 = vmatprep.subr.mxu0 0.0
    %1241 = vmatpush1.msra.mxu0 0.0
    %1242 = vmatprep.subr.mxu0 0.0
    %1243 = vmatpush1.msra.mxu0 0.0
    %1244 = vmatprep.subr.mxu0 0.0
    %1245 = vmatpush1.msra.mxu0 0.0
    %1246 = vmatprep.mubr.f32.mxu0 0.0
    %1247 = vmatmul.mubr.f32.gmra.mrb[0].mxu0 %v940
    %v1248 = vpop.f32.mrb[0].mxu0
    %v1249 = vadd.f32 0.0, %v1248
    %v1250 = vpop.f32.mrb[0].mxu0
    %1251 = vdwg.mxu0
    %v1252 = vadd.f32 %v1105, %v1178
    %v1253 = vxor.u32 %v1252, 2147483648
    %v1254 = vmul.f32 %v1253, 1.442695
    %v1255 = vpow.pop %v1254
    %v1256 = vadd.f32 %v1255, 1.0
    %v1257 = vrcp.pop %v1256
    %v1258 = vmul.f32 1.0, %v1257
    %v1259 = vadd.f32 %v1106, %v1180
    %v1260 = vxor.u32 %v1259, 2147483648
    %v1261 = vmul.f32 %v1260, 1.442695
    %v1262 = vpow.pop %v1261
    %v1263 = vadd.f32 %v1262, 1.0
    %v1264 = vrcp.pop %v1263
    %v1265 = vmul.f32 1.0, %v1264
    %v1266 = vadd.f32 %v1249, %v102
    %v1267 = vmul.f32 %v1258, %v1266
    %v1268 = vadd.f32 %v1107, %v1267
    %v1269 = vtanh.pop %v1268
    %v1270 = vsub.f32 1.0, %v1265
    %v1271 = vmul.f32 %v1270, %v1269
    %v1272 = vmul.f32 %v1265, %v940
    %v1273 = vadd.f32 %v1271, %v1272
    %1274 = vmatprep.subr.mxu0 %v50
    %1275 = vmatpush1.msra.mxu0 %v49
    %1276 = vmatprep.subr.mxu0 %v53
    %1277 = vmatpush1.msra.mxu0 %v52
    %1278 = vmatprep.subr.mxu0 %v56
    %1279 = vmatpush1.msra.mxu0 %v55
    %1280 = vmatprep.subr.mxu0 %v59
    %1281 = vmatpush1.msra.mxu0 %v58
    %1282 = vmatprep.subr.mxu0 %v62
    %1283 = vmatpush1.msra.mxu0 %v61
    %1284 = vmatprep.subr.mxu0 %v65
    %1285 = vmatpush1.msra.mxu0 %v64
    %1286 = vmatprep.subr.mxu0 %v68
    %1287 = vmatpush1.msra.mxu0 %v67
    %1288 = vmatprep.subr.mxu0 %v71
    %1289 = vmatpush1.msra.mxu0 %v70
    %1290 = vmatprep.subr.mxu0 %v74
    %1291 = vmatpush1.msra.mxu0 %v73
    %1292 = vmatprep.subr.mxu0 %v77
    %1293 = vmatpush1.msra.mxu0 %v76
    %1294 = vmatprep.subr.mxu0 %v80
    %1295 = vmatpush1.msra.mxu0 %v79
    %1296 = vmatprep.subr.mxu0 %v83
    %1297 = vmatpush1.msra.mxu0 %v82
    %1298 = vmatprep.subr.mxu0 %v86
    %1299 = vmatpush1.msra.mxu0 %v85
    %1300 = vmatprep.subr.mxu0 %v89
    %1301 = vmatpush1.msra.mxu0 %v88
    %1302 = vmatprep.subr.mxu0 %v92
    %1303 = vmatpush1.msra.mxu0 %v91
    %1304 = vmatprep.subr.mxu0 %v95
    %1305 = vmatpush1.msra.mxu0 %v94
    %1306 = vmatprep.subr.mxu0 0.0
    %1307 = vmatpush1.msra.mxu0 0.0
    %1308 = vmatprep.subr.mxu0 0.0
    %1309 = vmatpush1.msra.mxu0 0.0
    %1310 = vmatprep.subr.mxu0 0.0
    %1311 = vmatpush1.msra.mxu0 0.0
    %1312 = vmatprep.subr.mxu0 0.0
    %1313 = vmatpush1.msra.mxu0 0.0
    %1314 = vmatprep.subr.mxu0 0.0
    %1315 = vmatpush1.msra.mxu0 0.0
    %1316 = vmatprep.subr.mxu0 0.0
    %1317 = vmatpush1.msra.mxu0 0.0
    %1318 = vmatprep.subr.mxu0 0.0
    %1319 = vmatpush1.msra.mxu0 0.0
    %1320 = vmatprep.subr.mxu0 0.0
    %1321 = vmatpush1.msra.mxu0 0.0
    %1322 = vmatprep.subr.mxu0 0.0
    %1323 = vmatpush1.msra.mxu0 0.0
    %1324 = vmatprep.subr.mxu0 0.0
    %1325 = vmatpush1.msra.mxu0 0.0
    %1326 = vmatprep.subr.mxu0 0.0
    %1327 = vmatpush1.msra.mxu0 0.0
    %1328 = vmatprep.subr.mxu0 0.0
    %1329 = vmatpush1.msra.mxu0 0.0
    %1330 = vmatprep.subr.mxu0 0.0
    %1331 = vmatpush1.msra.mxu0 0.0
    %1332 = vmatprep.subr.mxu0 0.0
    %1333 = vmatpush1.msra.mxu0 0.0
    %1334 = vmatprep.subr.mxu0 0.0
    %1335 = vmatpush1.msra.mxu0 0.0
    %1336 = vmatprep.subr.mxu0 0.0
    %1337 = vmatpush1.msra.mxu0 0.0
    %1338 = vmatprep.mubr.f32.mxu0 0.0
    %1339 = vmatmul.mubr.f32.gmra.mrb[0].mxu0 %v1103
    %v1340 = vpop.f32.mrb[0].mxu0
    %v1341 = vadd.f32 0.0, %v1340
    %v1342 = vpop.f32.mrb[0].mxu0
    %v1343 = vadd.f32 0.0, %v1342
    %1344 = vdwg.mxu0
    %1345 = vmatprep.subr.mxu0 0.0
    %1346 = vmatpush1.msra.mxu0 %v51
    %1347 = vmatprep.subr.mxu0 0.0
    %1348 = vmatpush1.msra.mxu0 %v54
    %1349 = vmatprep.subr.mxu0 0.0
    %1350 = vmatpush1.msra.mxu0 %v57
    %1351 = vmatprep.subr.mxu0 0.0
    %1352 = vmatpush1.msra.mxu0 %v60
    %1353 = vmatprep.subr.mxu0 0.0
    %1354 = vmatpush1.msra.mxu0 %v63
    %1355 = vmatprep.subr.mxu0 0.0
    %1356 = vmatpush1.msra.mxu0 %v66
    %1357 = vmatprep.subr.mxu0 0.0
    %1358 = vmatpush1.msra.mxu0 %v69
    %1359 = vmatprep.subr.mxu0 0.0
    %1360 = vmatpush1.msra.mxu0 %v72
    %1361 = vmatprep.subr.mxu0 0.0
    %1362 = vmatpush1.msra.mxu0 %v75
    %1363 = vmatprep.subr.mxu0 0.0
    %1364 = vmatpush1.msra.mxu0 %v78
    %1365 = vmatprep.subr.mxu0 0.0
    %1366 = vmatpush1.msra.mxu0 %v81
    %1367 = vmatprep.subr.mxu0 0.0
    %1368 = vmatpush1.msra.mxu0 %v84
    %1369 = vmatprep.subr.mxu0 0.0
    %1370 = vmatpush1.msra.mxu0 %v87
    %1371 = vmatprep.subr.mxu0 0.0
    %1372 = vmatpush1.msra.mxu0 %v90
    %1373 = vmatprep.subr.mxu0 0.0
    %1374 = vmatpush1.msra.mxu0 %v93
    %1375 = vmatprep.subr.mxu0 0.0
    %1376 = vmatpush1.msra.mxu0 %v96
    %1377 = vmatprep.subr.mxu0 0.0
    %1378 = vmatpush1.msra.mxu0 0.0
    %1379 = vmatprep.subr.mxu0 0.0
    %1380 = vmatpush1.msra.mxu0 0.0
    %1381 = vmatprep.subr.mxu0 0.0
    %1382 = vmatpush1.msra.mxu0 0.0
    %1383 = vmatprep.subr.mxu0 0.0
    %1384 = vmatpush1.msra.mxu0 0.0
    %1385 = vmatprep.subr.mxu0 0.0
    %1386 = vmatpush1.msra.mxu0 0.0
    %1387 = vmatprep.subr.mxu0 0.0
    %1388 = vmatpush1.msra.mxu0 0.0
    %1389 = vmatprep.subr.mxu0 0.0
    %1390 = vmatpush1.msra.mxu0 0.0
    %1391 = vmatprep.subr.mxu0 0.0
    %1392 = vmatpush1.msra.mxu0 0.0
    %1393 = vmatprep.subr.mxu0 0.0
    %1394 = vmatpush1.msra.mxu0 0.0
    %1395 = vmatprep.subr.mxu0 0.0
    %1396 = vmatpush1.msra.mxu0 0.0
    %1397 = vmatprep.subr.mxu0 0.0
    %1398 = vmatpush1.msra.mxu0 0.0
    %1399 = vmatprep.subr.mxu0 0.0
    %1400 = vmatpush1.msra.mxu0 0.0
    %1401 = vmatprep.subr.mxu0 0.0
    %1402 = vmatpush1.msra.mxu0 0.0
    %1403 = vmatprep.subr.mxu0 0.0
    %1404 = vmatpush1.msra.mxu0 0.0
    %1405 = vmatprep.subr.mxu0 0.0
    %1406 = vmatpush1.msra.mxu0 0.0
    %1407 = vmatprep.subr.mxu0 0.0
    %1408 = vmatpush1.msra.mxu0 0.0
    %1409 = vmatprep.mubr.f32.mxu0 0.0
    %1410 = vmatmul.mubr.f32.gmra.mrb[0].mxu0 %v1103
    %v1411 = vpop.f32.mrb[0].mxu0
    %v1412 = vadd.f32 0.0, %v1411
    %v1413 = vpop.f32.mrb[0].mxu0
    %1414 = vdwg.mxu0
    %v1415 = vadd.f32 %v1108, %v1341
    %v1416 = vxor.u32 %v1415, 2147483648
    %v1417 = vmul.f32 %v1416, 1.442695
    %v1418 = vpow.pop %v1417
    %v1419 = vadd.f32 %v1418, 1.0
    %v1420 = vrcp.pop %v1419
    %v1421 = vmul.f32 1.0, %v1420
    %v1422 = vadd.f32 %v1109, %v1343
    %v1423 = vxor.u32 %v1422, 2147483648
    %v1424 = vmul.f32 %v1423, 1.442695
    %v1425 = vpow.pop %v1424
    %v1426 = vadd.f32 %v1425, 1.0
    %v1427 = vrcp.pop %v1426
    %v1428 = vmul.f32 1.0, %v1427
    %v1429 = vadd.f32 %v1412, %v102
    %v1430 = vmul.f32 %v1421, %v1429
    %v1431 = vadd.f32 %v1110, %v1430
    %v1432 = vtanh.pop %v1431
    %v1433 = vsub.f32 1.0, %v1428
    %v1434 = vmul.f32 %v1433, %v1432
    %v1435 = vmul.f32 %v1428, %v1103
    %v1436 = vadd.f32 %v1434, %v1435
    %s1437 = scalar_lea.vmem [#allocation2], 192
    %v1438 = vld [vmem:[%s1437] sm:$0xff]
    %v1439 = vld [vmem:[%s1437 + $0x8] sm:$0xff]
    %v1440 = vld [vmem:[%s1437 + $0x10] sm:$0xff]
    %v1441 = vld [vmem:[%s1437 + $0x18] sm:$0xff]
    %v1442 = vld [vmem:[%s1437 + $0x20] sm:$0xff]
    %v1443 = vld [vmem:[%s1437 + $0x28] sm:$0xff]
    %1444 = vmatprep.subr.mxu0 %v50
    %1445 = vmatpush1.msra.mxu0 %v49
    %1446 = vmatprep.subr.mxu0 %v53
    %1447 = vmatpush1.msra.mxu0 %v52
    %1448 = vmatprep.subr.mxu0 %v56
    %1449 = vmatpush1.msra.mxu0 %v55
    %1450 = vmatprep.subr.mxu0 %v59
    %1451 = vmatpush1.msra.mxu0 %v58
    %1452 = vmatprep.subr.mxu0 %v62
    %1453 = vmatpush1.msra.mxu0 %v61
    %1454 = vmatprep.subr.mxu0 %v65
    %1455 = vmatpush1.msra.mxu0 %v64
    %1456 = vmatprep.subr.mxu0 %v68
    %1457 = vmatpush1.msra.mxu0 %v67
    %1458 = vmatprep.subr.mxu0 %v71
    %1459 = vmatpush1.msra.mxu0 %v70
    %1460 = vmatprep.subr.mxu0 %v74
    %1461 = vmatpush1.msra.mxu0 %v73
    %1462 = vmatprep.subr.mxu0 %v77
    %1463 = vmatpush1.msra.mxu0 %v76
    %1464 = vmatprep.subr.mxu0 %v80
    %1465 = vmatpush1.msra.mxu0 %v79
    %1466 = vmatprep.subr.mxu0 %v83
    %1467 = vmatpush1.msra.mxu0 %v82
    %1468 = vmatprep.subr.mxu0 %v86
    %1469 = vmatpush1.msra.mxu0 %v85
    %1470 = vmatprep.subr.mxu0 %v89
    %1471 = vmatpush1.msra.mxu0 %v88
    %1472 = vmatprep.subr.mxu0 %v92
    %1473 = vmatpush1.msra.mxu0 %v91
    %1474 = vmatprep.subr.mxu0 %v95
    %1475 = vmatpush1.msra.mxu0 %v94
    %1476 = vmatprep.subr.mxu0 0.0
    %1477 = vmatpush1.msra.mxu0 0.0
    %1478 = vmatprep.subr.mxu0 0.0
    %1479 = vmatpush1.msra.mxu0 0.0
    %1480 = vmatprep.subr.mxu0 0.0
    %1481 = vmatpush1.msra.mxu0 0.0
    %1482 = vmatprep.subr.mxu0 0.0
    %1483 = vmatpush1.msra.mxu0 0.0
    %1484 = vmatprep.subr.mxu0 0.0
    %1485 = vmatpush1.msra.mxu0 0.0
    %1486 = vmatprep.subr.mxu0 0.0
    %1487 = vmatpush1.msra.mxu0 0.0
    %1488 = vmatprep.subr.mxu0 0.0
    %1489 = vmatpush1.msra.mxu0 0.0
    %1490 = vmatprep.subr.mxu0 0.0
    %1491 = vmatpush1.msra.mxu0 0.0
    %1492 = vmatprep.subr.mxu0 0.0
    %1493 = vmatpush1.msra.mxu0 0.0
    %1494 = vmatprep.subr.mxu0 0.0
    %1495 = vmatpush1.msra.mxu0 0.0
    %1496 = vmatprep.subr.mxu0 0.0
    %1497 = vmatpush1.msra.mxu0 0.0
    %1498 = vmatprep.subr.mxu0 0.0
    %1499 = vmatpush1.msra.mxu0 0.0
    %1500 = vmatprep.subr.mxu0 0.0
    %1501 = vmatpush1.msra.mxu0 0.0
    %1502 = vmatprep.subr.mxu0 0.0
    %1503 = vmatpush1.msra.mxu0 0.0
    %1504 = vmatprep.subr.mxu0 0.0
    %1505 = vmatpush1.msra.mxu0 0.0
    %1506 = vmatprep.subr.mxu0 0.0
    %1507 = vmatpush1.msra.mxu0 0.0
    %1508 = vmatprep.mubr.f32.mxu0 0.0
    %1509 = vmatmul.mubr.f32.gmra.mrb[0].mxu0 %v1273
    %v1510 = vpop.f32.mrb[0].mxu0
    %v1511 = vadd.f32 0.0, %v1510
    %v1512 = vpop.f32.mrb[0].mxu0
    %v1513 = vadd.f32 0.0, %v1512
    %1514 = vdwg.mxu0
    %1515 = vmatprep.subr.mxu0 0.0
    %1516 = vmatpush1.msra.mxu0 %v51
    %1517 = vmatprep.subr.mxu0 0.0
    %1518 = vmatpush1.msra.mxu0 %v54
    %1519 = vmatprep.subr.mxu0 0.0
    %1520 = vmatpush1.msra.mxu0 %v57
    %1521 = vmatprep.subr.mxu0 0.0
    %1522 = vmatpush1.msra.mxu0 %v60
    %1523 = vmatprep.subr.mxu0 0.0
    %1524 = vmatpush1.msra.mxu0 %v63
    %1525 = vmatprep.subr.mxu0 0.0
    %1526 = vmatpush1.msra.mxu0 %v66
    %1527 = vmatprep.subr.mxu0 0.0
    %1528 = vmatpush1.msra.mxu0 %v69
    %1529 = vmatprep.subr.mxu0 0.0
    %1530 = vmatpush1.msra.mxu0 %v72
    %1531 = vmatprep.subr.mxu0 0.0
    %1532 = vmatpush1.msra.mxu0 %v75
    %1533 = vmatprep.subr.mxu0 0.0
    %1534 = vmatpush1.msra.mxu0 %v78
    %1535 = vmatprep.subr.mxu0 0.0
    %1536 = vmatpush1.msra.mxu0 %v81
    %1537 = vmatprep.subr.mxu0 0.0
    %1538 = vmatpush1.msra.mxu0 %v84
    %1539 = vmatprep.subr.mxu0 0.0
    %1540 = vmatpush1.msra.mxu0 %v87
    %1541 = vmatprep.subr.mxu0 0.0
    %1542 = vmatpush1.msra.mxu0 %v90
    %1543 = vmatprep.subr.mxu0 0.0
    %1544 = vmatpush1.msra.mxu0 %v93
    %1545 = vmatprep.subr.mxu0 0.0
    %1546 = vmatpush1.msra.mxu0 %v96
    %1547 = vmatprep.subr.mxu0 0.0
    %1548 = vmatpush1.msra.mxu0 0.0
    %1549 = vmatprep.subr.mxu0 0.0
    %1550 = vmatpush1.msra.mxu0 0.0
    %1551 = vmatprep.subr.mxu0 0.0
    %1552 = vmatpush1.msra.mxu0 0.0
    %1553 = vmatprep.subr.mxu0 0.0
    %1554 = vmatpush1.msra.mxu0 0.0
    %1555 = vmatprep.subr.mxu0 0.0
    %1556 = vmatpush1.msra.mxu0 0.0
    %1557 = vmatprep.subr.mxu0 0.0
    %1558 = vmatpush1.msra.mxu0 0.0
    %1559 = vmatprep.subr.mxu0 0.0
    %1560 = vmatpush1.msra.mxu0 0.0
    %1561 = vmatprep.subr.mxu0 0.0
    %1562 = vmatpush1.msra.mxu0 0.0
    %1563 = vmatprep.subr.mxu0 0.0
    %1564 = vmatpush1.msra.mxu0 0.0
    %1565 = vmatprep.subr.mxu0 0.0
    %1566 = vmatpush1.msra.mxu0 0.0
    %1567 = vmatprep.subr.mxu0 0.0
    %1568 = vmatpush1.msra.mxu0 0.0
    %1569 = vmatprep.subr.mxu0 0.0
    %1570 = vmatpush1.msra.mxu0 0.0
    %1571 = vmatprep.subr.mxu0 0.0
    %1572 = vmatpush1.msra.mxu0 0.0
    %1573 = vmatprep.subr.mxu0 0.0
    %1574 = vmatpush1.msra.mxu0 0.0
    %1575 = vmatprep.subr.mxu0 0.0
    %1576 = vmatpush1.msra.mxu0 0.0
    %1577 = vmatprep.subr.mxu0 0.0
    %1578 = vmatpush1.msra.mxu0 0.0
    %1579 = vmatprep.mubr.f32.mxu0 0.0
    %1580 = vmatmul.mubr.f32.gmra.mrb[0].mxu0 %v1273
    %v1581 = vpop.f32.mrb[0].mxu0
    %v1582 = vadd.f32 0.0, %v1581
    %v1583 = vpop.f32.mrb[0].mxu0
    %1584 = vdwg.mxu0
    %v1585 = vadd.f32 %v1438, %v1511
    %v1586 = vxor.u32 %v1585, 2147483648
    %v1587 = vmul.f32 %v1586, 1.442695
    %v1588 = vpow.pop %v1587
    %v1589 = vadd.f32 %v1588, 1.0
    %v1590 = vrcp.pop %v1589
    %v1591 = vmul.f32 1.0, %v1590
    %v1592 = vadd.f32 %v1439, %v1513
    %v1593 = vxor.u32 %v1592, 2147483648
    %v1594 = vmul.f32 %v1593, 1.442695
    %v1595 = vpow.pop %v1594
    %v1596 = vadd.f32 %v1595, 1.0
    %v1597 = vrcp.pop %v1596
    %v1598 = vmul.f32 1.0, %v1597
    %v1599 = vadd.f32 %v1582, %v102
    %v1600 = vmul.f32 %v1591, %v1599
    %v1601 = vadd.f32 %v1440, %v1600
    %v1602 = vtanh.pop %v1601
    %v1603 = vsub.f32 1.0, %v1598
    %v1604 = vmul.f32 %v1603, %v1602
    %v1605 = vmul.f32 %v1598, %v1273
    %v1606 = vadd.f32 %v1604, %v1605
    %1607 = vmatprep.subr.mxu0 %v50
    %1608 = vmatpush1.msra.mxu0 %v49
    %1609 = vmatprep.subr.mxu0 %v53
    %1610 = vmatpush1.msra.mxu0 %v52
    %1611 = vmatprep.subr.mxu0 %v56
    %1612 = vmatpush1.msra.mxu0 %v55
    %1613 = vmatprep.subr.mxu0 %v59
    %1614 = vmatpush1.msra.mxu0 %v58
    %1615 = vmatprep.subr.mxu0 %v62
    %1616 = vmatpush1.msra.mxu0 %v61
    %1617 = vmatprep.subr.mxu0 %v65
    %1618 = vmatpush1.msra.mxu0 %v64
    %1619 = vmatprep.subr.mxu0 %v68
    %1620 = vmatpush1.msra.mxu0 %v67
    %1621 = vmatprep.subr.mxu0 %v71
    %1622 = vmatpush1.msra.mxu0 %v70
    %1623 = vmatprep.subr.mxu0 %v74
    %1624 = vmatpush1.msra.mxu0 %v73
    %1625 = vmatprep.subr.mxu0 %v77
    %1626 = vmatpush1.msra.mxu0 %v76
    %1627 = vmatprep.subr.mxu0 %v80
    %1628 = vmatpush1.msra.mxu0 %v79
    %1629 = vmatprep.subr.mxu0 %v83
    %1630 = vmatpush1.msra.mxu0 %v82
    %1631 = vmatprep.subr.mxu0 %v86
    %1632 = vmatpush1.msra.mxu0 %v85
    %1633 = vmatprep.subr.mxu0 %v89
    %1634 = vmatpush1.msra.mxu0 %v88
    %1635 = vmatprep.subr.mxu0 %v92
    %1636 = vmatpush1.msra.mxu0 %v91
    %1637 = vmatprep.subr.mxu0 %v95
    %1638 = vmatpush1.msra.mxu0 %v94
    %1639 = vmatprep.subr.mxu0 0.0
    %1640 = vmatpush1.msra.mxu0 0.0
    %1641 = vmatprep.subr.mxu0 0.0
    %1642 = vmatpush1.msra.mxu0 0.0
    %1643 = vmatprep.subr.mxu0 0.0
    %1644 = vmatpush1.msra.mxu0 0.0
    %1645 = vmatprep.subr.mxu0 0.0
    %1646 = vmatpush1.msra.mxu0 0.0
    %1647 = vmatprep.subr.mxu0 0.0
    %1648 = vmatpush1.msra.mxu0 0.0
    %1649 = vmatprep.subr.mxu0 0.0
    %1650 = vmatpush1.msra.mxu0 0.0
    %1651 = vmatprep.subr.mxu0 0.0
    %1652 = vmatpush1.msra.mxu0 0.0
    %1653 = vmatprep.subr.mxu0 0.0
    %1654 = vmatpush1.msra.mxu0 0.0
    %1655 = vmatprep.subr.mxu0 0.0
    %1656 = vmatpush1.msra.mxu0 0.0
    %1657 = vmatprep.subr.mxu0 0.0
    %1658 = vmatpush1.msra.mxu0 0.0
    %1659 = vmatprep.subr.mxu0 0.0
    %1660 = vmatpush1.msra.mxu0 0.0
    %1661 = vmatprep.subr.mxu0 0.0
    %1662 = vmatpush1.msra.mxu0 0.0
    %1663 = vmatprep.subr.mxu0 0.0
    %1664 = vmatpush1.msra.mxu0 0.0
    %1665 = vmatprep.subr.mxu0 0.0
    %1666 = vmatpush1.msra.mxu0 0.0
    %1667 = vmatprep.subr.mxu0 0.0
    %1668 = vmatpush1.msra.mxu0 0.0
    %1669 = vmatprep.subr.mxu0 0.0
    %1670 = vmatpush1.msra.mxu0 0.0
    %1671 = vmatprep.mubr.f32.mxu0 0.0
    %1672 = vmatmul.mubr.f32.gmra.mrb[0].mxu0 %v1436
    %v1673 = vpop.f32.mrb[0].mxu0
    %v1674 = vadd.f32 0.0, %v1673
    %v1675 = vpop.f32.mrb[0].mxu0
    %v1676 = vadd.f32 0.0, %v1675
    %1677 = vdwg.mxu0
    %1678 = vmatprep.subr.mxu0 0.0
    %1679 = vmatpush1.msra.mxu0 %v51
    %1680 = vmatprep.subr.mxu0 0.0
    %1681 = vmatpush1.msra.mxu0 %v54
    %1682 = vmatprep.subr.mxu0 0.0
    %1683 = vmatpush1.msra.mxu0 %v57
    %1684 = vmatprep.subr.mxu0 0.0
    %1685 = vmatpush1.msra.mxu0 %v60
    %1686 = vmatprep.subr.mxu0 0.0
    %1687 = vmatpush1.msra.mxu0 %v63
    %1688 = vmatprep.subr.mxu0 0.0
    %1689 = vmatpush1.msra.mxu0 %v66
    %1690 = vmatprep.subr.mxu0 0.0
    %1691 = vmatpush1.msra.mxu0 %v69
    %1692 = vmatprep.subr.mxu0 0.0
    %1693 = vmatpush1.msra.mxu0 %v72
    %1694 = vmatprep.subr.mxu0 0.0
    %1695 = vmatpush1.msra.mxu0 %v75
    %1696 = vmatprep.subr.mxu0 0.0
    %1697 = vmatpush1.msra.mxu0 %v78
    %1698 = vmatprep.subr.mxu0 0.0
    %1699 = vmatpush1.msra.mxu0 %v81
    %1700 = vmatprep.subr.mxu0 0.0
    %1701 = vmatpush1.msra.mxu0 %v84
    %1702 = vmatprep.subr.mxu0 0.0
    %1703 = vmatpush1.msra.mxu0 %v87
    %1704 = vmatprep.subr.mxu0 0.0
    %1705 = vmatpush1.msra.mxu0 %v90
    %1706 = vmatprep.subr.mxu0 0.0
    %1707 = vmatpush1.msra.mxu0 %v93
    %1708 = vmatprep.subr.mxu0 0.0
    %1709 = vmatpush1.msra.mxu0 %v96
    %1710 = vmatprep.subr.mxu0 0.0
    %1711 = vmatpush1.msra.mxu0 0.0
    %1712 = vmatprep.subr.mxu0 0.0
    %1713 = vmatpush1.msra.mxu0 0.0
    %1714 = vmatprep.subr.mxu0 0.0
    %1715 = vmatpush1.msra.mxu0 0.0
    %1716 = vmatprep.subr.mxu0 0.0
    %1717 = vmatpush1.msra.mxu0 0.0
    %1718 = vmatprep.subr.mxu0 0.0
    %1719 = vmatpush1.msra.mxu0 0.0
    %1720 = vmatprep.subr.mxu0 0.0
    %1721 = vmatpush1.msra.mxu0 0.0
    %1722 = vmatprep.subr.mxu0 0.0
    %1723 = vmatpush1.msra.mxu0 0.0
    %1724 = vmatprep.subr.mxu0 0.0
    %1725 = vmatpush1.msra.mxu0 0.0
    %1726 = vmatprep.subr.mxu0 0.0
    %1727 = vmatpush1.msra.mxu0 0.0
    %1728 = vmatprep.subr.mxu0 0.0
    %1729 = vmatpush1.msra.mxu0 0.0
    %1730 = vmatprep.subr.mxu0 0.0
    %1731 = vmatpush1.msra.mxu0 0.0
    %1732 = vmatprep.subr.mxu0 0.0
    %1733 = vmatpush1.msra.mxu0 0.0
    %1734 = vmatprep.subr.mxu0 0.0
    %1735 = vmatpush1.msra.mxu0 0.0
    %1736 = vmatprep.subr.mxu0 0.0
    %1737 = vmatpush1.msra.mxu0 0.0
    %1738 = vmatprep.subr.mxu0 0.0
    %1739 = vmatpush1.msra.mxu0 0.0
    %1740 = vmatprep.subr.mxu0 0.0
    %1741 = vmatpush1.msra.mxu0 0.0
    %1742 = vmatprep.mubr.f32.mxu0 0.0
    %1743 = vmatmul.mubr.f32.gmra.mrb[0].mxu0 %v1436
    %v1744 = vpop.f32.mrb[0].mxu0
    %v1745 = vadd.f32 0.0, %v1744
    %v1746 = vpop.f32.mrb[0].mxu0
    %1747 = vdwg.mxu0
    %v1748 = vadd.f32 %v1441, %v1674
    %v1749 = vxor.u32 %v1748, 2147483648
    %v1750 = vmul.f32 %v1749, 1.442695
    %v1751 = vpow.pop %v1750
    %v1752 = vadd.f32 %v1751, 1.0
    %v1753 = vrcp.pop %v1752
    %v1754 = vmul.f32 1.0, %v1753
    %v1755 = vadd.f32 %v1442, %v1676
    %v1756 = vxor.u32 %v1755, 2147483648
    %v1757 = vmul.f32 %v1756, 1.442695
    %v1758 = vpow.pop %v1757
    %v1759 = vadd.f32 %v1758, 1.0
    %v1760 = vrcp.pop %v1759
    %v1761 = vmul.f32 1.0, %v1760
    %v1762 = vadd.f32 %v1745, %v102
    %v1763 = vmul.f32 %v1754, %v1762
    %v1764 = vadd.f32 %v1443, %v1763
    %v1765 = vtanh.pop %v1764
    %v1766 = vsub.f32 1.0, %v1761
    %v1767 = vmul.f32 %v1766, %v1765
    %v1768 = vmul.f32 %v1761, %v1436
    %v1769 = vadd.f32 %v1767, %v1768
    %s1770 = scalar_lea.vmem [#allocation2], 240
    %v1771 = vld [vmem:[%s1770] sm:$0xff]
    %v1772 = vld [vmem:[%s1770 + $0x8] sm:$0xff]
    %v1773 = vld [vmem:[%s1770 + $0x10] sm:$0xff]
    %v1774 = vld [vmem:[%s1770 + $0x18] sm:$0xff]
    %v1775 = vld [vmem:[%s1770 + $0x20] sm:$0xff]
    %v1776 = vld [vmem:[%s1770 + $0x28] sm:$0xff]
    %1777 = vmatprep.subr.mxu0 %v50
    %1778 = vmatpush1.msra.mxu0 %v49
    %1779 = vmatprep.subr.mxu0 %v53
    %1780 = vmatpush1.msra.mxu0 %v52
    %1781 = vmatprep.subr.mxu0 %v56
    %1782 = vmatpush1.msra.mxu0 %v55
    %1783 = vmatprep.subr.mxu0 %v59
    %1784 = vmatpush1.msra.mxu0 %v58
    %1785 = vmatprep.subr.mxu0 %v62
    %1786 = vmatpush1.msra.mxu0 %v61
    %1787 = vmatprep.subr.mxu0 %v65
    %1788 = vmatpush1.msra.mxu0 %v64
    %1789 = vmatprep.subr.mxu0 %v68
    %1790 = vmatpush1.msra.mxu0 %v67
    %1791 = vmatprep.subr.mxu0 %v71
    %1792 = vmatpush1.msra.mxu0 %v70
    %1793 = vmatprep.subr.mxu0 %v74
    %1794 = vmatpush1.msra.mxu0 %v73
    %1795 = vmatprep.subr.mxu0 %v77
    %1796 = vmatpush1.msra.mxu0 %v76
    %1797 = vmatprep.subr.mxu0 %v80
    %1798 = vmatpush1.msra.mxu0 %v79
    %1799 = vmatprep.subr.mxu0 %v83
    %1800 = vmatpush1.msra.mxu0 %v82
    %1801 = vmatprep.subr.mxu0 %v86
    %1802 = vmatpush1.msra.mxu0 %v85
    %1803 = vmatprep.subr.mxu0 %v89
    %1804 = vmatpush1.msra.mxu0 %v88
    %1805 = vmatprep.subr.mxu0 %v92
    %1806 = vmatpush1.msra.mxu0 %v91
    %1807 = vmatprep.subr.mxu0 %v95
    %1808 = vmatpush1.msra.mxu0 %v94
    %1809 = vmatprep.subr.mxu0 0.0
    %1810 = vmatpush1.msra.mxu0 0.0
    %1811 = vmatprep.subr.mxu0 0.0
    %1812 = vmatpush1.msra.mxu0 0.0
    %1813 = vmatprep.subr.mxu0 0.0
    %1814 = vmatpush1.msra.mxu0 0.0
    %1815 = vmatprep.subr.mxu0 0.0
    %1816 = vmatpush1.msra.mxu0 0.0
    %1817 = vmatprep.subr.mxu0 0.0
    %1818 = vmatpush1.msra.mxu0 0.0
    %1819 = vmatprep.subr.mxu0 0.0
    %1820 = vmatpush1.msra.mxu0 0.0
    %1821 = vmatprep.subr.mxu0 0.0
    %1822 = vmatpush1.msra.mxu0 0.0
    %1823 = vmatprep.subr.mxu0 0.0
    %1824 = vmatpush1.msra.mxu0 0.0
    %1825 = vmatprep.subr.mxu0 0.0
    %1826 = vmatpush1.msra.mxu0 0.0
    %1827 = vmatprep.subr.mxu0 0.0
    %1828 = vmatpush1.msra.mxu0 0.0
    %1829 = vmatprep.subr.mxu0 0.0
    %1830 = vmatpush1.msra.mxu0 0.0
    %1831 = vmatprep.subr.mxu0 0.0
    %1832 = vmatpush1.msra.mxu0 0.0
    %1833 = vmatprep.subr.mxu0 0.0
    %1834 = vmatpush1.msra.mxu0 0.0
    %1835 = vmatprep.subr.mxu0 0.0
    %1836 = vmatpush1.msra.mxu0 0.0
    %1837 = vmatprep.subr.mxu0 0.0
    %1838 = vmatpush1.msra.mxu0 0.0
    %1839 = vmatprep.subr.mxu0 0.0
    %1840 = vmatpush1.msra.mxu0 0.0
    %1841 = vmatprep.mubr.f32.mxu0 0.0
    %1842 = vmatmul.mubr.f32.gmra.mrb[0].mxu0 %v1606
    %v1843 = vpop.f32.mrb[0].mxu0
    %v1844 = vadd.f32 0.0, %v1843
    %v1845 = vpop.f32.mrb[0].mxu0
    %v1846 = vadd.f32 0.0, %v1845
    %1847 = vdwg.mxu0
    %1848 = vmatprep.subr.mxu0 0.0
    %1849 = vmatpush1.msra.mxu0 %v51
    %1850 = vmatprep.subr.mxu0 0.0
    %1851 = vmatpush1.msra.mxu0 %v54
    %1852 = vmatprep.subr.mxu0 0.0
    %1853 = vmatpush1.msra.mxu0 %v57
    %1854 = vmatprep.subr.mxu0 0.0
    %1855 = vmatpush1.msra.mxu0 %v60
    %1856 = vmatprep.subr.mxu0 0.0
    %1857 = vmatpush1.msra.mxu0 %v63
    %1858 = vmatprep.subr.mxu0 0.0
    %1859 = vmatpush1.msra.mxu0 %v66
    %1860 = vmatprep.subr.mxu0 0.0
    %1861 = vmatpush1.msra.mxu0 %v69
    %1862 = vmatprep.subr.mxu0 0.0
    %1863 = vmatpush1.msra.mxu0 %v72
    %1864 = vmatprep.subr.mxu0 0.0
    %1865 = vmatpush1.msra.mxu0 %v75
    %1866 = vmatprep.subr.mxu0 0.0
    %1867 = vmatpush1.msra.mxu0 %v78
    %1868 = vmatprep.subr.mxu0 0.0
    %1869 = vmatpush1.msra.mxu0 %v81
    %1870 = vmatprep.subr.mxu0 0.0
    %1871 = vmatpush1.msra.mxu0 %v84
    %1872 = vmatprep.subr.mxu0 0.0
    %1873 = vmatpush1.msra.mxu0 %v87
    %1874 = vmatprep.subr.mxu0 0.0
    %1875 = vmatpush1.msra.mxu0 %v90
    %1876 = vmatprep.subr.mxu0 0.0
    %1877 = vmatpush1.msra.mxu0 %v93
    %1878 = vmatprep.subr.mxu0 0.0
    %1879 = vmatpush1.msra.mxu0 %v96
    %1880 = vmatprep.subr.mxu0 0.0
    %1881 = vmatpush1.msra.mxu0 0.0
    %1882 = vmatprep.subr.mxu0 0.0
    %1883 = vmatpush1.msra.mxu0 0.0
    %1884 = vmatprep.subr.mxu0 0.0
    %1885 = vmatpush1.msra.mxu0 0.0
    %1886 = vmatprep.subr.mxu0 0.0
    %1887 = vmatpush1.msra.mxu0 0.0
    %1888 = vmatprep.subr.mxu0 0.0
    %1889 = vmatpush1.msra.mxu0 0.0
    %1890 = vmatprep.subr.mxu0 0.0
    %1891 = vmatpush1.msra.mxu0 0.0
    %1892 = vmatprep.subr.mxu0 0.0
    %1893 = vmatpush1.msra.mxu0 0.0
    %1894 = vmatprep.subr.mxu0 0.0
    %1895 = vmatpush1.msra.mxu0 0.0
    %1896 = vmatprep.subr.mxu0 0.0
    %1897 = vmatpush1.msra.mxu0 0.0
    %1898 = vmatprep.subr.mxu0 0.0
    %1899 = vmatpush1.msra.mxu0 0.0
    %1900 = vmatprep.subr.mxu0 0.0
    %1901 = vmatpush1.msra.mxu0 0.0
    %1902 = vmatprep.subr.mxu0 0.0
    %1903 = vmatpush1.msra.mxu0 0.0
    %1904 = vmatprep.subr.mxu0 0.0
    %1905 = vmatpush1.msra.mxu0 0.0
    %1906 = vmatprep.subr.mxu0 0.0
    %1907 = vmatpush1.msra.mxu0 0.0
    %1908 = vmatprep.subr.mxu0 0.0
    %1909 = vmatpush1.msra.mxu0 0.0
    %1910 = vmatprep.subr.mxu0 0.0
    %1911 = vmatpush1.msra.mxu0 0.0
    %1912 = vmatprep.mubr.f32.mxu0 0.0
    %1913 = vmatmul.mubr.f32.gmra.mrb[0].mxu0 %v1606
    %v1914 = vpop.f32.mrb[0].mxu0
    %v1915 = vadd.f32 0.0, %v1914
    %v1916 = vpop.f32.mrb[0].mxu0
    %1917 = vdwg.mxu0
    %v1918 = vadd.f32 %v1771, %v1844
    %v1919 = vxor.u32 %v1918, 2147483648
    %v1920 = vmul.f32 %v1919, 1.442695
    %v1921 = vpow.pop %v1920
    %v1922 = vadd.f32 %v1921, 1.0
    %v1923 = vrcp.pop %v1922
    %v1924 = vmul.f32 1.0, %v1923
    %v1925 = vadd.f32 %v1772, %v1846
    %v1926 = vxor.u32 %v1925, 2147483648
    %v1927 = vmul.f32 %v1926, 1.442695
    %v1928 = vpow.pop %v1927
    %v1929 = vadd.f32 %v1928, 1.0
    %v1930 = vrcp.pop %v1929
    %v1931 = vmul.f32 1.0, %v1930
    %v1932 = vadd.f32 %v1915, %v102
    %v1933 = vmul.f32 %v1924, %v1932
    %v1934 = vadd.f32 %v1773, %v1933
    %v1935 = vtanh.pop %v1934
    %v1936 = vsub.f32 1.0, %v1931
    %v1937 = vmul.f32 %v1936, %v1935
    %v1938 = vmul.f32 %v1931, %v1606
    %v1939 = vadd.f32 %v1937, %v1938
    %1940 = vmatprep.subr.mxu0 %v50
    %1941 = vmatpush1.msra.mxu0 %v49
    %1942 = vmatprep.subr.mxu0 %v53
    %1943 = vmatpush1.msra.mxu0 %v52
    %1944 = vmatprep.subr.mxu0 %v56
    %1945 = vmatpush1.msra.mxu0 %v55
    %1946 = vmatprep.subr.mxu0 %v59
    %1947 = vmatpush1.msra.mxu0 %v58
    %1948 = vmatprep.subr.mxu0 %v62
    %1949 = vmatpush1.msra.mxu0 %v61
    %1950 = vmatprep.subr.mxu0 %v65
    %1951 = vmatpush1.msra.mxu0 %v64
    %1952 = vmatprep.subr.mxu0 %v68
    %1953 = vmatpush1.msra.mxu0 %v67
    %1954 = vmatprep.subr.mxu0 %v71
    %1955 = vmatpush1.msra.mxu0 %v70
    %1956 = vmatprep.subr.mxu0 %v74
    %1957 = vmatpush1.msra.mxu0 %v73
    %1958 = vmatprep.subr.mxu0 %v77
    %1959 = vmatpush1.msra.mxu0 %v76
    %1960 = vmatprep.subr.mxu0 %v80
    %1961 = vmatpush1.msra.mxu0 %v79
    %1962 = vmatprep.subr.mxu0 %v83
    %1963 = vmatpush1.msra.mxu0 %v82
    %1964 = vmatprep.subr.mxu0 %v86
    %1965 = vmatpush1.msra.mxu0 %v85
    %1966 = vmatprep.subr.mxu0 %v89
    %1967 = vmatpush1.msra.mxu0 %v88
    %1968 = vmatprep.subr.mxu0 %v92
    %1969 = vmatpush1.msra.mxu0 %v91
    %1970 = vmatprep.subr.mxu0 %v95
    %1971 = vmatpush1.msra.mxu0 %v94
    %1972 = vmatprep.subr.mxu0 0.0
    %1973 = vmatpush1.msra.mxu0 0.0
    %1974 = vmatprep.subr.mxu0 0.0
    %1975 = vmatpush1.msra.mxu0 0.0
    %1976 = vmatprep.subr.mxu0 0.0
    %1977 = vmatpush1.msra.mxu0 0.0
    %1978 = vmatprep.subr.mxu0 0.0
    %1979 = vmatpush1.msra.mxu0 0.0
    %1980 = vmatprep.subr.mxu0 0.0
    %1981 = vmatpush1.msra.mxu0 0.0
    %1982 = vmatprep.subr.mxu0 0.0
    %1983 = vmatpush1.msra.mxu0 0.0
    %1984 = vmatprep.subr.mxu0 0.0
    %1985 = vmatpush1.msra.mxu0 0.0
    %1986 = vmatprep.subr.mxu0 0.0
    %1987 = vmatpush1.msra.mxu0 0.0
    %1988 = vmatprep.subr.mxu0 0.0
    %1989 = vmatpush1.msra.mxu0 0.0
    %1990 = vmatprep.subr.mxu0 0.0
    %1991 = vmatpush1.msra.mxu0 0.0
    %1992 = vmatprep.subr.mxu0 0.0
    %1993 = vmatpush1.msra.mxu0 0.0
    %1994 = vmatprep.subr.mxu0 0.0
    %1995 = vmatpush1.msra.mxu0 0.0
    %1996 = vmatprep.subr.mxu0 0.0
    %1997 = vmatpush1.msra.mxu0 0.0
    %1998 = vmatprep.subr.mxu0 0.0
    %1999 = vmatpush1.msra.mxu0 0.0
    %2000 = vmatprep.subr.mxu0 0.0
    %2001 = vmatpush1.msra.mxu0 0.0
    %2002 = vmatprep.subr.mxu0 0.0
    %2003 = vmatpush1.msra.mxu0 0.0
    %2004 = vmatprep.mubr.f32.mxu0 0.0
    %2005 = vmatmul.mubr.f32.gmra.mrb[0].mxu0 %v1769
    %v2006 = vpop.f32.mrb[0].mxu0
    %v2007 = vadd.f32 0.0, %v2006
    %v2008 = vpop.f32.mrb[0].mxu0
    %v2009 = vadd.f32 0.0, %v2008
    %2010 = vdwg.mxu0
    %2011 = vmatprep.subr.mxu0 0.0
    %2012 = vmatpush1.msra.mxu0 %v51
    %2013 = vmatprep.subr.mxu0 0.0
    %2014 = vmatpush1.msra.mxu0 %v54
    %2015 = vmatprep.subr.mxu0 0.0
    %2016 = vmatpush1.msra.mxu0 %v57
    %2017 = vmatprep.subr.mxu0 0.0
    %2018 = vmatpush1.msra.mxu0 %v60
    %2019 = vmatprep.subr.mxu0 0.0
    %2020 = vmatpush1.msra.mxu0 %v63
    %2021 = vmatprep.subr.mxu0 0.0
    %2022 = vmatpush1.msra.mxu0 %v66
    %2023 = vmatprep.subr.mxu0 0.0
    %2024 = vmatpush1.msra.mxu0 %v69
    %2025 = vmatprep.subr.mxu0 0.0
    %2026 = vmatpush1.msra.mxu0 %v72
    %2027 = vmatprep.subr.mxu0 0.0
    %2028 = vmatpush1.msra.mxu0 %v75
    %2029 = vmatprep.subr.mxu0 0.0
    %2030 = vmatpush1.msra.mxu0 %v78
    %2031 = vmatprep.subr.mxu0 0.0
    %2032 = vmatpush1.msra.mxu0 %v81
    %2033 = vmatprep.subr.mxu0 0.0
    %2034 = vmatpush1.msra.mxu0 %v84
    %2035 = vmatprep.subr.mxu0 0.0
    %2036 = vmatpush1.msra.mxu0 %v87
    %2037 = vmatprep.subr.mxu0 0.0
    %2038 = vmatpush1.msra.mxu0 %v90
    %2039 = vmatprep.subr.mxu0 0.0
    %2040 = vmatpush1.msra.mxu0 %v93
    %2041 = vmatprep.subr.mxu0 0.0
    %2042 = vmatpush1.msra.mxu0 %v96
    %2043 = vmatprep.subr.mxu0 0.0
    %2044 = vmatpush1.msra.mxu0 0.0
    %2045 = vmatprep.subr.mxu0 0.0
    %2046 = vmatpush1.msra.mxu0 0.0
    %2047 = vmatprep.subr.mxu0 0.0
    %2048 = vmatpush1.msra.mxu0 0.0
    %2049 = vmatprep.subr.mxu0 0.0
    %2050 = vmatpush1.msra.mxu0 0.0
    %2051 = vmatprep.subr.mxu0 0.0
    %2052 = vmatpush1.msra.mxu0 0.0
    %2053 = vmatprep.subr.mxu0 0.0
    %2054 = vmatpush1.msra.mxu0 0.0
    %2055 = vmatprep.subr.mxu0 0.0
    %2056 = vmatpush1.msra.mxu0 0.0
    %2057 = vmatprep.subr.mxu0 0.0
    %2058 = vmatpush1.msra.mxu0 0.0
    %2059 = vmatprep.subr.mxu0 0.0
    %2060 = vmatpush1.msra.mxu0 0.0
    %2061 = vmatprep.subr.mxu0 0.0
    %2062 = vmatpush1.msra.mxu0 0.0
    %2063 = vmatprep.subr.mxu0 0.0
    %2064 = vmatpush1.msra.mxu0 0.0
    %2065 = vmatprep.subr.mxu0 0.0
    %2066 = vmatpush1.msra.mxu0 0.0
    %2067 = vmatprep.subr.mxu0 0.0
    %2068 = vmatpush1.msra.mxu0 0.0
    %2069 = vmatprep.subr.mxu0 0.0
    %2070 = vmatpush1.msra.mxu0 0.0
    %2071 = vmatprep.subr.mxu0 0.0
    %2072 = vmatpush1.msra.mxu0 0.0
    %2073 = vmatprep.subr.mxu0 0.0
    %2074 = vmatpush1.msra.mxu0 0.0
    %2075 = vmatprep.mubr.f32.mxu0 0.0
    %2076 = vmatmul.mubr.f32.gmra.mrb[0].mxu0 %v1769
    %v2077 = vpop.f32.mrb[0].mxu0
    %v2078 = vadd.f32 0.0, %v2077
    %v2079 = vpop.f32.mrb[0].mxu0
    %2080 = vdwg.mxu0
    %v2081 = vadd.f32 %v1774, %v2007
    %v2082 = vxor.u32 %v2081, 2147483648
    %v2083 = vmul.f32 %v2082, 1.442695
    %v2084 = vpow.pop %v2083
    %v2085 = vadd.f32 %v2084, 1.0
    %v2086 = vrcp.pop %v2085
    %v2087 = vmul.f32 1.0, %v2086
    %v2088 = vadd.f32 %v1775, %v2009
    %v2089 = vxor.u32 %v2088, 2147483648
    %v2090 = vmul.f32 %v2089, 1.442695
    %v2091 = vpow.pop %v2090
    %v2092 = vadd.f32 %v2091, 1.0
    %v2093 = vrcp.pop %v2092
    %v2094 = vmul.f32 1.0, %v2093
    %v2095 = vadd.f32 %v2078, %v102
    %v2096 = vmul.f32 %v2087, %v2095
    %v2097 = vadd.f32 %v1776, %v2096
    %v2098 = vtanh.pop %v2097
    %v2099 = vsub.f32 1.0, %v2094
    %v2100 = vmul.f32 %v2099, %v2098
    %v2101 = vmul.f32 %v2094, %v1769
    %v2102 = vadd.f32 %v2100, %v2101
    %s2103 = scalar_lea.vmem [#allocation2], 288
    %v2104 = vld [vmem:[%s2103] sm:$0xff]
    %v2105 = vld [vmem:[%s2103 + $0x8] sm:$0xff]
    %v2106 = vld [vmem:[%s2103 + $0x10] sm:$0xff]
    %v2107 = vld [vmem:[%s2103 + $0x18] sm:$0xff]
    %v2108 = vld [vmem:[%s2103 + $0x20] sm:$0xff]
    %v2109 = vld [vmem:[%s2103 + $0x28] sm:$0xff]
    %2110 = vmatprep.subr.mxu0 %v50
    %2111 = vmatpush1.msra.mxu0 %v49
    %2112 = vmatprep.subr.mxu0 %v53
    %2113 = vmatpush1.msra.mxu0 %v52
    %2114 = vmatprep.subr.mxu0 %v56
    %2115 = vmatpush1.msra.mxu0 %v55
    %2116 = vmatprep.subr.mxu0 %v59
    %2117 = vmatpush1.msra.mxu0 %v58
    %2118 = vmatprep.subr.mxu0 %v62
    %2119 = vmatpush1.msra.mxu0 %v61
    %2120 = vmatprep.subr.mxu0 %v65
    %2121 = vmatpush1.msra.mxu0 %v64
    %2122 = vmatprep.subr.mxu0 %v68
    %2123 = vmatpush1.msra.mxu0 %v67
    %2124 = vmatprep.subr.mxu0 %v71
    %2125 = vmatpush1.msra.mxu0 %v70
    %2126 = vmatprep.subr.mxu0 %v74
    %2127 = vmatpush1.msra.mxu0 %v73
    %2128 = vmatprep.subr.mxu0 %v77
    %2129 = vmatpush1.msra.mxu0 %v76
    %2130 = vmatprep.subr.mxu0 %v80
    %2131 = vmatpush1.msra.mxu0 %v79
    %2132 = vmatprep.subr.mxu0 %v83
    %2133 = vmatpush1.msra.mxu0 %v82
    %2134 = vmatprep.subr.mxu0 %v86
    %2135 = vmatpush1.msra.mxu0 %v85
    %2136 = vmatprep.subr.mxu0 %v89
    %2137 = vmatpush1.msra.mxu0 %v88
    %2138 = vmatprep.subr.mxu0 %v92
    %2139 = vmatpush1.msra.mxu0 %v91
    %2140 = vmatprep.subr.mxu0 %v95
    %2141 = vmatpush1.msra.mxu0 %v94
    %2142 = vmatprep.subr.mxu0 0.0
    %2143 = vmatpush1.msra.mxu0 0.0
    %2144 = vmatprep.subr.mxu0 0.0
    %2145 = vmatpush1.msra.mxu0 0.0
    %2146 = vmatprep.subr.mxu0 0.0
    %2147 = vmatpush1.msra.mxu0 0.0
    %2148 = vmatprep.subr.mxu0 0.0
    %2149 = vmatpush1.msra.mxu0 0.0
    %2150 = vmatprep.subr.mxu0 0.0
    %2151 = vmatpush1.msra.mxu0 0.0
    %2152 = vmatprep.subr.mxu0 0.0
    %2153 = vmatpush1.msra.mxu0 0.0
    %2154 = vmatprep.subr.mxu0 0.0
    %2155 = vmatpush1.msra.mxu0 0.0
    %2156 = vmatprep.subr.mxu0 0.0
    %2157 = vmatpush1.msra.mxu0 0.0
    %2158 = vmatprep.subr.mxu0 0.0
    %2159 = vmatpush1.msra.mxu0 0.0
    %2160 = vmatprep.subr.mxu0 0.0
    %2161 = vmatpush1.msra.mxu0 0.0
    %2162 = vmatprep.subr.mxu0 0.0
    %2163 = vmatpush1.msra.mxu0 0.0
    %2164 = vmatprep.subr.mxu0 0.0
    %2165 = vmatpush1.msra.mxu0 0.0
    %2166 = vmatprep.subr.mxu0 0.0
    %2167 = vmatpush1.msra.mxu0 0.0
    %2168 = vmatprep.subr.mxu0 0.0
    %2169 = vmatpush1.msra.mxu0 0.0
    %2170 = vmatprep.subr.mxu0 0.0
    %2171 = vmatpush1.msra.mxu0 0.0
    %2172 = vmatprep.subr.mxu0 0.0
    %2173 = vmatpush1.msra.mxu0 0.0
    %2174 = vmatprep.mubr.f32.mxu0 0.0
    %2175 = vmatmul.mubr.f32.gmra.mrb[0].mxu0 %v1939
    %v2176 = vpop.f32.mrb[0].mxu0
    %v2177 = vadd.f32 0.0, %v2176
    %v2178 = vpop.f32.mrb[0].mxu0
    %v2179 = vadd.f32 0.0, %v2178
    %2180 = vdwg.mxu0
    %2181 = vmatprep.subr.mxu0 0.0
    %2182 = vmatpush1.msra.mxu0 %v51
    %2183 = vmatprep.subr.mxu0 0.0
    %2184 = vmatpush1.msra.mxu0 %v54
    %2185 = vmatprep.subr.mxu0 0.0
    %2186 = vmatpush1.msra.mxu0 %v57
    %2187 = vmatprep.subr.mxu0 0.0
    %2188 = vmatpush1.msra.mxu0 %v60
    %2189 = vmatprep.subr.mxu0 0.0
    %2190 = vmatpush1.msra.mxu0 %v63
    %2191 = vmatprep.subr.mxu0 0.0
    %2192 = vmatpush1.msra.mxu0 %v66
    %2193 = vmatprep.subr.mxu0 0.0
    %2194 = vmatpush1.msra.mxu0 %v69
    %2195 = vmatprep.subr.mxu0 0.0
    %2196 = vmatpush1.msra.mxu0 %v72
    %2197 = vmatprep.subr.mxu0 0.0
    %2198 = vmatpush1.msra.mxu0 %v75
    %2199 = vmatprep.subr.mxu0 0.0
    %2200 = vmatpush1.msra.mxu0 %v78
    %2201 = vmatprep.subr.mxu0 0.0
    %2202 = vmatpush1.msra.mxu0 %v81
    %2203 = vmatprep.subr.mxu0 0.0
    %2204 = vmatpush1.msra.mxu0 %v84
    %2205 = vmatprep.subr.mxu0 0.0
    %2206 = vmatpush1.msra.mxu0 %v87
    %2207 = vmatprep.subr.mxu0 0.0
    %2208 = vmatpush1.msra.mxu0 %v90
    %2209 = vmatprep.subr.mxu0 0.0
    %2210 = vmatpush1.msra.mxu0 %v93
    %2211 = vmatprep.subr.mxu0 0.0
    %2212 = vmatpush1.msra.mxu0 %v96
    %2213 = vmatprep.subr.mxu0 0.0
    %2214 = vmatpush1.msra.mxu0 0.0
    %2215 = vmatprep.subr.mxu0 0.0
    %2216 = vmatpush1.msra.mxu0 0.0
    %2217 = vmatprep.subr.mxu0 0.0
    %2218 = vmatpush1.msra.mxu0 0.0
    %2219 = vmatprep.subr.mxu0 0.0
    %2220 = vmatpush1.msra.mxu0 0.0
    %2221 = vmatprep.subr.mxu0 0.0
    %2222 = vmatpush1.msra.mxu0 0.0
    %2223 = vmatprep.subr.mxu0 0.0
    %2224 = vmatpush1.msra.mxu0 0.0
    %2225 = vmatprep.subr.mxu0 0.0
    %2226 = vmatpush1.msra.mxu0 0.0
    %2227 = vmatprep.subr.mxu0 0.0
    %2228 = vmatpush1.msra.mxu0 0.0
    %2229 = vmatprep.subr.mxu0 0.0
    %2230 = vmatpush1.msra.mxu0 0.0
    %2231 = vmatprep.subr.mxu0 0.0
    %2232 = vmatpush1.msra.mxu0 0.0
    %2233 = vmatprep.subr.mxu0 0.0
    %2234 = vmatpush1.msra.mxu0 0.0
    %2235 = vmatprep.subr.mxu0 0.0
    %2236 = vmatpush1.msra.mxu0 0.0
    %2237 = vmatprep.subr.mxu0 0.0
    %2238 = vmatpush1.msra.mxu0 0.0
    %2239 = vmatprep.subr.mxu0 0.0
    %2240 = vmatpush1.msra.mxu0 0.0
    %2241 = vmatprep.subr.mxu0 0.0
    %2242 = vmatpush1.msra.mxu0 0.0
    %2243 = vmatprep.subr.mxu0 0.0
    %2244 = vmatpush1.msra.mxu0 0.0
    %2245 = vmatprep.mubr.f32.mxu0 0.0
    %2246 = vmatmul.mubr.f32.gmra.mrb[0].mxu0 %v1939
    %v2247 = vpop.f32.mrb[0].mxu0
    %v2248 = vadd.f32 0.0, %v2247
    %v2249 = vpop.f32.mrb[0].mxu0
    %2250 = vdwg.mxu0
    %v2251 = vadd.f32 %v2104, %v2177
    %v2252 = vxor.u32 %v2251, 2147483648
    %v2253 = vmul.f32 %v2252, 1.442695
    %v2254 = vpow.pop %v2253
    %v2255 = vadd.f32 %v2254, 1.0
    %v2256 = vrcp.pop %v2255
    %v2257 = vmul.f32 1.0, %v2256
    %v2258 = vadd.f32 %v2105, %v2179
    %v2259 = vxor.u32 %v2258, 2147483648
    %v2260 = vmul.f32 %v2259, 1.442695
    %v2261 = vpow.pop %v2260
    %v2262 = vadd.f32 %v2261, 1.0
    %v2263 = vrcp.pop %v2262
    %v2264 = vmul.f32 1.0, %v2263
    %v2265 = vadd.f32 %v2248, %v102
    %v2266 = vmul.f32 %v2257, %v2265
    %v2267 = vadd.f32 %v2106, %v2266
    %v2268 = vtanh.pop %v2267
    %v2269 = vsub.f32 1.0, %v2264
    %v2270 = vmul.f32 %v2269, %v2268
    %v2271 = vmul.f32 %v2264, %v1939
    %v2272 = vadd.f32 %v2270, %v2271
    %2273 = vmatprep.subr.mxu0 %v50
    %2274 = vmatpush1.msra.mxu0 %v49
    %2275 = vmatprep.subr.mxu0 %v53
    %2276 = vmatpush1.msra.mxu0 %v52
    %2277 = vmatprep.subr.mxu0 %v56
    %2278 = vmatpush1.msra.mxu0 %v55
    %2279 = vmatprep.subr.mxu0 %v59
    %2280 = vmatpush1.msra.mxu0 %v58
    %2281 = vmatprep.subr.mxu0 %v62
    %2282 = vmatpush1.msra.mxu0 %v61
    %2283 = vmatprep.subr.mxu0 %v65
    %2284 = vmatpush1.msra.mxu0 %v64
    %2285 = vmatprep.subr.mxu0 %v68
    %2286 = vmatpush1.msra.mxu0 %v67
    %2287 = vmatprep.subr.mxu0 %v71
    %2288 = vmatpush1.msra.mxu0 %v70
    %2289 = vmatprep.subr.mxu0 %v74
    %2290 = vmatpush1.msra.mxu0 %v73
    %2291 = vmatprep.subr.mxu0 %v77
    %2292 = vmatpush1.msra.mxu0 %v76
    %2293 = vmatprep.subr.mxu0 %v80
    %2294 = vmatpush1.msra.mxu0 %v79
    %2295 = vmatprep.subr.mxu0 %v83
    %2296 = vmatpush1.msra.mxu0 %v82
    %2297 = vmatprep.subr.mxu0 %v86
    %2298 = vmatpush1.msra.mxu0 %v85
    %2299 = vmatprep.subr.mxu0 %v89
    %2300 = vmatpush1.msra.mxu0 %v88
    %2301 = vmatprep.subr.mxu0 %v92
    %2302 = vmatpush1.msra.mxu0 %v91
    %2303 = vmatprep.subr.mxu0 %v95
    %2304 = vmatpush1.msra.mxu0 %v94
    %2305 = vmatprep.subr.mxu0 0.0
    %2306 = vmatpush1.msra.mxu0 0.0
    %2307 = vmatprep.subr.mxu0 0.0
    %2308 = vmatpush1.msra.mxu0 0.0
    %2309 = vmatprep.subr.mxu0 0.0
    %2310 = vmatpush1.msra.mxu0 0.0
    %2311 = vmatprep.subr.mxu0 0.0
    %2312 = vmatpush1.msra.mxu0 0.0
    %2313 = vmatprep.subr.mxu0 0.0
    %2314 = vmatpush1.msra.mxu0 0.0
    %2315 = vmatprep.subr.mxu0 0.0
    %2316 = vmatpush1.msra.mxu0 0.0
    %2317 = vmatprep.subr.mxu0 0.0
    %2318 = vmatpush1.msra.mxu0 0.0
    %2319 = vmatprep.subr.mxu0 0.0
    %2320 = vmatpush1.msra.mxu0 0.0
    %2321 = vmatprep.subr.mxu0 0.0
    %2322 = vmatpush1.msra.mxu0 0.0
    %2323 = vmatprep.subr.mxu0 0.0
    %2324 = vmatpush1.msra.mxu0 0.0
    %2325 = vmatprep.subr.mxu0 0.0
    %2326 = vmatpush1.msra.mxu0 0.0
    %2327 = vmatprep.subr.mxu0 0.0
    %2328 = vmatpush1.msra.mxu0 0.0
    %2329 = vmatprep.subr.mxu0 0.0
    %2330 = vmatpush1.msra.mxu0 0.0
    %2331 = vmatprep.subr.mxu0 0.0
    %2332 = vmatpush1.msra.mxu0 0.0
    %2333 = vmatprep.subr.mxu0 0.0
    %2334 = vmatpush1.msra.mxu0 0.0
    %2335 = vmatprep.subr.mxu0 0.0
    %2336 = vmatpush1.msra.mxu0 0.0
    %2337 = vmatprep.mubr.f32.mxu0 0.0
    %2338 = vmatmul.mubr.f32.gmra.mrb[0].mxu0 %v2102
    %v2339 = vpop.f32.mrb[0].mxu0
    %v2340 = vadd.f32 0.0, %v2339
    %v2341 = vpop.f32.mrb[0].mxu0
    %v2342 = vadd.f32 0.0, %v2341
    %2343 = vdwg.mxu0
    %2344 = vmatprep.subr.mxu0 0.0
    %2345 = vmatpush1.msra.mxu0 %v51
    %2346 = vmatprep.subr.mxu0 0.0
    %2347 = vmatpush1.msra.mxu0 %v54
    %2348 = vmatprep.subr.mxu0 0.0
    %2349 = vmatpush1.msra.mxu0 %v57
    %2350 = vmatprep.subr.mxu0 0.0
    %2351 = vmatpush1.msra.mxu0 %v60
    %2352 = vmatprep.subr.mxu0 0.0
    %2353 = vmatpush1.msra.mxu0 %v63
    %2354 = vmatprep.subr.mxu0 0.0
    %2355 = vmatpush1.msra.mxu0 %v66
    %2356 = vmatprep.subr.mxu0 0.0
    %2357 = vmatpush1.msra.mxu0 %v69
    %2358 = vmatprep.subr.mxu0 0.0
    %2359 = vmatpush1.msra.mxu0 %v72
    %2360 = vmatprep.subr.mxu0 0.0
    %2361 = vmatpush1.msra.mxu0 %v75
    %2362 = vmatprep.subr.mxu0 0.0
    %2363 = vmatpush1.msra.mxu0 %v78
    %2364 = vmatprep.subr.mxu0 0.0
    %2365 = vmatpush1.msra.mxu0 %v81
    %2366 = vmatprep.subr.mxu0 0.0
    %2367 = vmatpush1.msra.mxu0 %v84
    %2368 = vmatprep.subr.mxu0 0.0
    %2369 = vmatpush1.msra.mxu0 %v87
    %2370 = vmatprep.subr.mxu0 0.0
    %2371 = vmatpush1.msra.mxu0 %v90
    %2372 = vmatprep.subr.mxu0 0.0
    %2373 = vmatpush1.msra.mxu0 %v93
    %2374 = vmatprep.subr.mxu0 0.0
    %2375 = vmatpush1.msra.mxu0 %v96
    %2376 = vmatprep.subr.mxu0 0.0
    %2377 = vmatpush1.msra.mxu0 0.0
    %2378 = vmatprep.subr.mxu0 0.0
    %2379 = vmatpush1.msra.mxu0 0.0
    %2380 = vmatprep.subr.mxu0 0.0
    %2381 = vmatpush1.msra.mxu0 0.0
    %2382 = vmatprep.subr.mxu0 0.0
    %2383 = vmatpush1.msra.mxu0 0.0
    %2384 = vmatprep.subr.mxu0 0.0
    %2385 = vmatpush1.msra.mxu0 0.0
    %2386 = vmatprep.subr.mxu0 0.0
    %2387 = vmatpush1.msra.mxu0 0.0
    %2388 = vmatprep.subr.mxu0 0.0
    %2389 = vmatpush1.msra.mxu0 0.0
    %2390 = vmatprep.subr.mxu0 0.0
    %2391 = vmatpush1.msra.mxu0 0.0
    %2392 = vmatprep.subr.mxu0 0.0
    %2393 = vmatpush1.msra.mxu0 0.0
    %2394 = vmatprep.subr.mxu0 0.0
    %2395 = vmatpush1.msra.mxu0 0.0
    %2396 = vmatprep.subr.mxu0 0.0
    %2397 = vmatpush1.msra.mxu0 0.0
    %2398 = vmatprep.subr.mxu0 0.0
    %2399 = vmatpush1.msra.mxu0 0.0
    %2400 = vmatprep.subr.mxu0 0.0
    %2401 = vmatpush1.msra.mxu0 0.0
    %2402 = vmatprep.subr.mxu0 0.0
    %2403 = vmatpush1.msra.mxu0 0.0
    %2404 = vmatprep.subr.mxu0 0.0
    %2405 = vmatpush1.msra.mxu0 0.0
    %2406 = vmatprep.subr.mxu0 0.0
    %2407 = vmatpush1.msra.mxu0 0.0
    %2408 = vmatprep.mubr.f32.mxu0 0.0
    %2409 = vmatmul.mubr.f32.gmra.mrb[0].mxu0 %v2102
    %v2410 = vpop.f32.mrb[0].mxu0
    %v2411 = vadd.f32 0.0, %v2410
    %v2412 = vpop.f32.mrb[0].mxu0
    %2413 = vdwg.mxu0
    %v2414 = vadd.f32 %v2107, %v2340
    %v2415 = vxor.u32 %v2414, 2147483648
    %v2416 = vmul.f32 %v2415, 1.442695
    %v2417 = vpow.pop %v2416
    %v2418 = vadd.f32 %v2417, 1.0
    %v2419 = vrcp.pop %v2418
    %v2420 = vmul.f32 1.0, %v2419
    %v2421 = vadd.f32 %v2108, %v2342
    %v2422 = vxor.u32 %v2421, 2147483648
    %v2423 = vmul.f32 %v2422, 1.442695
    %v2424 = vpow.pop %v2423
    %v2425 = vadd.f32 %v2424, 1.0
    %v2426 = vrcp.pop %v2425
    %v2427 = vmul.f32 1.0, %v2426
    %v2428 = vadd.f32 %v2411, %v102
    %v2429 = vmul.f32 %v2420, %v2428
    %v2430 = vadd.f32 %v2109, %v2429
    %v2431 = vtanh.pop %v2430
    %v2432 = vsub.f32 1.0, %v2427
    %v2433 = vmul.f32 %v2432, %v2431
    %v2434 = vmul.f32 %v2427, %v2102
    %v2435 = vadd.f32 %v2433, %v2434
    %s2436 = scalar_lea.vmem [#allocation2], 336
    %v2437 = vld [vmem:[%s2436] sm:$0xff]
    %v2438 = vld [vmem:[%s2436 + $0x8] sm:$0xff]
    %v2439 = vld [vmem:[%s2436 + $0x10] sm:$0xff]
    %v2440 = vld [vmem:[%s2436 + $0x18] sm:$0xff]
    %v2441 = vld [vmem:[%s2436 + $0x20] sm:$0xff]
    %v2442 = vld [vmem:[%s2436 + $0x28] sm:$0xff]
    %2443 = vmatprep.subr.mxu0 %v50
    %2444 = vmatpush1.msra.mxu0 %v49
    %2445 = vmatprep.subr.mxu0 %v53
    %2446 = vmatpush1.msra.mxu0 %v52
    %2447 = vmatprep.subr.mxu0 %v56
    %2448 = vmatpush1.msra.mxu0 %v55
    %2449 = vmatprep.subr.mxu0 %v59
    %2450 = vmatpush1.msra.mxu0 %v58
    %2451 = vmatprep.subr.mxu0 %v62
    %2452 = vmatpush1.msra.mxu0 %v61
    %2453 = vmatprep.subr.mxu0 %v65
    %2454 = vmatpush1.msra.mxu0 %v64
    %2455 = vmatprep.subr.mxu0 %v68
    %2456 = vmatpush1.msra.mxu0 %v67
    %2457 = vmatprep.subr.mxu0 %v71
    %2458 = vmatpush1.msra.mxu0 %v70
    %2459 = vmatprep.subr.mxu0 %v74
    %2460 = vmatpush1.msra.mxu0 %v73
    %2461 = vmatprep.subr.mxu0 %v77
    %2462 = vmatpush1.msra.mxu0 %v76
    %2463 = vmatprep.subr.mxu0 %v80
    %2464 = vmatpush1.msra.mxu0 %v79
    %2465 = vmatprep.subr.mxu0 %v83
    %2466 = vmatpush1.msra.mxu0 %v82
    %2467 = vmatprep.subr.mxu0 %v86
    %2468 = vmatpush1.msra.mxu0 %v85
    %2469 = vmatprep.subr.mxu0 %v89
    %2470 = vmatpush1.msra.mxu0 %v88
    %2471 = vmatprep.subr.mxu0 %v92
    %2472 = vmatpush1.msra.mxu0 %v91
    %2473 = vmatprep.subr.mxu0 %v95
    %2474 = vmatpush1.msra.mxu0 %v94
    %2475 = vmatprep.subr.mxu0 0.0
    %2476 = vmatpush1.msra.mxu0 0.0
    %2477 = vmatprep.subr.mxu0 0.0
    %2478 = vmatpush1.msra.mxu0 0.0
    %2479 = vmatprep.subr.mxu0 0.0
    %2480 = vmatpush1.msra.mxu0 0.0
    %2481 = vmatprep.subr.mxu0 0.0
    %2482 = vmatpush1.msra.mxu0 0.0
    %2483 = vmatprep.subr.mxu0 0.0
    %2484 = vmatpush1.msra.mxu0 0.0
    %2485 = vmatprep.subr.mxu0 0.0
    %2486 = vmatpush1.msra.mxu0 0.0
    %2487 = vmatprep.subr.mxu0 0.0
    %2488 = vmatpush1.msra.mxu0 0.0
    %2489 = vmatprep.subr.mxu0 0.0
    %2490 = vmatpush1.msra.mxu0 0.0
    %2491 = vmatprep.subr.mxu0 0.0
    %2492 = vmatpush1.msra.mxu0 0.0
    %2493 = vmatprep.subr.mxu0 0.0
    %2494 = vmatpush1.msra.mxu0 0.0
    %2495 = vmatprep.subr.mxu0 0.0
    %2496 = vmatpush1.msra.mxu0 0.0
    %2497 = vmatprep.subr.mxu0 0.0
    %2498 = vmatpush1.msra.mxu0 0.0
    %2499 = vmatprep.subr.mxu0 0.0
    %2500 = vmatpush1.msra.mxu0 0.0
    %2501 = vmatprep.subr.mxu0 0.0
    %2502 = vmatpush1.msra.mxu0 0.0
    %2503 = vmatprep.subr.mxu0 0.0
    %2504 = vmatpush1.msra.mxu0 0.0
    %2505 = vmatprep.subr.mxu0 0.0
    %2506 = vmatpush1.msra.mxu0 0.0
    %2507 = vmatprep.mubr.f32.mxu0 0.0
    %2508 = vmatmul.mubr.f32.gmra.mrb[0].mxu0 %v2272
    %v2509 = vpop.f32.mrb[0].mxu0
    %v2510 = vadd.f32 0.0, %v2509
    %v2511 = vpop.f32.mrb[0].mxu0
    %v2512 = vadd.f32 0.0, %v2511
    %2513 = vdwg.mxu0
    %2514 = vmatprep.subr.mxu0 0.0
    %2515 = vmatpush1.msra.mxu0 %v51
    %2516 = vmatprep.subr.mxu0 0.0
    %2517 = vmatpush1.msra.mxu0 %v54
    %2518 = vmatprep.subr.mxu0 0.0
    %2519 = vmatpush1.msra.mxu0 %v57
    %2520 = vmatprep.subr.mxu0 0.0
    %2521 = vmatpush1.msra.mxu0 %v60
    %2522 = vmatprep.subr.mxu0 0.0
    %2523 = vmatpush1.msra.mxu0 %v63
    %2524 = vmatprep.subr.mxu0 0.0
    %2525 = vmatpush1.msra.mxu0 %v66
    %2526 = vmatprep.subr.mxu0 0.0
    %2527 = vmatpush1.msra.mxu0 %v69
    %2528 = vmatprep.subr.mxu0 0.0
    %2529 = vmatpush1.msra.mxu0 %v72
    %2530 = vmatprep.subr.mxu0 0.0
    %2531 = vmatpush1.msra.mxu0 %v75
    %2532 = vmatprep.subr.mxu0 0.0
    %2533 = vmatpush1.msra.mxu0 %v78
    %2534 = vmatprep.subr.mxu0 0.0
    %2535 = vmatpush1.msra.mxu0 %v81
    %2536 = vmatprep.subr.mxu0 0.0
    %2537 = vmatpush1.msra.mxu0 %v84
    %2538 = vmatprep.subr.mxu0 0.0
    %2539 = vmatpush1.msra.mxu0 %v87
    %2540 = vmatprep.subr.mxu0 0.0
    %2541 = vmatpush1.msra.mxu0 %v90
    %2542 = vmatprep.subr.mxu0 0.0
    %2543 = vmatpush1.msra.mxu0 %v93
    %2544 = vmatprep.subr.mxu0 0.0
    %2545 = vmatpush1.msra.mxu0 %v96
    %2546 = vmatprep.subr.mxu0 0.0
    %2547 = vmatpush1.msra.mxu0 0.0
    %2548 = vmatprep.subr.mxu0 0.0
    %2549 = vmatpush1.msra.mxu0 0.0
    %2550 = vmatprep.subr.mxu0 0.0
    %2551 = vmatpush1.msra.mxu0 0.0
    %2552 = vmatprep.subr.mxu0 0.0
    %2553 = vmatpush1.msra.mxu0 0.0
    %2554 = vmatprep.subr.mxu0 0.0
    %2555 = vmatpush1.msra.mxu0 0.0
    %2556 = vmatprep.subr.mxu0 0.0
    %2557 = vmatpush1.msra.mxu0 0.0
    %2558 = vmatprep.subr.mxu0 0.0
    %2559 = vmatpush1.msra.mxu0 0.0
    %2560 = vmatprep.subr.mxu0 0.0
    %2561 = vmatpush1.msra.mxu0 0.0
    %2562 = vmatprep.subr.mxu0 0.0
    %2563 = vmatpush1.msra.mxu0 0.0
    %2564 = vmatprep.subr.mxu0 0.0
    %2565 = vmatpush1.msra.mxu0 0.0
    %2566 = vmatprep.subr.mxu0 0.0
    %2567 = vmatpush1.msra.mxu0 0.0
    %2568 = vmatprep.subr.mxu0 0.0
    %2569 = vmatpush1.msra.mxu0 0.0
    %2570 = vmatprep.subr.mxu0 0.0
    %2571 = vmatpush1.msra.mxu0 0.0
    %2572 = vmatprep.subr.mxu0 0.0
    %2573 = vmatpush1.msra.mxu0 0.0
    %2574 = vmatprep.subr.mxu0 0.0
    %2575 = vmatpush1.msra.mxu0 0.0
    %2576 = vmatprep.subr.mxu0 0.0
    %2577 = vmatpush1.msra.mxu0 0.0
    %2578 = vmatprep.mubr.f32.mxu0 0.0
    %2579 = vmatmul.mubr.f32.gmra.mrb[0].mxu0 %v2272
    %v2580 = vpop.f32.mrb[0].mxu0
    %v2581 = vadd.f32 0.0, %v2580
    %v2582 = vpop.f32.mrb[0].mxu0
    %2583 = vdwg.mxu0
    %v2584 = vadd.f32 %v2437, %v2510
    %v2585 = vxor.u32 %v2584, 2147483648
    %v2586 = vmul.f32 %v2585, 1.442695
    %v2587 = vpow.pop %v2586
    %v2588 = vadd.f32 %v2587, 1.0
    %v2589 = vrcp.pop %v2588
    %v2590 = vmul.f32 1.0, %v2589
    %v2591 = vadd.f32 %v2438, %v2512
    %v2592 = vxor.u32 %v2591, 2147483648
    %v2593 = vmul.f32 %v2592, 1.442695
    %v2594 = vpow.pop %v2593
    %v2595 = vadd.f32 %v2594, 1.0
    %v2596 = vrcp.pop %v2595
    %v2597 = vmul.f32 1.0, %v2596
    %v2598 = vadd.f32 %v2581, %v102
    %v2599 = vmul.f32 %v2590, %v2598
    %v2600 = vadd.f32 %v2439, %v2599
    %v2601 = vtanh.pop %v2600
    %v2602 = vsub.f32 1.0, %v2597
    %v2603 = vmul.f32 %v2602, %v2601
    %v2604 = vmul.f32 %v2597, %v2272
    %v2605 = vadd.f32 %v2603, %v2604
    %2606 = vmatprep.subr.mxu0 %v50
    %2607 = vmatpush1.msra.mxu0 %v49
    %2608 = vmatprep.subr.mxu0 %v53
    %2609 = vmatpush1.msra.mxu0 %v52
    %2610 = vmatprep.subr.mxu0 %v56
    %2611 = vmatpush1.msra.mxu0 %v55
    %2612 = vmatprep.subr.mxu0 %v59
    %2613 = vmatpush1.msra.mxu0 %v58
    %2614 = vmatprep.subr.mxu0 %v62
    %2615 = vmatpush1.msra.mxu0 %v61
    %2616 = vmatprep.subr.mxu0 %v65
    %2617 = vmatpush1.msra.mxu0 %v64
    %2618 = vmatprep.subr.mxu0 %v68
    %2619 = vmatpush1.msra.mxu0 %v67
    %2620 = vmatprep.subr.mxu0 %v71
    %2621 = vmatpush1.msra.mxu0 %v70
    %2622 = vmatprep.subr.mxu0 %v74
    %2623 = vmatpush1.msra.mxu0 %v73
    %2624 = vmatprep.subr.mxu0 %v77
    %2625 = vmatpush1.msra.mxu0 %v76
    %2626 = vmatprep.subr.mxu0 %v80
    %2627 = vmatpush1.msra.mxu0 %v79
    %2628 = vmatprep.subr.mxu0 %v83
    %2629 = vmatpush1.msra.mxu0 %v82
    %2630 = vmatprep.subr.mxu0 %v86
    %2631 = vmatpush1.msra.mxu0 %v85
    %2632 = vmatprep.subr.mxu0 %v89
    %2633 = vmatpush1.msra.mxu0 %v88
    %2634 = vmatprep.subr.mxu0 %v92
    %2635 = vmatpush1.msra.mxu0 %v91
    %2636 = vmatprep.subr.mxu0 %v95
    %2637 = vmatpush1.msra.mxu0 %v94
    %2638 = vmatprep.subr.mxu0 0.0
    %2639 = vmatpush1.msra.mxu0 0.0
    %2640 = vmatprep.subr.mxu0 0.0
    %2641 = vmatpush1.msra.mxu0 0.0
    %2642 = vmatprep.subr.mxu0 0.0
    %2643 = vmatpush1.msra.mxu0 0.0
    %2644 = vmatprep.subr.mxu0 0.0
    %2645 = vmatpush1.msra.mxu0 0.0
    %2646 = vmatprep.subr.mxu0 0.0
    %2647 = vmatpush1.msra.mxu0 0.0
    %2648 = vmatprep.subr.mxu0 0.0
    %2649 = vmatpush1.msra.mxu0 0.0
    %2650 = vmatprep.subr.mxu0 0.0
    %2651 = vmatpush1.msra.mxu0 0.0
    %2652 = vmatprep.subr.mxu0 0.0
    %2653 = vmatpush1.msra.mxu0 0.0
    %2654 = vmatprep.subr.mxu0 0.0
    %2655 = vmatpush1.msra.mxu0 0.0
    %2656 = vmatprep.subr.mxu0 0.0
    %2657 = vmatpush1.msra.mxu0 0.0
    %2658 = vmatprep.subr.mxu0 0.0
    %2659 = vmatpush1.msra.mxu0 0.0
    %2660 = vmatprep.subr.mxu0 0.0
    %2661 = vmatpush1.msra.mxu0 0.0
    %2662 = vmatprep.subr.mxu0 0.0
    %2663 = vmatpush1.msra.mxu0 0.0
    %2664 = vmatprep.subr.mxu0 0.0
    %2665 = vmatpush1.msra.mxu0 0.0
    %2666 = vmatprep.subr.mxu0 0.0
    %2667 = vmatpush1.msra.mxu0 0.0
    %2668 = vmatprep.subr.mxu0 0.0
    %2669 = vmatpush1.msra.mxu0 0.0
    %2670 = vmatprep.mubr.f32.mxu0 0.0
    %2671 = vmatmul.mubr.f32.gmra.mrb[0].mxu0 %v2435
    %v2672 = vpop.f32.mrb[0].mxu0
    %v2673 = vadd.f32 0.0, %v2672
    %v2674 = vpop.f32.mrb[0].mxu0
    %v2675 = vadd.f32 0.0, %v2674
    %2676 = vdwg.mxu0
    %2677 = vmatprep.subr.mxu0 0.0
    %2678 = vmatpush1.msra.mxu0 %v51
    %2679 = vmatprep.subr.mxu0 0.0
    %2680 = vmatpush1.msra.mxu0 %v54
    %2681 = vmatprep.subr.mxu0 0.0
    %2682 = vmatpush1.msra.mxu0 %v57
    %2683 = vmatprep.subr.mxu0 0.0
    %2684 = vmatpush1.msra.mxu0 %v60
    %2685 = vmatprep.subr.mxu0 0.0
    %2686 = vmatpush1.msra.mxu0 %v63
    %2687 = vmatprep.subr.mxu0 0.0
    %2688 = vmatpush1.msra.mxu0 %v66
    %2689 = vmatprep.subr.mxu0 0.0
    %2690 = vmatpush1.msra.mxu0 %v69
    %2691 = vmatprep.subr.mxu0 0.0
    %2692 = vmatpush1.msra.mxu0 %v72
    %2693 = vmatprep.subr.mxu0 0.0
    %2694 = vmatpush1.msra.mxu0 %v75
    %2695 = vmatprep.subr.mxu0 0.0
    %2696 = vmatpush1.msra.mxu0 %v78
    %2697 = vmatprep.subr.mxu0 0.0
    %2698 = vmatpush1.msra.mxu0 %v81
    %2699 = vmatprep.subr.mxu0 0.0
    %2700 = vmatpush1.msra.mxu0 %v84
    %2701 = vmatprep.subr.mxu0 0.0
    %2702 = vmatpush1.msra.mxu0 %v87
    %2703 = vmatprep.subr.mxu0 0.0
    %2704 = vmatpush1.msra.mxu0 %v90
    %2705 = vmatprep.subr.mxu0 0.0
    %2706 = vmatpush1.msra.mxu0 %v93
    %2707 = vmatprep.subr.mxu0 0.0
    %2708 = vmatpush1.msra.mxu0 %v96
    %2709 = vmatprep.subr.mxu0 0.0
    %2710 = vmatpush1.msra.mxu0 0.0
    %2711 = vmatprep.subr.mxu0 0.0
    %2712 = vmatpush1.msra.mxu0 0.0
    %2713 = vmatprep.subr.mxu0 0.0
    %2714 = vmatpush1.msra.mxu0 0.0
    %2715 = vmatprep.subr.mxu0 0.0
    %2716 = vmatpush1.msra.mxu0 0.0
    %2717 = vmatprep.subr.mxu0 0.0
    %2718 = vmatpush1.msra.mxu0 0.0
    %2719 = vmatprep.subr.mxu0 0.0
    %2720 = vmatpush1.msra.mxu0 0.0
    %2721 = vmatprep.subr.mxu0 0.0
    %2722 = vmatpush1.msra.mxu0 0.0
    %2723 = vmatprep.subr.mxu0 0.0
    %2724 = vmatpush1.msra.mxu0 0.0
    %2725 = vmatprep.subr.mxu0 0.0
    %2726 = vmatpush1.msra.mxu0 0.0
    %2727 = vmatprep.subr.mxu0 0.0
    %2728 = vmatpush1.msra.mxu0 0.0
    %2729 = vmatprep.subr.mxu0 0.0
    %2730 = vmatpush1.msra.mxu0 0.0
    %2731 = vmatprep.subr.mxu0 0.0
    %2732 = vmatpush1.msra.mxu0 0.0
    %2733 = vmatprep.subr.mxu0 0.0
    %2734 = vmatpush1.msra.mxu0 0.0
    %2735 = vmatprep.subr.mxu0 0.0
    %2736 = vmatpush1.msra.mxu0 0.0
    %2737 = vmatprep.subr.mxu0 0.0
    %2738 = vmatpush1.msra.mxu0 0.0
    %2739 = vmatprep.subr.mxu0 0.0
    %2740 = vmatpush1.msra.mxu0 0.0
    %2741 = vmatprep.mubr.f32.mxu0 0.0
    %2742 = vmatmul.mubr.f32.gmra.mrb[0].mxu0 %v2435
    %v2743 = vpop.f32.mrb[0].mxu0
    %v2744 = vadd.f32 0.0, %v2743
    %v2745 = vpop.f32.mrb[0].mxu0
    %2746 = vdwg.mxu0
    %v2747 = vadd.f32 %v2440, %v2673
    %v2748 = vxor.u32 %v2747, 2147483648
    %v2749 = vmul.f32 %v2748, 1.442695
    %v2750 = vpow.pop %v2749
    %v2751 = vadd.f32 %v2750, 1.0
    %v2752 = vrcp.pop %v2751
    %v2753 = vmul.f32 1.0, %v2752
    %v2754 = vadd.f32 %v2441, %v2675
    %v2755 = vxor.u32 %v2754, 2147483648
    %v2756 = vmul.f32 %v2755, 1.442695
    %v2757 = vpow.pop %v2756
    %v2758 = vadd.f32 %v2757, 1.0
    %v2759 = vrcp.pop %v2758
    %v2760 = vmul.f32 1.0, %v2759
    %v2761 = vadd.f32 %v2744, %v102
    %v2762 = vmul.f32 %v2753, %v2761
    %v2763 = vadd.f32 %v2442, %v2762
    %v2764 = vtanh.pop %v2763
    %v2765 = vsub.f32 1.0, %v2760
    %v2766 = vmul.f32 %v2765, %v2764
    %v2767 = vmul.f32 %v2760, %v2435
    %v2768 = vadd.f32 %v2766, %v2767
    %2769 = vst [vmem:[#allocation7] sm:$0xff] %v2605
    %2770 = vst [vmem:[#allocation7 + $0x8] sm:$0xff] %v2768
    // Predicated region
    $region26: #{tpu_custom_call.1} parent=1 // pred_check
      _
    $region27: #{tpu_custom_call.1} parent=1 // pred_check_branch
      %2772 = sbr.rel (0) target = $region29
    $region28: #{tpu_custom_call.1} parent=1 // pred_region
      %s2774 = ssub.s32 256, 256
      %2775 = vsyncadd [#allocation4], %s2774
      %s2776 = sshll.u32 [#allocation7], 4
      %s2777 = int_to_ptr.vmem [resolvable:$true] %s2776
      %2782 = dma.vmem_to_hbm [thread:$0]  %s2777, 256, %s3, [#allocation4], 128, 128, 8
    $region29: #{tpu_custom_call.1} parent=1 // pred_fallthru
      _
    // Predicated region
    $region30: #{tpu_custom_call.1} parent=1 // pred_check
      _
    $region31: #{tpu_custom_call.1} parent=1 // pred_check_branch
      %2784 = sbr.rel (0) target = $region33
    $region32: #{tpu_custom_call.1} parent=1 // pred_region
      %2785 = dma.done [#allocation4], 256
    $region33: #{tpu_custom_call.1} parent=1 // pred_fallthru
      _
    %2786 = vsyncpa [#allocation3], 1
    %2787 = vsyncpa [#allocation6], 1
    %2788 = vsyncpa [#allocation4], 1

</llo_original>
